<compile_context>
chip_gen: v5e
topology: v5e:2x2
jax: 0.10.0
libtpu: 0.0.40
codegen_flags: <defaults>
</compile_context>

<pallas_src>
import functools

import jax
import jax.numpy as jnp
from jax.experimental import pallas as pl
from jax.experimental.pallas import tpu as pltpu

H = 32                     # args.hidden_channel
H2, H3, H4 = 2 * H, 3 * H, 4 * H
D_PAD = 128                # lane-dense padded message width (H3=96 -> 128 lanes)
LN_EPS = 1e-5


# --------------------------------------------------------------------------- #
# Tiling helpers
# --------------------------------------------------------------------------- #
def _cdiv(a, b):
    return -(-a // b)


def _round_up(n, m):
    return ((n + m - 1) // m) * m


def _detect_multi_tc():
    """True on chips whose device exposes >1 TensorCore (v4 megacore, v7x)."""
    try:
        kind = jax.devices()[0].device_kind.lower()
    except Exception:
        return False
    return ("v7" in kind) or ("v4" in kind)


_MULTI_TC = _detect_multi_tc()


def _tile_rows(n, max_tile=2048, min_tile=16):
    """Row-tile size.

    Single-TC chips (v5e / v6e): largest tile (grid steps only add overhead).
    Multi-TC chips (v4 / v7x): even (>=2) grid-step count so the 'parallel'
    axis shards evenly across both TensorCores.
    """
    n_r = _round_up(max(n, 1), min_tile)
    if not _MULTI_TC:
        return min(n_r, max_tile)
    steps = max(2, _round_up(_cdiv(n_r, max_tile), 2))
    tile = _round_up(_cdiv(n_r, steps), min_tile)
    return min(tile, max_tile)


def _pad_rows(a, rows):
    pad = rows - a.shape[0]
    return a if pad == 0 else jnp.pad(a, ((0, pad), (0, 0)))


# --------------------------------------------------------------------------- #
# Kernel 1: per-edge TiConv message
#   Attention over a length-1 key sequence => softmax == 1 => attn output ==
#   w_v(k); w_q/w_k do not affect the forward output.  With ffn = Linear only
#   (eval-mode dropout), the whole message is
#       pre = [x_j, j_tenc, u] @ Wv @ Wf + bf + [x_i, i_tenc, u]
#   folded in the wrapper into 3 matmuls + 1 constant row:
#       pre = packed @ Wpk + c1 @ M1 + c2 @ M2 + B,   packed = [x_j | x_i | u]
#   followed by LayerNorm over the real 96 lanes (zero-padded to 128).
# --------------------------------------------------------------------------- #
def _edge_msg_kernel(pk_ref, t1_ref, t2_ref, freq_ref,
                     wpk_ref, m1_ref, m2_ref, b_ref, lng_ref, lnb_ref,
                     out_ref):
    bf16 = jnp.bfloat16
    freq = freq_ref[...]                                    # (1, H) f32
    c1 = jnp.cos(t1_ref[...] * freq).astype(bf16)           # (TE, H)  time enc t1
    c2 = jnp.cos(t2_ref[...] * freq).astype(bf16)           # (TE, H)  time enc t2

    dot = functools.partial(jnp.dot, preferred_element_type=jnp.float32)
    pre = (dot(pk_ref[...], wpk_ref[...])                    # (TE,128) f32
           + dot(c1, m1_ref[...]) + dot(c2, m2_ref[...])
           + b_ref[...])
    # Padded lanes [96:128) of `pre` are exactly zero (weights & B zero-padded),
    # so the 96-lane LN statistics come straight from full-width sums.
    mean = jnp.sum(pre, axis=1, keepdims=True) * (1.0 / H3)
    var = jnp.sum(pre * pre, axis=1, keepdims=True) * (1.0 / H3) - mean * mean
    var = jnp.maximum(var, 0.0)
    out_ref[...] = ((pre - mean) * jax.lax.rsqrt(var + LN_EPS) * lng_ref[...]
                    + lnb_ref[...]).astype(out_ref.dtype)    # padded lanes -> 0


def edge_messages(packed, t1, t2, p):
    E = packed.shape[0]
    tile_e = _tile_rows(E)
    E_pad = _round_up(E, tile_e)
    packed, t1, t2 = (_pad_rows(a, E_pad) for a in (packed, t1, t2))

    row = lambda i: (i, 0)
    full = lambda i: (0, 0)
    msg = pl.pallas_call(
        _edge_msg_kernel,
        out_shape=jax.ShapeDtypeStruct((E_pad, D_PAD), jnp.bfloat16),
        grid=(E_pad // tile_e,),
        in_specs=[
            pl.BlockSpec((tile_e, H3), row),     # packed [x_j | x_i | u]  bf16
            pl.BlockSpec((tile_e, 1), row),      # t1
            pl.BlockSpec((tile_e, 1), row),      # t2
            pl.BlockSpec((1, H), full),          # basic_freq
            pl.BlockSpec((H3, D_PAD), full),     # Wpk = [Mx ; Sx ; Mu+Su]
            pl.BlockSpec((H, D_PAD), full),      # M1
            pl.BlockSpec((H, D_PAD), full),      # M2
            pl.BlockSpec((1, D_PAD), full),      # fused bias (+ i_tenc)
            pl.BlockSpec((1, D_PAD), full),      # LN gamma (zero-padded)
            pl.BlockSpec((1, D_PAD), full),      # LN beta  (zero-padded)
        ],
        out_specs=pl.BlockSpec((tile_e, D_PAD), row),
        compiler_params=pltpu.CompilerParams(dimension_semantics=("parallel",)),
    )(packed, t1, t2,
      p["freq"], p["Wpk"], p["M1"], p["M2"], p["B"], p["ln_g_pad"], p["ln_b_pad"])
    return msg[:E]


# --------------------------------------------------------------------------- #
# Kernel 2: merge MLP   merge(cat([x, aggregated_messages]))
#   Input arrives as one lane-dense (N, 128) bf16 array: lanes [0:96) = agg,
#   lanes [96:128) = x; the first layer is a single K=128 matmul.
# --------------------------------------------------------------------------- #
def _merge_kernel(ax_ref, w1_ref, b1_ref, w2_ref, b2_ref, out_ref):
    h = (jnp.dot(ax_ref[...], w1_ref[...], preferred_element_type=jnp.float32)
         + b1_ref[...])
    h = jnp.where(h >= 0, h, 0.1 * h)                        # LeakyReLU(0.1)
    out_ref[...] = (jnp.dot(h.astype(jnp.bfloat16), w2_ref[...],
                            preferred_element_type=jnp.float32) + b2_ref[...])


def merge_mlp(agg_x, p):
    N = agg_x.shape[0]
    tile_n = _tile_rows(N)
    N_pad = _round_up(N, tile_n)
    ax = _pad_rows(agg_x, N_pad)

    row = lambda i: (i, 0)
    full = lambda i: (0, 0)
    out = pl.pallas_call(
        _merge_kernel,
        out_shape=jax.ShapeDtypeStruct((N_pad, H), jnp.float32),
        grid=(N_pad // tile_n,),
        in_specs=[
            pl.BlockSpec((tile_n, D_PAD), row),  # [agg | x] bf16
            pl.BlockSpec((D_PAD, H), full),      # packed merge W1
            pl.BlockSpec((1, H), full),
            pl.BlockSpec((H, H), full),
            pl.BlockSpec((1, H), full),
        ],
        out_specs=pl.BlockSpec((tile_n, H), row),
        compiler_params=pltpu.CompilerParams(dimension_semantics=("parallel",)),
    )(ax, p["merge_w1"], p["merge_b1"], p["merge_w2"], p["merge_b2"])
    return out[:N]


# --------------------------------------------------------------------------- #
# Kernel 3: SAGEConv    normalize( lin_l(mean_agg) + lin_r(x_dst) )
#   lin_l / lin_r fused into one (Nd, 2H)@(2H, H) matmul; Nd is tiny, so a
#   single full-block launch.
# --------------------------------------------------------------------------- #
def _sage_kernel(xin_ref, w_ref, b_ref, out_ref):
    o = (jnp.dot(xin_ref[...].astype(jnp.bfloat16), w_ref[...],
                 preferred_element_type=jnp.float32) + b_ref[...])
    sumsq = jnp.sum(o * o, axis=1, keepdims=True)
    out_ref[...] = o * jax.lax.rsqrt(jnp.maximum(sumsq, 1e-24))   # F.normalize


def sage_conv_apply(agg_mean, x_dst, p):
    Nd = x_dst.shape[0]
    xin = jnp.concatenate([agg_mean, x_dst], axis=1)         # (Nd, 2H)
    full = lambda i: (0, 0)
    return pl.pallas_call(
        _sage_kernel,
        out_shape=jax.ShapeDtypeStruct((Nd, H), jnp.float32),
        grid=(1,),
        in_specs=[
            pl.BlockSpec((Nd, H2), full),
            pl.BlockSpec((H2, H), full),                      # [lin_l_w ; lin_r_w]
            pl.BlockSpec((1, H), full),
        ],
        out_specs=pl.BlockSpec((Nd, H), full),
    )(xin, p["sage_w"], p["lin_l_b"])


# --------------------------------------------------------------------------- #
# JAX glue reproducing TiConv / SAGEConv / GlobalGNN forward semantics
# --------------------------------------------------------------------------- #
def ticonv_forward(x, edge_index, weight, emb, p):
    t1 = weight[:, 0:1]                            # (E, 1)
    t2 = weight[:, 1:2]                            # (E, 1)
    idx = weight[:, 2].astype(jnp.int32)           # embedding index
    src, dst = edge_index[0], edge_index[1]
    # gathers in glue; operands packed + bf16-cast once here
    packed = jnp.concatenate([x[src], x[dst], emb[idx]], axis=1).astype(jnp.bfloat16)
    msg = edge_messages(packed, t1, t2, p)         # (E, 128) bf16 -- Pallas
    # TODO(synk): fuse this scatter-add into the edge kernel (dst-sorted edges
    # + PrefetchScalarGridSpec offsets, VMEM accumulator) for large E; padded
    # rows produce non-zero messages so they must then be masked.
    agg = jax.ops.segment_sum(msg.astype(jnp.float32), dst,
                              num_segments=x.shape[0])        # (N, 128) f32
    # fold x into the guaranteed-zero padded lanes [96:128) -> one input stream
    agg_x = jnp.concatenate([agg[:, :H3], x], axis=1).astype(jnp.bfloat16)
    return merge_mlp(agg_x, p)                     # (N, H)   -- Pallas


def sage_conv(x_src, x_dst, edge_index, p):
    src, dst = edge_index[0], edge_index[1]
    x_j = x_src[src]
    s = jax.ops.segment_sum(x_j, dst, num_segments=x_dst.shape[0])
    cnt = jax.ops.segment_sum(jnp.ones((x_j.shape[0], 1), jnp.float32), dst,
                              num_segments=x_dst.shape[0])
    agg_mean = s / jnp.maximum(cnt, 1.0)           # scatter-mean (count >= 1)
    return sage_conv_apply(agg_mean, x_dst, p)     # Pallas


def global_gnn_forward(x, adjs, emb, attr, params):
    num_layers = len(adjs)
    x_all = x
    out = None
    for i, (edge_index, e_id, size) in enumerate(adjs):
        weight = attr[e_id].astype(jnp.float32)
        xi = x_all                                  # reference resets x each layer
        x_gcn = ticonv_forward(xi, edge_index, weight, emb, params["gcn"])
        x_target = x_gcn[: size[1]]
        xo = sage_conv(x_gcn, x_target, edge_index, params["convs"][i])
        if i != num_layers - 1:
            xo = jax.nn.relu(xo)                    # dropout(0.5) = identity (eval)
        out = xo
    return jnp.concatenate([out], axis=0)           # torch.cat(xs, 0), one entry


# --------------------------------------------------------------------------- #
# Parameter init (torch-like shapes) and one-time kernel-form preparation
# --------------------------------------------------------------------------- #
def init_raw_params(key, num_layers=2):
    ks = jax.random.split(key, 12)
    n = lambda k, shape: (0.1 * jax.random.normal(k, shape)).astype(jnp.float32)
    gcn = dict(
        freq=n(ks[0], (1, H)),                       # basic_freq ~ N(0, 0.1)
        time_bias=jnp.zeros((1, H), jnp.float32),    # self.bias stays zero
        lin_w=n(ks[1], (H, H2)).T,                   # lin: Linear(2H, H) -> W.T
        lin_b=n(ks[2], (1, H)),
        wv=n(ks[3], (H3, H3)).T,                     # w_v: Linear(3H, 3H, bias=False)
        ffn_w=n(ks[4], (H3, H3)).T,                  # ffn[0]: Linear(3H, 3H)
        ffn_b=n(ks[5], (1, H3)),
        ln_g=jnp.ones((1, H3), jnp.float32),         # LayerNorm(3H)
        ln_b=jnp.zeros((1, H3), jnp.float32),
        merge_w1=n(ks[6], (H, H4)).T,                # merge[0]: Linear(4H, H)
        merge_b1=n(ks[7], (1, H)),
        merge_w2=n(ks[8], (H, H)).T,                 # merge[2]: Linear(H, H)
        merge_b2=n(ks[9], (1, H)),
    )
    convs = []
    for li in range(num_layers):
        kk = jax.random.split(ks[10 + li], 3)
        convs.append(dict(
            lin_l_w=n(kk[0], (H, H)).T,              # SAGEConv lin_l (bias=True)
            lin_l_b=n(kk[1], (1, H)),
            lin_r_w=n(kk[2], (H, H)).T,              # SAGEConv lin_r (bias=False)
        ))
    return dict(gcn=gcn, convs=convs)


def prepare_params(raw):
    """Fold edge-independent math, stack/split concat weights, pad to 128 lanes, bf16."""
    f32, bf16 = jnp.float32, jnp.bfloat16
    g = raw["gcn"]
    lin_w1, lin_w2, lin_b = g["lin_w"][:H], g["lin_w"][H:], g["lin_b"]
    wv, ffn_w, ffn_b = g["wv"], g["ffn_w"], g["ffn_b"]

    # edge-independent i_tenc = time_encoder(zeros(.,2)) — hoisted out of kernel
    c0 = jnp.cos(g["time_bias"])                            # (1, H) (= ones)
    i_tenc = c0 @ lin_w1 + c0 @ lin_w2 + lin_b              # (1, H)

    # fuse w_v and ffn (no nonlinearity between them) and fold the residual
    Mx = wv[:H] @ ffn_w                                     # (H, 3H) value path x_j
    Mt = wv[H:2 * H] @ ffn_w                                #          value path j_tenc
    Mu = wv[2 * H:] @ ffn_w                                 #          value path u
    eye = jnp.eye(H, dtype=f32)
    Sx = jnp.pad(eye, ((0, 0), (0, 2 * H)))                 # x_i residual -> lanes [0,H)
    Su = jnp.pad(eye, ((0, 0), (2 * H, 0)))                 # u residual   -> lanes [2H,3H)
    B = ffn_b + lin_b @ Mt + jnp.pad(i_tenc, ((0, 0), (H, H)))   # (1, 3H)

    # one stacked weight for the packed [x_j | x_i | u] operand
    Wpk = jnp.concatenate([Mx, Sx, Mu + Su], axis=0)        # (3H, 3H)

    padc = lambda a: jnp.pad(a, ((0, 0), (0, D_PAD - a.shape[1])))
    gcn = dict(
        freq=g["freq"].astype(f32),
        Wpk=padc(Wpk).astype(bf16),                          # (96, 128)
        M1=padc(lin_w1 @ Mt).astype(bf16),                   # (32, 128)
        M2=padc(lin_w2 @ Mt).astype(bf16),                   # (32, 128)
        B=padc(B).astype(f32),                               # (1, 128)
        ln_g_pad=padc(g["ln_g"]).astype(f32),
        ln_b_pad=padc(g["ln_b"]).astype(f32),
        # merge MLP: packed first-layer weight for input lanes [agg(3H) | x(H)]
        merge_w1=jnp.concatenate([g["merge_w1"][H:], g["merge_w1"][:H]],
                                 axis=0).astype(bf16),       # (128, 32)
        merge_b1=g["merge_b1"].astype(f32),
        merge_w2=g["merge_w2"].astype(bf16),
        merge_b2=g["merge_b2"].astype(f32),
    )
    convs = [dict(sage_w=jnp.concatenate([c["lin_l_w"], c["lin_r_w"]],
                                         axis=0).astype(bf16),   # (64, 32)
                  lin_l_b=c["lin_l_b"].astype(f32)) for c in raw["convs"]]
    return dict(gcn=gcn, convs=convs)


# --------------------------------------------------------------------------- #
if __name__ == "__main__":
    key = jax.random.PRNGKey(0)
    k_param, k_x, k_emb, k_attr, k_adj = jax.random.split(key, 5)

    N = 16                      # sampled nodes
    NUM_EMB = 10                # rows in `emb`
    E_TOTAL = 100               # rows in time_graph.edge_attr
    E = 64                      # sampled edges per layer
    sizes = [(N, 12), (N, 8)]   # (num_src, num_dst) per layer => num_layers = 2

    params = prepare_params(init_raw_params(k_param, num_layers=len(sizes)))

    x = jax.random.normal(k_x, (N, H), jnp.float32)
    emb = jax.random.normal(k_emb, (NUM_EMB, H), jnp.float32)

    ka1, ka2 = jax.random.split(k_attr)
    times = jax.random.uniform(ka1, (E_TOTAL, 2), jnp.float32)
    idxs = jax.random.randint(ka2, (E_TOTAL, 1), 0, NUM_EMB).astype(jnp.float32)
    attr = jnp.concatenate([times, idxs], axis=1)    # time_graph.edge_attr (E_TOTAL, 3)

    adjs = []
    kk = jax.random.split(k_adj, 3 * len(sizes))
    for li, size in enumerate(sizes):
        src = jax.random.randint(kk[3 * li + 0], (E,), 0, size[0], dtype=jnp.int32)
        dst = jax.random.randint(kk[3 * li + 1], (E,), 0, size[1], dtype=jnp.int32)
        e_id = jax.random.randint(kk[3 * li + 2], (E,), 0, E_TOTAL, dtype=jnp.int32)
        edge_index = jnp.stack([src, dst], axis=0)   # row 0 = source j, row 1 = target i
        adjs.append((edge_index, e_id, size))

    out = global_gnn_forward(x, adjs, emb, attr, params)
    out = jax.block_until_ready(out)
    assert out.shape == (sizes[-1][1], H) and out.dtype == jnp.float32
    print("KERNEL_OK")
</pallas_src>

<mosaic_0001>
module attributes {stable_mosaic.version = 11 : i64} {
  func.func @_edge_msg_kernel(%arg0: i32, %arg1: memref<64x96xbf16, #tpu.memory_space<vmem>>, %arg2: memref<64x1xf32, #tpu.memory_space<vmem>>, %arg3: memref<64x1xf32, #tpu.memory_space<vmem>>, %arg4: memref<1x32xf32, #tpu.memory_space<vmem>>, %arg5: memref<96x128xbf16, #tpu.memory_space<vmem>>, %arg6: memref<32x128xbf16, #tpu.memory_space<vmem>>, %arg7: memref<32x128xbf16, #tpu.memory_space<vmem>>, %arg8: memref<1x128xf32, #tpu.memory_space<vmem>>, %arg9: memref<1x128xf32, #tpu.memory_space<vmem>>, %arg10: memref<1x128xf32, #tpu.memory_space<vmem>>, %arg11: memref<64x128xbf16, #tpu.memory_space<vmem>>) attributes {dimension_semantics = [#tpu.dimension_semantics<parallel>], iteration_bounds = array<i64: 1>, scalar_prefetch = 0 : i64, scratch_operands = 0 : i64, tpu.core_type = #tpu.core_type<tc>, window_params = [{transform_indices = @transform_0, window_bounds = array<i64: 64, 96>}, {transform_indices = @transform_1, window_bounds = array<i64: 64, 1>}, {transform_indices = @transform_2, window_bounds = array<i64: 64, 1>}, {pipeline_mode = #tpu.pipeline_mode<synchronous>, transform_indices = @transform_3, window_bounds = array<i64: 1, 32>}, {pipeline_mode = #tpu.pipeline_mode<synchronous>, transform_indices = @transform_4, window_bounds = array<i64: 96, 128>}, {pipeline_mode = #tpu.pipeline_mode<synchronous>, transform_indices = @transform_5, window_bounds = array<i64: 32, 128>}, {pipeline_mode = #tpu.pipeline_mode<synchronous>, transform_indices = @transform_6, window_bounds = array<i64: 32, 128>}, {pipeline_mode = #tpu.pipeline_mode<synchronous>, transform_indices = @transform_7, window_bounds = array<i64: 1, 128>}, {pipeline_mode = #tpu.pipeline_mode<synchronous>, transform_indices = @transform_8, window_bounds = array<i64: 1, 128>}, {pipeline_mode = #tpu.pipeline_mode<synchronous>, transform_indices = @transform_9, window_bounds = array<i64: 1, 128>}, {transform_indices = @transform_10, window_bounds = array<i64: 64, 128>}]} {
    %c0 = arith.constant 0 : index
    %c0_0 = arith.constant 0 : index
    %0 = vector.load %arg4[%c0, %c0_0] : memref<1x32xf32, #tpu.memory_space<vmem>>, vector<1x32xf32>
    %c0_1 = arith.constant 0 : index
    %c0_2 = arith.constant 0 : index
    %1 = vector.load %arg2[%c0_1, %c0_2] : memref<64x1xf32, #tpu.memory_space<vmem>>, vector<64x1xf32>
    %2 = vector.broadcast %1 : vector<64x1xf32> to vector<64x32xf32>
    %3 = vector.broadcast %0 : vector<1x32xf32> to vector<64x32xf32>
    %4 = arith.mulf %2, %3 : vector<64x32xf32>
    %5 = math.cos %4 : vector<64x32xf32>
    %6 = arith.truncf %5 : vector<64x32xf32> to vector<64x32xbf16>
    %c0_3 = arith.constant 0 : index
    %c0_4 = arith.constant 0 : index
    %7 = vector.load %arg3[%c0_3, %c0_4] : memref<64x1xf32, #tpu.memory_space<vmem>>, vector<64x1xf32>
    %8 = vector.broadcast %7 : vector<64x1xf32> to vector<64x32xf32>
    %9 = vector.broadcast %0 : vector<1x32xf32> to vector<64x32xf32>
    %10 = arith.mulf %8, %9 : vector<64x32xf32>
    %11 = math.cos %10 : vector<64x32xf32>
    %12 = arith.truncf %11 : vector<64x32xf32> to vector<64x32xbf16>
    %c0_5 = arith.constant 0 : index
    %c0_6 = arith.constant 0 : index
    %13 = vector.load %arg1[%c0_5, %c0_6] : memref<64x96xbf16, #tpu.memory_space<vmem>>, vector<64x96xbf16>
    %c0_7 = arith.constant 0 : index
    %c0_8 = arith.constant 0 : index
    %14 = vector.load %arg5[%c0_7, %c0_8] : memref<96x128xbf16, #tpu.memory_space<vmem>>, vector<96x128xbf16>
    %cst = arith.constant dense<0.000000e+00> : vector<64x128xf32>
    %15 = tpu.matmul %13, %14, %cst {dimension_numbers = #tpu.dot_dimension_numbers<[1], [0], [0], [1], [0, 0, 1, 1], [], []>} : vector<64x96xbf16>, vector<96x128xbf16>, vector<64x128xf32> -> vector<64x128xf32>
    %c0_9 = arith.constant 0 : index
    %c0_10 = arith.constant 0 : index
    %16 = vector.load %arg6[%c0_9, %c0_10] : memref<32x128xbf16, #tpu.memory_space<vmem>>, vector<32x128xbf16>
    %cst_11 = arith.constant dense<0.000000e+00> : vector<64x128xf32>
    %17 = tpu.matmul %6, %16, %cst_11 {dimension_numbers = #tpu.dot_dimension_numbers<[1], [0], [0], [1], [0, 0, 1, 1], [], []>} : vector<64x32xbf16>, vector<32x128xbf16>, vector<64x128xf32> -> vector<64x128xf32>
    %18 = arith.addf %15, %17 : vector<64x128xf32>
    %c0_12 = arith.constant 0 : index
    %c0_13 = arith.constant 0 : index
    %19 = vector.load %arg7[%c0_12, %c0_13] : memref<32x128xbf16, #tpu.memory_space<vmem>>, vector<32x128xbf16>
    %cst_14 = arith.constant dense<0.000000e+00> : vector<64x128xf32>
    %20 = tpu.matmul %12, %19, %cst_14 {dimension_numbers = #tpu.dot_dimension_numbers<[1], [0], [0], [1], [0, 0, 1, 1], [], []>} : vector<64x32xbf16>, vector<32x128xbf16>, vector<64x128xf32> -> vector<64x128xf32>
    %21 = arith.addf %18, %20 : vector<64x128xf32>
    %c0_15 = arith.constant 0 : index
    %c0_16 = arith.constant 0 : index
    %22 = vector.load %arg8[%c0_15, %c0_16] : memref<1x128xf32, #tpu.memory_space<vmem>>, vector<1x128xf32>
    %23 = vector.broadcast %22 : vector<1x128xf32> to vector<64x128xf32>
    %24 = arith.addf %21, %23 : vector<64x128xf32>
    %cst_17 = arith.constant dense<0.000000e+00> : vector<64xf32>
    %25 = vector.multi_reduction <add>, %24, %cst_17 [1] : vector<64x128xf32> to vector<64xf32>
    %26 = vector.shape_cast %25 : vector<64xf32> to vector<64x1xf32>
    %cst_18 = arith.constant 0.010416667 : f32
    %27 = vector.broadcast %cst_18 : f32 to vector<64x1xf32>
    %28 = arith.mulf %26, %27 : vector<64x1xf32>
    %29 = arith.mulf %24, %24 : vector<64x128xf32>
    %cst_19 = arith.constant dense<0.000000e+00> : vector<64xf32>
    %30 = vector.multi_reduction <add>, %29, %cst_19 [1] : vector<64x128xf32> to vector<64xf32>
    %31 = vector.shape_cast %30 : vector<64xf32> to vector<64x1xf32>
    %cst_20 = arith.constant 0.010416667 : f32
    %32 = vector.broadcast %cst_20 : f32 to vector<64x1xf32>
    %33 = arith.mulf %31, %32 : vector<64x1xf32>
    %34 = arith.mulf %28, %28 : vector<64x1xf32>
    %35 = arith.subf %33, %34 : vector<64x1xf32>
    %cst_21 = arith.constant 0.000000e+00 : f32
    %36 = vector.broadcast %cst_21 : f32 to vector<64x1xf32>
    %37 = arith.maximumf %35, %36 : vector<64x1xf32>
    %38 = vector.broadcast %28 : vector<64x1xf32> to vector<64x128xf32>
    %39 = arith.subf %24, %38 : vector<64x128xf32>
    %cst_22 = arith.constant 9.99999974E-6 : f32
    %40 = vector.broadcast %cst_22 : f32 to vector<64x1xf32>
    %41 = arith.addf %37, %40 : vector<64x1xf32>
    %42 = math.rsqrt %41 : vector<64x1xf32>
    %43 = vector.broadcast %42 : vector<64x1xf32> to vector<64x128xf32>
    %44 = arith.mulf %39, %43 : vector<64x128xf32>
    %c0_23 = arith.constant 0 : index
    %c0_24 = arith.constant 0 : index
    %45 = vector.load %arg9[%c0_23, %c0_24] : memref<1x128xf32, #tpu.memory_space<vmem>>, vector<1x128xf32>
    %46 = vector.broadcast %45 : vector<1x128xf32> to vector<64x128xf32>
    %47 = arith.mulf %44, %46 : vector<64x128xf32>
    %c0_25 = arith.constant 0 : index
    %c0_26 = arith.constant 0 : index
    %48 = vector.load %arg10[%c0_25, %c0_26] : memref<1x128xf32, #tpu.memory_space<vmem>>, vector<1x128xf32>
    %49 = vector.broadcast %48 : vector<1x128xf32> to vector<64x128xf32>
    %50 = arith.addf %47, %49 : vector<64x128xf32>
    %51 = arith.truncf %50 : vector<64x128xf32> to vector<64x128xbf16>
    %c0_27 = arith.constant 0 : index
    %c0_28 = arith.constant 0 : index
    %52 = vector.load %arg11[%c0_27, %c0_28] : memref<64x128xbf16, #tpu.memory_space<vmem>>, vector<64x128xbf16>
    tpu.vector_store %arg11[%c0_27, %c0_28], %51 {strides = array<i32>} : memref<64x128xbf16, #tpu.memory_space<vmem>>, vector<64x128xbf16>,
    return
  }
  func.func @transform_0(%arg0: i32) -> (i32, i32) {
    %c0_i32 = arith.constant 0 : i32
    %c0_i32_0 = arith.constant 0 : i32
    return %arg0, %c0_i32 : i32, i32
  }
  func.func @transform_1(%arg0: i32) -> (i32, i32) {
    %c0_i32 = arith.constant 0 : i32
    %c0_i32_0 = arith.constant 0 : i32
    return %arg0, %c0_i32 : i32, i32
  }
  func.func @transform_2(%arg0: i32) -> (i32, i32) {
    %c0_i32 = arith.constant 0 : i32
    %c0_i32_0 = arith.constant 0 : i32
    return %arg0, %c0_i32 : i32, i32
  }
  func.func @transform_3(%arg0: i32) -> (i32, i32) {
    %c0_i32 = arith.constant 0 : i32
    %c0_i32_0 = arith.constant 0 : i32
    %c0_i32_1 = arith.constant 0 : i32
    return %c0_i32, %c0_i32_0 : i32, i32
  }
  func.func @transform_4(%arg0: i32) -> (i32, i32) {
    %c0_i32 = arith.constant 0 : i32
    %c0_i32_0 = arith.constant 0 : i32
    %c0_i32_1 = arith.constant 0 : i32
    return %c0_i32, %c0_i32_0 : i32, i32
  }
  func.func @transform_5(%arg0: i32) -> (i32, i32) {
    %c0_i32 = arith.constant 0 : i32
    %c0_i32_0 = arith.constant 0 : i32
    %c0_i32_1 = arith.constant 0 : i32
    return %c0_i32, %c0_i32_0 : i32, i32
  }
  func.func @transform_6(%arg0: i32) -> (i32, i32) {
    %c0_i32 = arith.constant 0 : i32
    %c0_i32_0 = arith.constant 0 : i32
    %c0_i32_1 = arith.constant 0 : i32
    return %c0_i32, %c0_i32_0 : i32, i32
  }
  func.func @transform_7(%arg0: i32) -> (i32, i32) {
    %c0_i32 = arith.constant 0 : i32
    %c0_i32_0 = arith.constant 0 : i32
    %c0_i32_1 = arith.constant 0 : i32
    return %c0_i32, %c0_i32_0 : i32, i32
  }
  func.func @transform_8(%arg0: i32) -> (i32, i32) {
    %c0_i32 = arith.constant 0 : i32
    %c0_i32_0 = arith.constant 0 : i32
    %c0_i32_1 = arith.constant 0 : i32
    return %c0_i32, %c0_i32_0 : i32, i32
  }
  func.func @transform_9(%arg0: i32) -> (i32, i32) {
    %c0_i32 = arith.constant 0 : i32
    %c0_i32_0 = arith.constant 0 : i32
    %c0_i32_1 = arith.constant 0 : i32
    return %c0_i32, %c0_i32_0 : i32, i32
  }
  func.func @transform_10(%arg0: i32) -> (i32, i32) {
    %c0_i32 = arith.constant 0 : i32
    %c0_i32_0 = arith.constant 0 : i32
    return %arg0, %c0_i32 : i32, i32
  }
}

</mosaic_0001>

<llo_original>
// kernel: tpu_custom_call.1
$region0: #{tpu_custom_call.1}
  #allocation0 [shape = 'u32[]', space=smem, size = 0x4, offset = 0x4, fixed_abs, tag = 'smem constant byte address 0x4 - core index']
  #allocation1 [shape = 'u32[72,128]{1,0:T(1,128)}', space=vmem, size = 0x9000, scoped, tag = 'internal scratch']
  %s0 = inlined_call_operand.vmem [shape: bf16[64,96], index: 0, kind: input, shape index: {}]
  %s1 = inlined_call_operand.vmem [shape: f32[64,1], index: 1, kind: input, shape index: {}]
  %s2 = inlined_call_operand.vmem [shape: f32[64,1], index: 2, kind: input, shape index: {}]
  %s3 = inlined_call_operand.vmem [shape: f32[1,32], index: 3, kind: input, shape index: {}]
  %s4 = inlined_call_operand.vmem [shape: bf16[96,128], index: 4, kind: input, shape index: {}]
  %s5 = inlined_call_operand.vmem [shape: bf16[32,128], index: 5, kind: input, shape index: {}]
  %s6 = inlined_call_operand.vmem [shape: bf16[32,128], index: 6, kind: input, shape index: {}]
  %s7 = inlined_call_operand.vmem [shape: f32[1,128], index: 7, kind: input, shape index: {}]
  %s8 = inlined_call_operand.vmem [shape: f32[1,128], index: 8, kind: input, shape index: {}]
  %s9 = inlined_call_operand.vmem [shape: f32[1,128], index: 9, kind: input, shape index: {}]
  %s10 = inlined_call_operand.hbm [shape: bf16[64,128], index: 10, kind: output, shape index: {}]
  %s11 = sld [smem:[#allocation0]]
  $region50: #{tpu_custom_call.1} parent=0
    _
  %s13 = ssub.s32 1, %s11
  %s14 = scalar_select 0, %s13, %s11
  $region1: #{tpu_custom_call.1} parent=0
    #allocation2 [shape = 'u8[16384]{0}', space=vmem, size = 0x4000, scoped, tag = 'output window, operand 0, single buffered']
    #allocation3 [shape = 's32[1]{0}', space=sflag, size = 0x4, scoped, tag = 'scoped memory for tpu_custom_call.1']
    %15 = vsyncpa [#allocation3], 0
    // Predicated region
    $region2: #{tpu_custom_call.1} parent=1 // pred_check
      _
    $region3: #{tpu_custom_call.1} parent=1 // pred_check_branch
      %17 = sbr.rel (0) target = $region5
    $region4: #{tpu_custom_call.1} parent=1 // pred_region
      _
    $region5: #{tpu_custom_call.1} parent=1 // pred_fallthru
      _
    // Predicated region
    $region6: #{tpu_custom_call.1} parent=1 // pred_check
      _
    $region7: #{tpu_custom_call.1} parent=1 // pred_check_branch
      %19 = sbr.rel (0) target = $region9
    $region8: #{tpu_custom_call.1} parent=1 // pred_region
      _
    $region9: #{tpu_custom_call.1} parent=1 // pred_fallthru
      _
    // Predicated region
    $region10: #{tpu_custom_call.1} parent=1 // pred_check
      _
    $region11: #{tpu_custom_call.1} parent=1 // pred_check_branch
      %21 = sbr.rel (0) target = $region13
    $region12: #{tpu_custom_call.1} parent=1 // pred_region
      _
    $region13: #{tpu_custom_call.1} parent=1 // pred_fallthru
      _
    // Predicated region
    $region14: #{tpu_custom_call.1} parent=1 // pred_check
      _
    $region15: #{tpu_custom_call.1} parent=1 // pred_check_branch
      %23 = sbr.rel (0) target = $region17
    $region16: #{tpu_custom_call.1} parent=1 // pred_region
      _
    $region17: #{tpu_custom_call.1} parent=1 // pred_fallthru
      _
    // Predicated region
    $region18: #{tpu_custom_call.1} parent=1 // pred_check
      _
    $region19: #{tpu_custom_call.1} parent=1 // pred_check_branch
      %25 = sbr.rel (0) target = $region21
    $region20: #{tpu_custom_call.1} parent=1 // pred_region
      _
    $region21: #{tpu_custom_call.1} parent=1 // pred_fallthru
      _
    // Predicated region
    $region22: #{tpu_custom_call.1} parent=1 // pred_check
      _
    $region23: #{tpu_custom_call.1} parent=1 // pred_check_branch
      %27 = sbr.rel (0) target = $region25
    $region24: #{tpu_custom_call.1} parent=1 // pred_region
      _
    $region25: #{tpu_custom_call.1} parent=1 // pred_fallthru
      _
    // Predicated region
    $region26: #{tpu_custom_call.1} parent=1 // pred_check
      _
    $region27: #{tpu_custom_call.1} parent=1 // pred_check_branch
      %29 = sbr.rel (0) target = $region29
    $region28: #{tpu_custom_call.1} parent=1 // pred_region
      _
    $region29: #{tpu_custom_call.1} parent=1 // pred_fallthru
      _
    // Predicated region
    $region30: #{tpu_custom_call.1} parent=1 // pred_check
      _
    $region31: #{tpu_custom_call.1} parent=1 // pred_check_branch
      %31 = sbr.rel (0) target = $region33
    $region32: #{tpu_custom_call.1} parent=1 // pred_region
      _
    $region33: #{tpu_custom_call.1} parent=1 // pred_fallthru
      _
    // Predicated region
    $region34: #{tpu_custom_call.1} parent=1 // pred_check
      _
    $region35: #{tpu_custom_call.1} parent=1 // pred_check_branch
      %33 = sbr.rel (0) target = $region37
    $region36: #{tpu_custom_call.1} parent=1 // pred_region
      _
    $region37: #{tpu_custom_call.1} parent=1 // pred_fallthru
      _
    // Predicated region
    $region38: #{tpu_custom_call.1} parent=1 // pred_check
      _
    $region39: #{tpu_custom_call.1} parent=1 // pred_check_branch
      %35 = sbr.rel (0) target = $region41
    $region40: #{tpu_custom_call.1} parent=1 // pred_region
      _
    $region41: #{tpu_custom_call.1} parent=1 // pred_fallthru
      _
    %v37 = vld [vmem:[%s3] sm:$0x1]
    %v38 = vld [vmem:[%s1] sm:$0xff]
    %v39 = vld [vmem:[%s1 + $0x8] sm:$0xff]
    %v40 = vld [vmem:[%s1 + $0x10] sm:$0xff]
    %v41 = vld [vmem:[%s1 + $0x18] sm:$0xff]
    %v42 = vld [vmem:[%s1 + $0x20] sm:$0xff]
    %v43 = vld [vmem:[%s1 + $0x28] sm:$0xff]
    %v44 = vld [vmem:[%s1 + $0x30] sm:$0xff]
    %v45 = vld [vmem:[%s1 + $0x38] sm:$0xff]
    %47 = vset.pattern.permute.xlu0 0
    %48 = vperm.xlu0 %47, %v38
    %v49 = vpop.permute.xlu0 %48
    %52 = vset.pattern.permute.xlu0 0
    %53 = vperm.xlu0 %52, %v39
    %v54 = vpop.permute.xlu0 %53
    %57 = vset.pattern.permute.xlu0 0
    %58 = vperm.xlu0 %57, %v40
    %v59 = vpop.permute.xlu0 %58
    %62 = vset.pattern.permute.xlu0 0
    %63 = vperm.xlu0 %62, %v41
    %v64 = vpop.permute.xlu0 %63
    %67 = vset.pattern.permute.xlu0 0
    %68 = vperm.xlu0 %67, %v42
    %v69 = vpop.permute.xlu0 %68
    %72 = vset.pattern.permute.xlu0 0
    %73 = vperm.xlu0 %72, %v43
    %v74 = vpop.permute.xlu0 %73
    %77 = vset.pattern.permute.xlu0 0
    %78 = vperm.xlu0 %77, %v44
    %v79 = vpop.permute.xlu0 %78
    %82 = vset.pattern.permute.xlu0 0
    %83 = vperm.xlu0 %82, %v45
    %v84 = vpop.permute.xlu0 %83
    %v87 = vperm.slane %v37, 0
    %v89 = vmul.f32 %v49, %v87
    %v90 = vmul.f32 %v54, %v87
    %v91 = vmul.f32 %v59, %v87
    %v92 = vmul.f32 %v64, %v87
    %v93 = vmul.f32 %v69, %v87
    %v94 = vmul.f32 %v74, %v87
    %v95 = vmul.f32 %v79, %v87
    %v96 = vmul.f32 %v84, %v87
    %v97 = vand.u32 2147483647, %v89
    %vm98 = vcmp.le.f32.partialorder %v97, 0.7853982
    %vm99 = vcmp.lt.s32.totalorder %v89, 0
    %v100 = vand.u32 %v89, 2139095040
    %v101 = vshrl.u32 %v100, 23
    %v102 = vsub.s32 %v101, 127
    %v103 = vand.u32 2147483647, %v89
    %v104 = vand.u32 %v103, 8388607
    %v105 = vor.u32 %v104, 8388608
    %v106 = vsub.s32 0, %v105
    %v107 = vadd.s32 %v102, 1
    %vm108 = vcmp.gt.s32.totalorder %v107, 0
    %v109 = vsel %vm108, %v107, 0
    %v110 = vshrl.u32 %v109, 5
    %v111 = vand.u32 %v109, 31
    %v112 = vsub.s32 32, %v111
    %v113 = vshrl.u32 683565275, %v112
    %v114 = vshll.u32 683565275, %v111
    %v115 = vshrl.u32 2475754826, %v112
    %v116 = vor.u32 %v114, %v115
    %v117 = vshll.u32 2475754826, %v111
    %v118 = vshrl.u32 2131351028, %v112
    %v119 = vor.u32 %v117, %v118
    %v120 = vshll.u32 2131351028, %v111
    %v121 = vshrl.u32 2102212464, %v112
    %v122 = vor.u32 %v120, %v121
    %v123 = vshll.u32 2102212464, %v111
    %v124 = vshrl.u32 920167782, %v112
    %v125 = vor.u32 %v123, %v124
    %v126 = vshll.u32 920167782, %v111
    %v127 = vshrl.u32 1326507024, %v112
    %v128 = vor.u32 %v126, %v127
    %vm129 = vcmp.lt.s32.totalorder %v110, 1
    %vm130 = vcmp.lt.s32.totalorder %v110, 2
    %vm131 = vcmp.lt.s32.totalorder %v110, 3
    %vm132 = vcmp.lt.s32.totalorder %v110, 4
    %v133 = vsel %vm129, %v113, %v116
    %v134 = vsel %vm132, %v122, 2102212464
    %v135 = vsel %vm131, %v119, %v134
    %v136 = vsel %vm130, %v133, %v135
    %v137 = vsel %vm129, %v116, %v119
    %v138 = vsel %vm132, %v125, 920167782
    %v139 = vsel %vm131, %v122, %v138
    %v140 = vsel %vm130, %v137, %v139
    %v141 = vsel %vm129, %v119, %v122
    %v142 = vsel %vm132, %v128, 1326507024
    %v143 = vsel %vm131, %v125, %v142
    %v144 = vsel %vm130, %v141, %v143
    %v145 = vshll.u32 %v105, 8
    %v146 = vand.u32 %v145, 65535
    %v147 = vshrl.u32 %v145, 16
    %v148 = vand.u32 %v144, 65535
    %v149 = vshrl.u32 %v144, 16
    %v150 = vmul.u32 %v146, %v148
    %v151 = vmul.u32 %v146, %v149
    %v152 = vmul.u32 %v147, %v148
    %v153 = vmul.u32 %v147, %v149
    %v154 = vshll.u32 %v151, 16
    %v155 = vshrl.u32 %v151, 16
    %v156 = vshll.u32 %v152, 16
    %v157 = vshrl.u32 %v152, 16
    %vm158 = vc.u32 %v150, %v154
    %v159 = vsel %vm158, 1, 0
    %v160 = vadd.s32 %v150, %v154
    %v161 = vadd.s32 %v153, %v159
    %vm162 = vc.u32 %v160, %v156
    %v163 = vsel %vm162, 1, 0
    %v164 = vadd.s32 %v160, %v156
    %v165 = vadd.s32 %v161, %v163
    %v166 = vadd.s32 %v165, %v155
    %v167 = vadd.s32 %v166, %v157
    %v168 = vand.u32 %v145, 65535
    %v169 = vshrl.u32 %v145, 16
    %v170 = vand.u32 %v140, 65535
    %v171 = vshrl.u32 %v140, 16
    %v172 = vmul.u32 %v168, %v170
    %v173 = vmul.u32 %v168, %v171
    %v174 = vmul.u32 %v169, %v170
    %v175 = vmul.u32 %v169, %v171
    %v176 = vshll.u32 %v173, 16
    %v177 = vshrl.u32 %v173, 16
    %v178 = vshll.u32 %v174, 16
    %v179 = vshrl.u32 %v174, 16
    %vm180 = vc.u32 %v172, %v176
    %v181 = vsel %vm180, 1, 0
    %v182 = vadd.s32 %v172, %v176
    %v183 = vadd.s32 %v175, %v181
    %vm184 = vc.u32 %v182, %v178
    %v185 = vsel %vm184, 1, 0
    %v186 = vadd.s32 %v182, %v178
    %v187 = vadd.s32 %v183, %v185
    %v188 = vadd.s32 %v187, %v177
    %v189 = vadd.s32 %v188, %v179
    %v190 = vmul.u32 %v145, %v136
    %v191 = vadd.s32 %v167, %v186
    %vm192 = vc.u32 %v167, %v186
    %v193 = vadd.s32 %v189, 1
    %v194 = vsel %vm192, %v193, %v189
    %v195 = vadd.s32 %v190, %v194
    %v196 = vadd.s32 %v195, 536870912
    %v197 = vshrl.u32 %v196, 30
    %v198 = vshll.u32 %v197, 30
    %v199 = vsub.s32 %v195, %v198
    %vm200 = vcmp.lt.s32.totalorder %v199, 0
    %v201 = vsub.s32 0, %v199
    %v202 = vsel %vm200, %v201, %v199
    %v203 = vclz %v202
    %v204 = vsub.s32 %v203, 2
    %vm205 = vcmp.gt.s32.totalorder 0, %v204
    %v206 = vsel %vm205, 0, %v204
    %v207 = vsub.s32 32, %v206
    %v208 = vshll.u32 %v199, %v206
    %v209 = vshrl.u32 %v191, %v207
    %v210 = vor.u32 %v208, %v209
    %v211 = vsub.s32 4294967266, %v206
    %v212 = vadd.s32 %v211, 127
    %v213 = vshll.u32 %v212, 23
    %v214 = vor.u32 4788187, %v213
    %v215 = vand.u32 2147483647, %v214
    %v217 = vcvt.s32.f32 %v210
    %v218 = vmul.f32 %v217, %v215
    %v219 = vxor.u32 %v218, 2147483648
    %v220 = vsel %vm99, %v219, %v218
    %v221 = vsub.s32 4, %v197
    %v222 = vsel %vm99, %v221, %v197
    %v223 = vsel %vm98, %v89, %v220
    %v224 = vsel %vm98, 0, %v222
    %v225 = vmul.f32 %v223, %v223
    %v226 = vmul.f32 %v225, -0.001358992
    %v227 = vadd.f32 %v226, 0.041655596
    %v228 = vmul.f32 %v225, %v227
    %v229 = vadd.f32 %v228, -0.4999988
    %v230 = vmul.f32 %v225, %v229
    %v231 = vadd.f32 1.0, %v230
    %v232 = vmul.f32 %v223, %v223
    %v233 = vmul.f32 %v232, -0.00019511016
    %v234 = vadd.f32 %v233, 0.008332121
    %v235 = vmul.f32 %v232, %v234
    %v236 = vadd.f32 %v235, -0.16666654
    %v237 = vmul.f32 %v232, %v236
    %v238 = vadd.f32 %v237, 1.0
    %v239 = vmul.f32 %v238, %v223
    %vm240 = vweird.f32 %v89
    %v241 = vand.u32 %v224, 3
    %vm242 = vcmp.lt.s32.totalorder %v241, 2
    %vm243 = vcmp.eq.s32.totalorder %v241, 0
    %v244 = vxor.u32 %v239, 2147483648
    %v245 = vsel %vm243, %v231, %v244
    %vm246 = vcmp.eq.s32.totalorder %v241, 2
    %v247 = vxor.u32 %v231, 2147483648
    %v248 = vsel %vm246, %v247, %v239
    %v249 = vsel %vm242, %v245, %v248
    %v250 = vsel %vm240, nan, %v249
    %v251 = vand.u32 2147483647, %v90
    %vm252 = vcmp.le.f32.partialorder %v251, 0.7853982
    %vm253 = vcmp.lt.s32.totalorder %v90, 0
    %v254 = vand.u32 %v90, 2139095040
    %v255 = vshrl.u32 %v254, 23
    %v256 = vsub.s32 %v255, 127
    %v257 = vand.u32 2147483647, %v90
    %v258 = vand.u32 %v257, 8388607
    %v259 = vor.u32 %v258, 8388608
    %v260 = vsub.s32 0, %v259
    %v261 = vadd.s32 %v256, 1
    %vm262 = vcmp.gt.s32.totalorder %v261, 0
    %v263 = vsel %vm262, %v261, 0
    %v264 = vshrl.u32 %v263, 5
    %v265 = vand.u32 %v263, 31
    %v266 = vsub.s32 32, %v265
    %v267 = vshrl.u32 683565275, %v266
    %v268 = vshll.u32 683565275, %v265
    %v269 = vshrl.u32 2475754826, %v266
    %v270 = vor.u32 %v268, %v269
    %v271 = vshll.u32 2475754826, %v265
    %v272 = vshrl.u32 2131351028, %v266
    %v273 = vor.u32 %v271, %v272
    %v274 = vshll.u32 2131351028, %v265
    %v275 = vshrl.u32 2102212464, %v266
    %v276 = vor.u32 %v274, %v275
    %v277 = vshll.u32 2102212464, %v265
    %v278 = vshrl.u32 920167782, %v266
    %v279 = vor.u32 %v277, %v278
    %v280 = vshll.u32 920167782, %v265
    %v281 = vshrl.u32 1326507024, %v266
    %v282 = vor.u32 %v280, %v281
    %vm283 = vcmp.lt.s32.totalorder %v264, 1
    %vm284 = vcmp.lt.s32.totalorder %v264, 2
    %vm285 = vcmp.lt.s32.totalorder %v264, 3
    %vm286 = vcmp.lt.s32.totalorder %v264, 4
    %v287 = vsel %vm283, %v267, %v270
    %v288 = vsel %vm286, %v276, 2102212464
    %v289 = vsel %vm285, %v273, %v288
    %v290 = vsel %vm284, %v287, %v289
    %v291 = vsel %vm283, %v270, %v273
    %v292 = vsel %vm286, %v279, 920167782
    %v293 = vsel %vm285, %v276, %v292
    %v294 = vsel %vm284, %v291, %v293
    %v295 = vsel %vm283, %v273, %v276
    %v296 = vsel %vm286, %v282, 1326507024
    %v297 = vsel %vm285, %v279, %v296
    %v298 = vsel %vm284, %v295, %v297
    %v299 = vshll.u32 %v259, 8
    %v300 = vand.u32 %v299, 65535
    %v301 = vshrl.u32 %v299, 16
    %v302 = vand.u32 %v298, 65535
    %v303 = vshrl.u32 %v298, 16
    %v304 = vmul.u32 %v300, %v302
    %v305 = vmul.u32 %v300, %v303
    %v306 = vmul.u32 %v301, %v302
    %v307 = vmul.u32 %v301, %v303
    %v308 = vshll.u32 %v305, 16
    %v309 = vshrl.u32 %v305, 16
    %v310 = vshll.u32 %v306, 16
    %v311 = vshrl.u32 %v306, 16
    %vm312 = vc.u32 %v304, %v308
    %v313 = vsel %vm312, 1, 0
    %v314 = vadd.s32 %v304, %v308
    %v315 = vadd.s32 %v307, %v313
    %vm316 = vc.u32 %v314, %v310
    %v317 = vsel %vm316, 1, 0
    %v318 = vadd.s32 %v314, %v310
    %v319 = vadd.s32 %v315, %v317
    %v320 = vadd.s32 %v319, %v309
    %v321 = vadd.s32 %v320, %v311
    %v322 = vand.u32 %v299, 65535
    %v323 = vshrl.u32 %v299, 16
    %v324 = vand.u32 %v294, 65535
    %v325 = vshrl.u32 %v294, 16
    %v326 = vmul.u32 %v322, %v324
    %v327 = vmul.u32 %v322, %v325
    %v328 = vmul.u32 %v323, %v324
    %v329 = vmul.u32 %v323, %v325
    %v330 = vshll.u32 %v327, 16
    %v331 = vshrl.u32 %v327, 16
    %v332 = vshll.u32 %v328, 16
    %v333 = vshrl.u32 %v328, 16
    %vm334 = vc.u32 %v326, %v330
    %v335 = vsel %vm334, 1, 0
    %v336 = vadd.s32 %v326, %v330
    %v337 = vadd.s32 %v329, %v335
    %vm338 = vc.u32 %v336, %v332
    %v339 = vsel %vm338, 1, 0
    %v340 = vadd.s32 %v336, %v332
    %v341 = vadd.s32 %v337, %v339
    %v342 = vadd.s32 %v341, %v331
    %v343 = vadd.s32 %v342, %v333
    %v344 = vmul.u32 %v299, %v290
    %v345 = vadd.s32 %v321, %v340
    %vm346 = vc.u32 %v321, %v340
    %v347 = vadd.s32 %v343, 1
    %v348 = vsel %vm346, %v347, %v343
    %v349 = vadd.s32 %v344, %v348
    %v350 = vadd.s32 %v349, 536870912
    %v351 = vshrl.u32 %v350, 30
    %v352 = vshll.u32 %v351, 30
    %v353 = vsub.s32 %v349, %v352
    %vm354 = vcmp.lt.s32.totalorder %v353, 0
    %v355 = vsub.s32 0, %v353
    %v356 = vsel %vm354, %v355, %v353
    %v357 = vclz %v356
    %v358 = vsub.s32 %v357, 2
    %vm359 = vcmp.gt.s32.totalorder 0, %v358
    %v360 = vsel %vm359, 0, %v358
    %v361 = vsub.s32 32, %v360
    %v362 = vshll.u32 %v353, %v360
    %v363 = vshrl.u32 %v345, %v361
    %v364 = vor.u32 %v362, %v363
    %v365 = vsub.s32 4294967266, %v360
    %v366 = vadd.s32 %v365, 127
    %v367 = vshll.u32 %v366, 23
    %v368 = vor.u32 4788187, %v367
    %v369 = vand.u32 2147483647, %v368
    %v371 = vcvt.s32.f32 %v364
    %v372 = vmul.f32 %v371, %v369
    %v373 = vxor.u32 %v372, 2147483648
    %v374 = vsel %vm253, %v373, %v372
    %v375 = vsub.s32 4, %v351
    %v376 = vsel %vm253, %v375, %v351
    %v377 = vsel %vm252, %v90, %v374
    %v378 = vsel %vm252, 0, %v376
    %v379 = vmul.f32 %v377, %v377
    %v380 = vmul.f32 %v379, -0.001358992
    %v381 = vadd.f32 %v380, 0.041655596
    %v382 = vmul.f32 %v379, %v381
    %v383 = vadd.f32 %v382, -0.4999988
    %v384 = vmul.f32 %v379, %v383
    %v385 = vadd.f32 1.0, %v384
    %v386 = vmul.f32 %v377, %v377
    %v387 = vmul.f32 %v386, -0.00019511016
    %v388 = vadd.f32 %v387, 0.008332121
    %v389 = vmul.f32 %v386, %v388
    %v390 = vadd.f32 %v389, -0.16666654
    %v391 = vmul.f32 %v386, %v390
    %v392 = vadd.f32 %v391, 1.0
    %v393 = vmul.f32 %v392, %v377
    %vm394 = vweird.f32 %v90
    %v395 = vand.u32 %v378, 3
    %vm396 = vcmp.lt.s32.totalorder %v395, 2
    %vm397 = vcmp.eq.s32.totalorder %v395, 0
    %v398 = vxor.u32 %v393, 2147483648
    %v399 = vsel %vm397, %v385, %v398
    %vm400 = vcmp.eq.s32.totalorder %v395, 2
    %v401 = vxor.u32 %v385, 2147483648
    %v402 = vsel %vm400, %v401, %v393
    %v403 = vsel %vm396, %v399, %v402
    %v404 = vsel %vm394, nan, %v403
    %v405 = vand.u32 2147483647, %v91
    %vm406 = vcmp.le.f32.partialorder %v405, 0.7853982
    %vm407 = vcmp.lt.s32.totalorder %v91, 0
    %v408 = vand.u32 %v91, 2139095040
    %v409 = vshrl.u32 %v408, 23
    %v410 = vsub.s32 %v409, 127
    %v411 = vand.u32 2147483647, %v91
    %v412 = vand.u32 %v411, 8388607
    %v413 = vor.u32 %v412, 8388608
    %v414 = vsub.s32 0, %v413
    %v415 = vadd.s32 %v410, 1
    %vm416 = vcmp.gt.s32.totalorder %v415, 0
    %v417 = vsel %vm416, %v415, 0
    %v418 = vshrl.u32 %v417, 5
    %v419 = vand.u32 %v417, 31
    %v420 = vsub.s32 32, %v419
    %v421 = vshrl.u32 683565275, %v420
    %v422 = vshll.u32 683565275, %v419
    %v423 = vshrl.u32 2475754826, %v420
    %v424 = vor.u32 %v422, %v423
    %v425 = vshll.u32 2475754826, %v419
    %v426 = vshrl.u32 2131351028, %v420
    %v427 = vor.u32 %v425, %v426
    %v428 = vshll.u32 2131351028, %v419
    %v429 = vshrl.u32 2102212464, %v420
    %v430 = vor.u32 %v428, %v429
    %v431 = vshll.u32 2102212464, %v419
    %v432 = vshrl.u32 920167782, %v420
    %v433 = vor.u32 %v431, %v432
    %v434 = vshll.u32 920167782, %v419
    %v435 = vshrl.u32 1326507024, %v420
    %v436 = vor.u32 %v434, %v435
    %vm437 = vcmp.lt.s32.totalorder %v418, 1
    %vm438 = vcmp.lt.s32.totalorder %v418, 2
    %vm439 = vcmp.lt.s32.totalorder %v418, 3
    %vm440 = vcmp.lt.s32.totalorder %v418, 4
    %v441 = vsel %vm437, %v421, %v424
    %v442 = vsel %vm440, %v430, 2102212464
    %v443 = vsel %vm439, %v427, %v442
    %v444 = vsel %vm438, %v441, %v443
    %v445 = vsel %vm437, %v424, %v427
    %v446 = vsel %vm440, %v433, 920167782
    %v447 = vsel %vm439, %v430, %v446
    %v448 = vsel %vm438, %v445, %v447
    %v449 = vsel %vm437, %v427, %v430
    %v450 = vsel %vm440, %v436, 1326507024
    %v451 = vsel %vm439, %v433, %v450
    %v452 = vsel %vm438, %v449, %v451
    %v453 = vshll.u32 %v413, 8
    %v454 = vand.u32 %v453, 65535
    %v455 = vshrl.u32 %v453, 16
    %v456 = vand.u32 %v452, 65535
    %v457 = vshrl.u32 %v452, 16
    %v458 = vmul.u32 %v454, %v456
    %v459 = vmul.u32 %v454, %v457
    %v460 = vmul.u32 %v455, %v456
    %v461 = vmul.u32 %v455, %v457
    %v462 = vshll.u32 %v459, 16
    %v463 = vshrl.u32 %v459, 16
    %v464 = vshll.u32 %v460, 16
    %v465 = vshrl.u32 %v460, 16
    %vm466 = vc.u32 %v458, %v462
    %v467 = vsel %vm466, 1, 0
    %v468 = vadd.s32 %v458, %v462
    %v469 = vadd.s32 %v461, %v467
    %vm470 = vc.u32 %v468, %v464
    %v471 = vsel %vm470, 1, 0
    %v472 = vadd.s32 %v468, %v464
    %v473 = vadd.s32 %v469, %v471
    %v474 = vadd.s32 %v473, %v463
    %v475 = vadd.s32 %v474, %v465
    %v476 = vand.u32 %v453, 65535
    %v477 = vshrl.u32 %v453, 16
    %v478 = vand.u32 %v448, 65535
    %v479 = vshrl.u32 %v448, 16
    %v480 = vmul.u32 %v476, %v478
    %v481 = vmul.u32 %v476, %v479
    %v482 = vmul.u32 %v477, %v478
    %v483 = vmul.u32 %v477, %v479
    %v484 = vshll.u32 %v481, 16
    %v485 = vshrl.u32 %v481, 16
    %v486 = vshll.u32 %v482, 16
    %v487 = vshrl.u32 %v482, 16
    %vm488 = vc.u32 %v480, %v484
    %v489 = vsel %vm488, 1, 0
    %v490 = vadd.s32 %v480, %v484
    %v491 = vadd.s32 %v483, %v489
    %vm492 = vc.u32 %v490, %v486
    %v493 = vsel %vm492, 1, 0
    %v494 = vadd.s32 %v490, %v486
    %v495 = vadd.s32 %v491, %v493
    %v496 = vadd.s32 %v495, %v485
    %v497 = vadd.s32 %v496, %v487
    %v498 = vmul.u32 %v453, %v444
    %v499 = vadd.s32 %v475, %v494
    %vm500 = vc.u32 %v475, %v494
    %v501 = vadd.s32 %v497, 1
    %v502 = vsel %vm500, %v501, %v497
    %v503 = vadd.s32 %v498, %v502
    %v504 = vadd.s32 %v503, 536870912
    %v505 = vshrl.u32 %v504, 30
    %v506 = vshll.u32 %v505, 30
    %v507 = vsub.s32 %v503, %v506
    %vm508 = vcmp.lt.s32.totalorder %v507, 0
    %v509 = vsub.s32 0, %v507
    %v510 = vsel %vm508, %v509, %v507
    %v511 = vclz %v510
    %v512 = vsub.s32 %v511, 2
    %vm513 = vcmp.gt.s32.totalorder 0, %v512
    %v514 = vsel %vm513, 0, %v512
    %v515 = vsub.s32 32, %v514
    %v516 = vshll.u32 %v507, %v514
    %v517 = vshrl.u32 %v499, %v515
    %v518 = vor.u32 %v516, %v517
    %v519 = vsub.s32 4294967266, %v514
    %v520 = vadd.s32 %v519, 127
    %v521 = vshll.u32 %v520, 23
    %v522 = vor.u32 4788187, %v521
    %v523 = vand.u32 2147483647, %v522
    %v525 = vcvt.s32.f32 %v518
    %v526 = vmul.f32 %v525, %v523
    %v527 = vxor.u32 %v526, 2147483648
    %v528 = vsel %vm407, %v527, %v526
    %v529 = vsub.s32 4, %v505
    %v530 = vsel %vm407, %v529, %v505
    %v531 = vsel %vm406, %v91, %v528
    %v532 = vsel %vm406, 0, %v530
    %v533 = vmul.f32 %v531, %v531
    %v534 = vmul.f32 %v533, -0.001358992
    %v535 = vadd.f32 %v534, 0.041655596
    %v536 = vmul.f32 %v533, %v535
    %v537 = vadd.f32 %v536, -0.4999988
    %v538 = vmul.f32 %v533, %v537
    %v539 = vadd.f32 1.0, %v538
    %v540 = vmul.f32 %v531, %v531
    %v541 = vmul.f32 %v540, -0.00019511016
    %v542 = vadd.f32 %v541, 0.008332121
    %v543 = vmul.f32 %v540, %v542
    %v544 = vadd.f32 %v543, -0.16666654
    %v545 = vmul.f32 %v540, %v544
    %v546 = vadd.f32 %v545, 1.0
    %v547 = vmul.f32 %v546, %v531
    %vm548 = vweird.f32 %v91
    %v549 = vand.u32 %v532, 3
    %vm550 = vcmp.lt.s32.totalorder %v549, 2
    %vm551 = vcmp.eq.s32.totalorder %v549, 0
    %v552 = vxor.u32 %v547, 2147483648
    %v553 = vsel %vm551, %v539, %v552
    %vm554 = vcmp.eq.s32.totalorder %v549, 2
    %v555 = vxor.u32 %v539, 2147483648
    %v556 = vsel %vm554, %v555, %v547
    %v557 = vsel %vm550, %v553, %v556
    %v558 = vsel %vm548, nan, %v557
    %v559 = vand.u32 2147483647, %v92
    %vm560 = vcmp.le.f32.partialorder %v559, 0.7853982
    %vm561 = vcmp.lt.s32.totalorder %v92, 0
    %v562 = vand.u32 %v92, 2139095040
    %v563 = vshrl.u32 %v562, 23
    %v564 = vsub.s32 %v563, 127
    %v565 = vand.u32 2147483647, %v92
    %v566 = vand.u32 %v565, 8388607
    %v567 = vor.u32 %v566, 8388608
    %v568 = vsub.s32 0, %v567
    %v569 = vadd.s32 %v564, 1
    %vm570 = vcmp.gt.s32.totalorder %v569, 0
    %v571 = vsel %vm570, %v569, 0
    %v572 = vshrl.u32 %v571, 5
    %v573 = vand.u32 %v571, 31
    %v574 = vsub.s32 32, %v573
    %v575 = vshrl.u32 683565275, %v574
    %v576 = vshll.u32 683565275, %v573
    %v577 = vshrl.u32 2475754826, %v574
    %v578 = vor.u32 %v576, %v577
    %v579 = vshll.u32 2475754826, %v573
    %v580 = vshrl.u32 2131351028, %v574
    %v581 = vor.u32 %v579, %v580
    %v582 = vshll.u32 2131351028, %v573
    %v583 = vshrl.u32 2102212464, %v574
    %v584 = vor.u32 %v582, %v583
    %v585 = vshll.u32 2102212464, %v573
    %v586 = vshrl.u32 920167782, %v574
    %v587 = vor.u32 %v585, %v586
    %v588 = vshll.u32 920167782, %v573
    %v589 = vshrl.u32 1326507024, %v574
    %v590 = vor.u32 %v588, %v589
    %vm591 = vcmp.lt.s32.totalorder %v572, 1
    %vm592 = vcmp.lt.s32.totalorder %v572, 2
    %vm593 = vcmp.lt.s32.totalorder %v572, 3
    %vm594 = vcmp.lt.s32.totalorder %v572, 4
    %v595 = vsel %vm591, %v575, %v578
    %v596 = vsel %vm594, %v584, 2102212464
    %v597 = vsel %vm593, %v581, %v596
    %v598 = vsel %vm592, %v595, %v597
    %v599 = vsel %vm591, %v578, %v581
    %v600 = vsel %vm594, %v587, 920167782
    %v601 = vsel %vm593, %v584, %v600
    %v602 = vsel %vm592, %v599, %v601
    %v603 = vsel %vm591, %v581, %v584
    %v604 = vsel %vm594, %v590, 1326507024
    %v605 = vsel %vm593, %v587, %v604
    %v606 = vsel %vm592, %v603, %v605
    %v607 = vshll.u32 %v567, 8
    %v608 = vand.u32 %v607, 65535
    %v609 = vshrl.u32 %v607, 16
    %v610 = vand.u32 %v606, 65535
    %v611 = vshrl.u32 %v606, 16
    %v612 = vmul.u32 %v608, %v610
    %v613 = vmul.u32 %v608, %v611
    %v614 = vmul.u32 %v609, %v610
    %v615 = vmul.u32 %v609, %v611
    %v616 = vshll.u32 %v613, 16
    %v617 = vshrl.u32 %v613, 16
    %v618 = vshll.u32 %v614, 16
    %v619 = vshrl.u32 %v614, 16
    %vm620 = vc.u32 %v612, %v616
    %v621 = vsel %vm620, 1, 0
    %v622 = vadd.s32 %v612, %v616
    %v623 = vadd.s32 %v615, %v621
    %vm624 = vc.u32 %v622, %v618
    %v625 = vsel %vm624, 1, 0
    %v626 = vadd.s32 %v622, %v618
    %v627 = vadd.s32 %v623, %v625
    %v628 = vadd.s32 %v627, %v617
    %v629 = vadd.s32 %v628, %v619
    %v630 = vand.u32 %v607, 65535
    %v631 = vshrl.u32 %v607, 16
    %v632 = vand.u32 %v602, 65535
    %v633 = vshrl.u32 %v602, 16
    %v634 = vmul.u32 %v630, %v632
    %v635 = vmul.u32 %v630, %v633
    %v636 = vmul.u32 %v631, %v632
    %v637 = vmul.u32 %v631, %v633
    %v638 = vshll.u32 %v635, 16
    %v639 = vshrl.u32 %v635, 16
    %v640 = vshll.u32 %v636, 16
    %v641 = vshrl.u32 %v636, 16
    %vm642 = vc.u32 %v634, %v638
    %v643 = vsel %vm642, 1, 0
    %v644 = vadd.s32 %v634, %v638
    %v645 = vadd.s32 %v637, %v643
    %vm646 = vc.u32 %v644, %v640
    %v647 = vsel %vm646, 1, 0
    %v648 = vadd.s32 %v644, %v640
    %v649 = vadd.s32 %v645, %v647
    %v650 = vadd.s32 %v649, %v639
    %v651 = vadd.s32 %v650, %v641
    %v652 = vmul.u32 %v607, %v598
    %v653 = vadd.s32 %v629, %v648
    %vm654 = vc.u32 %v629, %v648
    %v655 = vadd.s32 %v651, 1
    %v656 = vsel %vm654, %v655, %v651
    %v657 = vadd.s32 %v652, %v656
    %v658 = vadd.s32 %v657, 536870912
    %v659 = vshrl.u32 %v658, 30
    %v660 = vshll.u32 %v659, 30
    %v661 = vsub.s32 %v657, %v660
    %vm662 = vcmp.lt.s32.totalorder %v661, 0
    %v663 = vsub.s32 0, %v661
    %v664 = vsel %vm662, %v663, %v661
    %v665 = vclz %v664
    %v666 = vsub.s32 %v665, 2
    %vm667 = vcmp.gt.s32.totalorder 0, %v666
    %v668 = vsel %vm667, 0, %v666
    %v669 = vsub.s32 32, %v668
    %v670 = vshll.u32 %v661, %v668
    %v671 = vshrl.u32 %v653, %v669
    %v672 = vor.u32 %v670, %v671
    %v673 = vsub.s32 4294967266, %v668
    %v674 = vadd.s32 %v673, 127
    %v675 = vshll.u32 %v674, 23
    %v676 = vor.u32 4788187, %v675
    %v677 = vand.u32 2147483647, %v676
    %v679 = vcvt.s32.f32 %v672
    %v680 = vmul.f32 %v679, %v677
    %v681 = vxor.u32 %v680, 2147483648
    %v682 = vsel %vm561, %v681, %v680
    %v683 = vsub.s32 4, %v659
    %v684 = vsel %vm561, %v683, %v659
    %v685 = vsel %vm560, %v92, %v682
    %v686 = vsel %vm560, 0, %v684
    %v687 = vmul.f32 %v685, %v685
    %v688 = vmul.f32 %v687, -0.001358992
    %v689 = vadd.f32 %v688, 0.041655596
    %v690 = vmul.f32 %v687, %v689
    %v691 = vadd.f32 %v690, -0.4999988
    %v692 = vmul.f32 %v687, %v691
    %v693 = vadd.f32 1.0, %v692
    %v694 = vmul.f32 %v685, %v685
    %v695 = vmul.f32 %v694, -0.00019511016
    %v696 = vadd.f32 %v695, 0.008332121
    %v697 = vmul.f32 %v694, %v696
    %v698 = vadd.f32 %v697, -0.16666654
    %v699 = vmul.f32 %v694, %v698
    %v700 = vadd.f32 %v699, 1.0
    %v701 = vmul.f32 %v700, %v685
    %vm702 = vweird.f32 %v92
    %v703 = vand.u32 %v686, 3
    %vm704 = vcmp.lt.s32.totalorder %v703, 2
    %vm705 = vcmp.eq.s32.totalorder %v703, 0
    %v706 = vxor.u32 %v701, 2147483648
    %v707 = vsel %vm705, %v693, %v706
    %vm708 = vcmp.eq.s32.totalorder %v703, 2
    %v709 = vxor.u32 %v693, 2147483648
    %v710 = vsel %vm708, %v709, %v701
    %v711 = vsel %vm704, %v707, %v710
    %v712 = vsel %vm702, nan, %v711
    %v713 = vand.u32 2147483647, %v93
    %vm714 = vcmp.le.f32.partialorder %v713, 0.7853982
    %vm715 = vcmp.lt.s32.totalorder %v93, 0
    %v716 = vand.u32 %v93, 2139095040
    %v717 = vshrl.u32 %v716, 23
    %v718 = vsub.s32 %v717, 127
    %v719 = vand.u32 2147483647, %v93
    %v720 = vand.u32 %v719, 8388607
    %v721 = vor.u32 %v720, 8388608
    %v722 = vsub.s32 0, %v721
    %v723 = vadd.s32 %v718, 1
    %vm724 = vcmp.gt.s32.totalorder %v723, 0
    %v725 = vsel %vm724, %v723, 0
    %v726 = vshrl.u32 %v725, 5
    %v727 = vand.u32 %v725, 31
    %v728 = vsub.s32 32, %v727
    %v729 = vshrl.u32 683565275, %v728
    %v730 = vshll.u32 683565275, %v727
    %v731 = vshrl.u32 2475754826, %v728
    %v732 = vor.u32 %v730, %v731
    %v733 = vshll.u32 2475754826, %v727
    %v734 = vshrl.u32 2131351028, %v728
    %v735 = vor.u32 %v733, %v734
    %v736 = vshll.u32 2131351028, %v727
    %v737 = vshrl.u32 2102212464, %v728
    %v738 = vor.u32 %v736, %v737
    %v739 = vshll.u32 2102212464, %v727
    %v740 = vshrl.u32 920167782, %v728
    %v741 = vor.u32 %v739, %v740
    %v742 = vshll.u32 920167782, %v727
    %v743 = vshrl.u32 1326507024, %v728
    %v744 = vor.u32 %v742, %v743
    %vm745 = vcmp.lt.s32.totalorder %v726, 1
    %vm746 = vcmp.lt.s32.totalorder %v726, 2
    %vm747 = vcmp.lt.s32.totalorder %v726, 3
    %vm748 = vcmp.lt.s32.totalorder %v726, 4
    %v749 = vsel %vm745, %v729, %v732
    %v750 = vsel %vm748, %v738, 2102212464
    %v751 = vsel %vm747, %v735, %v750
    %v752 = vsel %vm746, %v749, %v751
    %v753 = vsel %vm745, %v732, %v735
    %v754 = vsel %vm748, %v741, 920167782
    %v755 = vsel %vm747, %v738, %v754
    %v756 = vsel %vm746, %v753, %v755
    %v757 = vsel %vm745, %v735, %v738
    %v758 = vsel %vm748, %v744, 1326507024
    %v759 = vsel %vm747, %v741, %v758
    %v760 = vsel %vm746, %v757, %v759
    %v761 = vshll.u32 %v721, 8
    %v762 = vand.u32 %v761, 65535
    %v763 = vshrl.u32 %v761, 16
    %v764 = vand.u32 %v760, 65535
    %v765 = vshrl.u32 %v760, 16
    %v766 = vmul.u32 %v762, %v764
    %v767 = vmul.u32 %v762, %v765
    %v768 = vmul.u32 %v763, %v764
    %v769 = vmul.u32 %v763, %v765
    %v770 = vshll.u32 %v767, 16
    %v771 = vshrl.u32 %v767, 16
    %v772 = vshll.u32 %v768, 16
    %v773 = vshrl.u32 %v768, 16
    %vm774 = vc.u32 %v766, %v770
    %v775 = vsel %vm774, 1, 0
    %v776 = vadd.s32 %v766, %v770
    %v777 = vadd.s32 %v769, %v775
    %vm778 = vc.u32 %v776, %v772
    %v779 = vsel %vm778, 1, 0
    %v780 = vadd.s32 %v776, %v772
    %v781 = vadd.s32 %v777, %v779
    %v782 = vadd.s32 %v781, %v771
    %v783 = vadd.s32 %v782, %v773
    %v784 = vand.u32 %v761, 65535
    %v785 = vshrl.u32 %v761, 16
    %v786 = vand.u32 %v756, 65535
    %v787 = vshrl.u32 %v756, 16
    %v788 = vmul.u32 %v784, %v786
    %v789 = vmul.u32 %v784, %v787
    %v790 = vmul.u32 %v785, %v786
    %v791 = vmul.u32 %v785, %v787
    %v792 = vshll.u32 %v789, 16
    %v793 = vshrl.u32 %v789, 16
    %v794 = vshll.u32 %v790, 16
    %v795 = vshrl.u32 %v790, 16
    %vm796 = vc.u32 %v788, %v792
    %v797 = vsel %vm796, 1, 0
    %v798 = vadd.s32 %v788, %v792
    %v799 = vadd.s32 %v791, %v797
    %vm800 = vc.u32 %v798, %v794
    %v801 = vsel %vm800, 1, 0
    %v802 = vadd.s32 %v798, %v794
    %v803 = vadd.s32 %v799, %v801
    %v804 = vadd.s32 %v803, %v793
    %v805 = vadd.s32 %v804, %v795
    %v806 = vmul.u32 %v761, %v752
    %v807 = vadd.s32 %v783, %v802
    %vm808 = vc.u32 %v783, %v802
    %v809 = vadd.s32 %v805, 1
    %v810 = vsel %vm808, %v809, %v805
    %v811 = vadd.s32 %v806, %v810
    %v812 = vadd.s32 %v811, 536870912
    %v813 = vshrl.u32 %v812, 30
    %v814 = vshll.u32 %v813, 30
    %v815 = vsub.s32 %v811, %v814
    %vm816 = vcmp.lt.s32.totalorder %v815, 0
    %v817 = vsub.s32 0, %v815
    %v818 = vsel %vm816, %v817, %v815
    %v819 = vclz %v818
    %v820 = vsub.s32 %v819, 2
    %vm821 = vcmp.gt.s32.totalorder 0, %v820
    %v822 = vsel %vm821, 0, %v820
    %v823 = vsub.s32 32, %v822
    %v824 = vshll.u32 %v815, %v822
    %v825 = vshrl.u32 %v807, %v823
    %v826 = vor.u32 %v824, %v825
    %v827 = vsub.s32 4294967266, %v822
    %v828 = vadd.s32 %v827, 127
    %v829 = vshll.u32 %v828, 23
    %v830 = vor.u32 4788187, %v829
    %v831 = vand.u32 2147483647, %v830
    %v833 = vcvt.s32.f32 %v826
    %v834 = vmul.f32 %v833, %v831
    %v835 = vxor.u32 %v834, 2147483648
    %v836 = vsel %vm715, %v835, %v834
    %v837 = vsub.s32 4, %v813
    %v838 = vsel %vm715, %v837, %v813
    %v839 = vsel %vm714, %v93, %v836
    %v840 = vsel %vm714, 0, %v838
    %v841 = vmul.f32 %v839, %v839
    %v842 = vmul.f32 %v841, -0.001358992
    %v843 = vadd.f32 %v842, 0.041655596
    %v844 = vmul.f32 %v841, %v843
    %v845 = vadd.f32 %v844, -0.4999988
    %v846 = vmul.f32 %v841, %v845
    %v847 = vadd.f32 1.0, %v846
    %v848 = vmul.f32 %v839, %v839
    %v849 = vmul.f32 %v848, -0.00019511016
    %v850 = vadd.f32 %v849, 0.008332121
    %v851 = vmul.f32 %v848, %v850
    %v852 = vadd.f32 %v851, -0.16666654
    %v853 = vmul.f32 %v848, %v852
    %v854 = vadd.f32 %v853, 1.0
    %v855 = vmul.f32 %v854, %v839
    %vm856 = vweird.f32 %v93
    %v857 = vand.u32 %v840, 3
    %vm858 = vcmp.lt.s32.totalorder %v857, 2
    %vm859 = vcmp.eq.s32.totalorder %v857, 0
    %v860 = vxor.u32 %v855, 2147483648
    %v861 = vsel %vm859, %v847, %v860
    %vm862 = vcmp.eq.s32.totalorder %v857, 2
    %v863 = vxor.u32 %v847, 2147483648
    %v864 = vsel %vm862, %v863, %v855
    %v865 = vsel %vm858, %v861, %v864
    %v866 = vsel %vm856, nan, %v865
    %v867 = vand.u32 2147483647, %v94
    %vm868 = vcmp.le.f32.partialorder %v867, 0.7853982
    %vm869 = vcmp.lt.s32.totalorder %v94, 0
    %v870 = vand.u32 %v94, 2139095040
    %v871 = vshrl.u32 %v870, 23
    %v872 = vsub.s32 %v871, 127
    %v873 = vand.u32 2147483647, %v94
    %v874 = vand.u32 %v873, 8388607
    %v875 = vor.u32 %v874, 8388608
    %v876 = vsub.s32 0, %v875
    %v877 = vadd.s32 %v872, 1
    %vm878 = vcmp.gt.s32.totalorder %v877, 0
    %v879 = vsel %vm878, %v877, 0
    %v880 = vshrl.u32 %v879, 5
    %v881 = vand.u32 %v879, 31
    %v882 = vsub.s32 32, %v881
    %v883 = vshrl.u32 683565275, %v882
    %v884 = vshll.u32 683565275, %v881
    %v885 = vshrl.u32 2475754826, %v882
    %v886 = vor.u32 %v884, %v885
    %v887 = vshll.u32 2475754826, %v881
    %v888 = vshrl.u32 2131351028, %v882
    %v889 = vor.u32 %v887, %v888
    %v890 = vshll.u32 2131351028, %v881
    %v891 = vshrl.u32 2102212464, %v882
    %v892 = vor.u32 %v890, %v891
    %v893 = vshll.u32 2102212464, %v881
    %v894 = vshrl.u32 920167782, %v882
    %v895 = vor.u32 %v893, %v894
    %v896 = vshll.u32 920167782, %v881
    %v897 = vshrl.u32 1326507024, %v882
    %v898 = vor.u32 %v896, %v897
    %vm899 = vcmp.lt.s32.totalorder %v880, 1
    %vm900 = vcmp.lt.s32.totalorder %v880, 2
    %vm901 = vcmp.lt.s32.totalorder %v880, 3
    %vm902 = vcmp.lt.s32.totalorder %v880, 4
    %v903 = vsel %vm899, %v883, %v886
    %v904 = vsel %vm902, %v892, 2102212464
    %v905 = vsel %vm901, %v889, %v904
    %v906 = vsel %vm900, %v903, %v905
    %v907 = vsel %vm899, %v886, %v889
    %v908 = vsel %vm902, %v895, 920167782
    %v909 = vsel %vm901, %v892, %v908
    %v910 = vsel %vm900, %v907, %v909
    %v911 = vsel %vm899, %v889, %v892
    %v912 = vsel %vm902, %v898, 1326507024
    %v913 = vsel %vm901, %v895, %v912
    %v914 = vsel %vm900, %v911, %v913
    %v915 = vshll.u32 %v875, 8
    %v916 = vand.u32 %v915, 65535
    %v917 = vshrl.u32 %v915, 16
    %v918 = vand.u32 %v914, 65535
    %v919 = vshrl.u32 %v914, 16
    %v920 = vmul.u32 %v916, %v918
    %v921 = vmul.u32 %v916, %v919
    %v922 = vmul.u32 %v917, %v918
    %v923 = vmul.u32 %v917, %v919
    %v924 = vshll.u32 %v921, 16
    %v925 = vshrl.u32 %v921, 16
    %v926 = vshll.u32 %v922, 16
    %v927 = vshrl.u32 %v922, 16
    %vm928 = vc.u32 %v920, %v924
    %v929 = vsel %vm928, 1, 0
    %v930 = vadd.s32 %v920, %v924
    %v931 = vadd.s32 %v923, %v929
    %vm932 = vc.u32 %v930, %v926
    %v933 = vsel %vm932, 1, 0
    %v934 = vadd.s32 %v930, %v926
    %v935 = vadd.s32 %v931, %v933
    %v936 = vadd.s32 %v935, %v925
    %v937 = vadd.s32 %v936, %v927
    %v938 = vand.u32 %v915, 65535
    %v939 = vshrl.u32 %v915, 16
    %v940 = vand.u32 %v910, 65535
    %v941 = vshrl.u32 %v910, 16
    %v942 = vmul.u32 %v938, %v940
    %v943 = vmul.u32 %v938, %v941
    %v944 = vmul.u32 %v939, %v940
    %v945 = vmul.u32 %v939, %v941
    %v946 = vshll.u32 %v943, 16
    %v947 = vshrl.u32 %v943, 16
    %v948 = vshll.u32 %v944, 16
    %v949 = vshrl.u32 %v944, 16
    %vm950 = vc.u32 %v942, %v946
    %v951 = vsel %vm950, 1, 0
    %v952 = vadd.s32 %v942, %v946
    %v953 = vadd.s32 %v945, %v951
    %vm954 = vc.u32 %v952, %v948
    %v955 = vsel %vm954, 1, 0
    %v956 = vadd.s32 %v952, %v948
    %v957 = vadd.s32 %v953, %v955
    %v958 = vadd.s32 %v957, %v947
    %v959 = vadd.s32 %v958, %v949
    %v960 = vmul.u32 %v915, %v906
    %v961 = vadd.s32 %v937, %v956
    %vm962 = vc.u32 %v937, %v956
    %v963 = vadd.s32 %v959, 1
    %v964 = vsel %vm962, %v963, %v959
    %v965 = vadd.s32 %v960, %v964
    %v966 = vadd.s32 %v965, 536870912
    %v967 = vshrl.u32 %v966, 30
    %v968 = vshll.u32 %v967, 30
    %v969 = vsub.s32 %v965, %v968
    %vm970 = vcmp.lt.s32.totalorder %v969, 0
    %v971 = vsub.s32 0, %v969
    %v972 = vsel %vm970, %v971, %v969
    %v973 = vclz %v972
    %v974 = vsub.s32 %v973, 2
    %vm975 = vcmp.gt.s32.totalorder 0, %v974
    %v976 = vsel %vm975, 0, %v974
    %v977 = vsub.s32 32, %v976
    %v978 = vshll.u32 %v969, %v976
    %v979 = vshrl.u32 %v961, %v977
    %v980 = vor.u32 %v978, %v979
    %v981 = vsub.s32 4294967266, %v976
    %v982 = vadd.s32 %v981, 127
    %v983 = vshll.u32 %v982, 23
    %v984 = vor.u32 4788187, %v983
    %v985 = vand.u32 2147483647, %v984
    %v987 = vcvt.s32.f32 %v980
    %v988 = vmul.f32 %v987, %v985
    %v989 = vxor.u32 %v988, 2147483648
    %v990 = vsel %vm869, %v989, %v988
    %v991 = vsub.s32 4, %v967
    %v992 = vsel %vm869, %v991, %v967
    %v993 = vsel %vm868, %v94, %v990
    %v994 = vsel %vm868, 0, %v992
    %v995 = vmul.f32 %v993, %v993
    %v996 = vmul.f32 %v995, -0.001358992
    %v997 = vadd.f32 %v996, 0.041655596
    %v998 = vmul.f32 %v995, %v997
    %v999 = vadd.f32 %v998, -0.4999988
    %v1000 = vmul.f32 %v995, %v999
    %v1001 = vadd.f32 1.0, %v1000
    %v1002 = vmul.f32 %v993, %v993
    %v1003 = vmul.f32 %v1002, -0.00019511016
    %v1004 = vadd.f32 %v1003, 0.008332121
    %v1005 = vmul.f32 %v1002, %v1004
    %v1006 = vadd.f32 %v1005, -0.16666654
    %v1007 = vmul.f32 %v1002, %v1006
    %v1008 = vadd.f32 %v1007, 1.0
    %v1009 = vmul.f32 %v1008, %v993
    %vm1010 = vweird.f32 %v94
    %v1011 = vand.u32 %v994, 3
    %vm1012 = vcmp.lt.s32.totalorder %v1011, 2
    %vm1013 = vcmp.eq.s32.totalorder %v1011, 0
    %v1014 = vxor.u32 %v1009, 2147483648
    %v1015 = vsel %vm1013, %v1001, %v1014
    %vm1016 = vcmp.eq.s32.totalorder %v1011, 2
    %v1017 = vxor.u32 %v1001, 2147483648
    %v1018 = vsel %vm1016, %v1017, %v1009
    %v1019 = vsel %vm1012, %v1015, %v1018
    %v1020 = vsel %vm1010, nan, %v1019
    %v1021 = vand.u32 2147483647, %v95
    %vm1022 = vcmp.le.f32.partialorder %v1021, 0.7853982
    %vm1023 = vcmp.lt.s32.totalorder %v95, 0
    %v1024 = vand.u32 %v95, 2139095040
    %v1025 = vshrl.u32 %v1024, 23
    %v1026 = vsub.s32 %v1025, 127
    %v1027 = vand.u32 2147483647, %v95
    %v1028 = vand.u32 %v1027, 8388607
    %v1029 = vor.u32 %v1028, 8388608
    %v1030 = vsub.s32 0, %v1029
    %v1031 = vadd.s32 %v1026, 1
    %vm1032 = vcmp.gt.s32.totalorder %v1031, 0
    %v1033 = vsel %vm1032, %v1031, 0
    %v1034 = vshrl.u32 %v1033, 5
    %v1035 = vand.u32 %v1033, 31
    %v1036 = vsub.s32 32, %v1035
    %v1037 = vshrl.u32 683565275, %v1036
    %v1038 = vshll.u32 683565275, %v1035
    %v1039 = vshrl.u32 2475754826, %v1036
    %v1040 = vor.u32 %v1038, %v1039
    %v1041 = vshll.u32 2475754826, %v1035
    %v1042 = vshrl.u32 2131351028, %v1036
    %v1043 = vor.u32 %v1041, %v1042
    %v1044 = vshll.u32 2131351028, %v1035
    %v1045 = vshrl.u32 2102212464, %v1036
    %v1046 = vor.u32 %v1044, %v1045
    %v1047 = vshll.u32 2102212464, %v1035
    %v1048 = vshrl.u32 920167782, %v1036
    %v1049 = vor.u32 %v1047, %v1048
    %v1050 = vshll.u32 920167782, %v1035
    %v1051 = vshrl.u32 1326507024, %v1036
    %v1052 = vor.u32 %v1050, %v1051
    %vm1053 = vcmp.lt.s32.totalorder %v1034, 1
    %vm1054 = vcmp.lt.s32.totalorder %v1034, 2
    %vm1055 = vcmp.lt.s32.totalorder %v1034, 3
    %vm1056 = vcmp.lt.s32.totalorder %v1034, 4
    %v1057 = vsel %vm1053, %v1037, %v1040
    %v1058 = vsel %vm1056, %v1046, 2102212464
    %v1059 = vsel %vm1055, %v1043, %v1058
    %v1060 = vsel %vm1054, %v1057, %v1059
    %v1061 = vsel %vm1053, %v1040, %v1043
    %v1062 = vsel %vm1056, %v1049, 920167782
    %v1063 = vsel %vm1055, %v1046, %v1062
    %v1064 = vsel %vm1054, %v1061, %v1063
    %v1065 = vsel %vm1053, %v1043, %v1046
    %v1066 = vsel %vm1056, %v1052, 1326507024
    %v1067 = vsel %vm1055, %v1049, %v1066
    %v1068 = vsel %vm1054, %v1065, %v1067
    %v1069 = vshll.u32 %v1029, 8
    %v1070 = vand.u32 %v1069, 65535
    %v1071 = vshrl.u32 %v1069, 16
    %v1072 = vand.u32 %v1068, 65535
    %v1073 = vshrl.u32 %v1068, 16
    %v1074 = vmul.u32 %v1070, %v1072
    %v1075 = vmul.u32 %v1070, %v1073
    %v1076 = vmul.u32 %v1071, %v1072
    %v1077 = vmul.u32 %v1071, %v1073
    %v1078 = vshll.u32 %v1075, 16
    %v1079 = vshrl.u32 %v1075, 16
    %v1080 = vshll.u32 %v1076, 16
    %v1081 = vshrl.u32 %v1076, 16
    %vm1082 = vc.u32 %v1074, %v1078
    %v1083 = vsel %vm1082, 1, 0
    %v1084 = vadd.s32 %v1074, %v1078
    %v1085 = vadd.s32 %v1077, %v1083
    %vm1086 = vc.u32 %v1084, %v1080
    %v1087 = vsel %vm1086, 1, 0
    %v1088 = vadd.s32 %v1084, %v1080
    %v1089 = vadd.s32 %v1085, %v1087
    %v1090 = vadd.s32 %v1089, %v1079
    %v1091 = vadd.s32 %v1090, %v1081
    %v1092 = vand.u32 %v1069, 65535
    %v1093 = vshrl.u32 %v1069, 16
    %v1094 = vand.u32 %v1064, 65535
    %v1095 = vshrl.u32 %v1064, 16
    %v1096 = vmul.u32 %v1092, %v1094
    %v1097 = vmul.u32 %v1092, %v1095
    %v1098 = vmul.u32 %v1093, %v1094
    %v1099 = vmul.u32 %v1093, %v1095
    %v1100 = vshll.u32 %v1097, 16
    %v1101 = vshrl.u32 %v1097, 16
    %v1102 = vshll.u32 %v1098, 16
    %v1103 = vshrl.u32 %v1098, 16
    %vm1104 = vc.u32 %v1096, %v1100
    %v1105 = vsel %vm1104, 1, 0
    %v1106 = vadd.s32 %v1096, %v1100
    %v1107 = vadd.s32 %v1099, %v1105
    %vm1108 = vc.u32 %v1106, %v1102
    %v1109 = vsel %vm1108, 1, 0
    %v1110 = vadd.s32 %v1106, %v1102
    %v1111 = vadd.s32 %v1107, %v1109
    %v1112 = vadd.s32 %v1111, %v1101
    %v1113 = vadd.s32 %v1112, %v1103
    %v1114 = vmul.u32 %v1069, %v1060
    %v1115 = vadd.s32 %v1091, %v1110
    %vm1116 = vc.u32 %v1091, %v1110
    %v1117 = vadd.s32 %v1113, 1
    %v1118 = vsel %vm1116, %v1117, %v1113
    %v1119 = vadd.s32 %v1114, %v1118
    %v1120 = vadd.s32 %v1119, 536870912
    %v1121 = vshrl.u32 %v1120, 30
    %v1122 = vshll.u32 %v1121, 30
    %v1123 = vsub.s32 %v1119, %v1122
    %vm1124 = vcmp.lt.s32.totalorder %v1123, 0
    %v1125 = vsub.s32 0, %v1123
    %v1126 = vsel %vm1124, %v1125, %v1123
    %v1127 = vclz %v1126
    %v1128 = vsub.s32 %v1127, 2
    %vm1129 = vcmp.gt.s32.totalorder 0, %v1128
    %v1130 = vsel %vm1129, 0, %v1128
    %v1131 = vsub.s32 32, %v1130
    %v1132 = vshll.u32 %v1123, %v1130
    %v1133 = vshrl.u32 %v1115, %v1131
    %v1134 = vor.u32 %v1132, %v1133
    %v1135 = vsub.s32 4294967266, %v1130
    %v1136 = vadd.s32 %v1135, 127
    %v1137 = vshll.u32 %v1136, 23
    %v1138 = vor.u32 4788187, %v1137
    %v1139 = vand.u32 2147483647, %v1138
    %v1141 = vcvt.s32.f32 %v1134
    %v1142 = vmul.f32 %v1141, %v1139
    %v1143 = vxor.u32 %v1142, 2147483648
    %v1144 = vsel %vm1023, %v1143, %v1142
    %v1145 = vsub.s32 4, %v1121
    %v1146 = vsel %vm1023, %v1145, %v1121
    %v1147 = vsel %vm1022, %v95, %v1144
    %v1148 = vsel %vm1022, 0, %v1146
    %v1149 = vmul.f32 %v1147, %v1147
    %v1150 = vmul.f32 %v1149, -0.001358992
    %v1151 = vadd.f32 %v1150, 0.041655596
    %v1152 = vmul.f32 %v1149, %v1151
    %v1153 = vadd.f32 %v1152, -0.4999988
    %v1154 = vmul.f32 %v1149, %v1153
    %v1155 = vadd.f32 1.0, %v1154
    %v1156 = vmul.f32 %v1147, %v1147
    %v1157 = vmul.f32 %v1156, -0.00019511016
    %v1158 = vadd.f32 %v1157, 0.008332121
    %v1159 = vmul.f32 %v1156, %v1158
    %v1160 = vadd.f32 %v1159, -0.16666654
    %v1161 = vmul.f32 %v1156, %v1160
    %v1162 = vadd.f32 %v1161, 1.0
    %v1163 = vmul.f32 %v1162, %v1147
    %vm1164 = vweird.f32 %v95
    %v1165 = vand.u32 %v1148, 3
    %vm1166 = vcmp.lt.s32.totalorder %v1165, 2
    %vm1167 = vcmp.eq.s32.totalorder %v1165, 0
    %v1168 = vxor.u32 %v1163, 2147483648
    %v1169 = vsel %vm1167, %v1155, %v1168
    %vm1170 = vcmp.eq.s32.totalorder %v1165, 2
    %v1171 = vxor.u32 %v1155, 2147483648
    %v1172 = vsel %vm1170, %v1171, %v1163
    %v1173 = vsel %vm1166, %v1169, %v1172
    %v1174 = vsel %vm1164, nan, %v1173
    %v1175 = vand.u32 2147483647, %v96
    %vm1176 = vcmp.le.f32.partialorder %v1175, 0.7853982
    %vm1177 = vcmp.lt.s32.totalorder %v96, 0
    %v1178 = vand.u32 %v96, 2139095040
    %v1179 = vshrl.u32 %v1178, 23
    %v1180 = vsub.s32 %v1179, 127
    %v1181 = vand.u32 2147483647, %v96
    %v1182 = vand.u32 %v1181, 8388607
    %v1183 = vor.u32 %v1182, 8388608
    %v1184 = vsub.s32 0, %v1183
    %v1185 = vadd.s32 %v1180, 1
    %vm1186 = vcmp.gt.s32.totalorder %v1185, 0
    %v1187 = vsel %vm1186, %v1185, 0
    %v1188 = vshrl.u32 %v1187, 5
    %v1189 = vand.u32 %v1187, 31
    %v1190 = vsub.s32 32, %v1189
    %v1191 = vshrl.u32 683565275, %v1190
    %v1192 = vshll.u32 683565275, %v1189
    %v1193 = vshrl.u32 2475754826, %v1190
    %v1194 = vor.u32 %v1192, %v1193
    %v1195 = vshll.u32 2475754826, %v1189
    %v1196 = vshrl.u32 2131351028, %v1190
    %v1197 = vor.u32 %v1195, %v1196
    %v1198 = vshll.u32 2131351028, %v1189
    %v1199 = vshrl.u32 2102212464, %v1190
    %v1200 = vor.u32 %v1198, %v1199
    %v1201 = vshll.u32 2102212464, %v1189
    %v1202 = vshrl.u32 920167782, %v1190
    %v1203 = vor.u32 %v1201, %v1202
    %v1204 = vshll.u32 920167782, %v1189
    %v1205 = vshrl.u32 1326507024, %v1190
    %v1206 = vor.u32 %v1204, %v1205
    %vm1207 = vcmp.lt.s32.totalorder %v1188, 1
    %vm1208 = vcmp.lt.s32.totalorder %v1188, 2
    %vm1209 = vcmp.lt.s32.totalorder %v1188, 3
    %vm1210 = vcmp.lt.s32.totalorder %v1188, 4
    %v1211 = vsel %vm1207, %v1191, %v1194
    %v1212 = vsel %vm1210, %v1200, 2102212464
    %v1213 = vsel %vm1209, %v1197, %v1212
    %v1214 = vsel %vm1208, %v1211, %v1213
    %v1215 = vsel %vm1207, %v1194, %v1197
    %v1216 = vsel %vm1210, %v1203, 920167782
    %v1217 = vsel %vm1209, %v1200, %v1216
    %v1218 = vsel %vm1208, %v1215, %v1217
    %v1219 = vsel %vm1207, %v1197, %v1200
    %v1220 = vsel %vm1210, %v1206, 1326507024
    %v1221 = vsel %vm1209, %v1203, %v1220
    %v1222 = vsel %vm1208, %v1219, %v1221
    %v1223 = vshll.u32 %v1183, 8
    %v1224 = vand.u32 %v1223, 65535
    %v1225 = vshrl.u32 %v1223, 16
    %v1226 = vand.u32 %v1222, 65535
    %v1227 = vshrl.u32 %v1222, 16
    %v1228 = vmul.u32 %v1224, %v1226
    %v1229 = vmul.u32 %v1224, %v1227
    %v1230 = vmul.u32 %v1225, %v1226
    %v1231 = vmul.u32 %v1225, %v1227
    %v1232 = vshll.u32 %v1229, 16
    %v1233 = vshrl.u32 %v1229, 16
    %v1234 = vshll.u32 %v1230, 16
    %v1235 = vshrl.u32 %v1230, 16
    %vm1236 = vc.u32 %v1228, %v1232
    %v1237 = vsel %vm1236, 1, 0
    %v1238 = vadd.s32 %v1228, %v1232
    %v1239 = vadd.s32 %v1231, %v1237
    %vm1240 = vc.u32 %v1238, %v1234
    %v1241 = vsel %vm1240, 1, 0
    %v1242 = vadd.s32 %v1238, %v1234
    %v1243 = vadd.s32 %v1239, %v1241
    %v1244 = vadd.s32 %v1243, %v1233
    %v1245 = vadd.s32 %v1244, %v1235
    %v1246 = vand.u32 %v1223, 65535
    %v1247 = vshrl.u32 %v1223, 16
    %v1248 = vand.u32 %v1218, 65535
    %v1249 = vshrl.u32 %v1218, 16
    %v1250 = vmul.u32 %v1246, %v1248
    %v1251 = vmul.u32 %v1246, %v1249
    %v1252 = vmul.u32 %v1247, %v1248
    %v1253 = vmul.u32 %v1247, %v1249
    %v1254 = vshll.u32 %v1251, 16
    %v1255 = vshrl.u32 %v1251, 16
    %v1256 = vshll.u32 %v1252, 16
    %v1257 = vshrl.u32 %v1252, 16
    %vm1258 = vc.u32 %v1250, %v1254
    %v1259 = vsel %vm1258, 1, 0
    %v1260 = vadd.s32 %v1250, %v1254
    %v1261 = vadd.s32 %v1253, %v1259
    %vm1262 = vc.u32 %v1260, %v1256
    %v1263 = vsel %vm1262, 1, 0
    %v1264 = vadd.s32 %v1260, %v1256
    %v1265 = vadd.s32 %v1261, %v1263
    %v1266 = vadd.s32 %v1265, %v1255
    %v1267 = vadd.s32 %v1266, %v1257
    %v1268 = vmul.u32 %v1223, %v1214
    %v1269 = vadd.s32 %v1245, %v1264
    %vm1270 = vc.u32 %v1245, %v1264
    %v1271 = vadd.s32 %v1267, 1
    %v1272 = vsel %vm1270, %v1271, %v1267
    %v1273 = vadd.s32 %v1268, %v1272
    %v1274 = vadd.s32 %v1273, 536870912
    %v1275 = vshrl.u32 %v1274, 30
    %v1276 = vshll.u32 %v1275, 30
    %v1277 = vsub.s32 %v1273, %v1276
    %vm1278 = vcmp.lt.s32.totalorder %v1277, 0
    %v1279 = vsub.s32 0, %v1277
    %v1280 = vsel %vm1278, %v1279, %v1277
    %v1281 = vclz %v1280
    %v1282 = vsub.s32 %v1281, 2
    %vm1283 = vcmp.gt.s32.totalorder 0, %v1282
    %v1284 = vsel %vm1283, 0, %v1282
    %v1285 = vsub.s32 32, %v1284
    %v1286 = vshll.u32 %v1277, %v1284
    %v1287 = vshrl.u32 %v1269, %v1285
    %v1288 = vor.u32 %v1286, %v1287
    %v1289 = vsub.s32 4294967266, %v1284
    %v1290 = vadd.s32 %v1289, 127
    %v1291 = vshll.u32 %v1290, 23
    %v1292 = vor.u32 4788187, %v1291
    %v1293 = vand.u32 2147483647, %v1292
    %v1295 = vcvt.s32.f32 %v1288
    %v1296 = vmul.f32 %v1295, %v1293
    %v1297 = vxor.u32 %v1296, 2147483648
    %v1298 = vsel %vm1177, %v1297, %v1296
    %v1299 = vsub.s32 4, %v1275
    %v1300 = vsel %vm1177, %v1299, %v1275
    %v1301 = vsel %vm1176, %v96, %v1298
    %v1302 = vsel %vm1176, 0, %v1300
    %v1303 = vmul.f32 %v1301, %v1301
    %v1304 = vmul.f32 %v1303, -0.001358992
    %v1305 = vadd.f32 %v1304, 0.041655596
    %v1306 = vmul.f32 %v1303, %v1305
    %v1307 = vadd.f32 %v1306, -0.4999988
    %v1308 = vmul.f32 %v1303, %v1307
    %v1309 = vadd.f32 1.0, %v1308
    %v1310 = vmul.f32 %v1301, %v1301
    %v1311 = vmul.f32 %v1310, -0.00019511016
    %v1312 = vadd.f32 %v1311, 0.008332121
    %v1313 = vmul.f32 %v1310, %v1312
    %v1314 = vadd.f32 %v1313, -0.16666654
    %v1315 = vmul.f32 %v1310, %v1314
    %v1316 = vadd.f32 %v1315, 1.0
    %v1317 = vmul.f32 %v1316, %v1301
    %vm1318 = vweird.f32 %v96
    %v1319 = vand.u32 %v1302, 3
    %vm1320 = vcmp.lt.s32.totalorder %v1319, 2
    %vm1321 = vcmp.eq.s32.totalorder %v1319, 0
    %v1322 = vxor.u32 %v1317, 2147483648
    %v1323 = vsel %vm1321, %v1309, %v1322
    %vm1324 = vcmp.eq.s32.totalorder %v1319, 2
    %v1325 = vxor.u32 %v1309, 2147483648
    %v1326 = vsel %vm1324, %v1325, %v1317
    %v1327 = vsel %vm1320, %v1323, %v1326
    %v1328 = vsel %vm1318, nan, %v1327
    %v1329 = vpack.c.bf16 %v404, %v250
    %v1330 = vpack.c.bf16 %v712, %v558
    %v1331 = vpack.c.bf16 %v1020, %v866
    %v1332 = vpack.c.bf16 %v1328, %v1174
    %v1333 = vld [vmem:[%s2] sm:$0xff]
    %v1334 = vld [vmem:[%s2 + $0x8] sm:$0xff]
    %v1335 = vld [vmem:[%s2 + $0x10] sm:$0xff]
    %v1336 = vld [vmem:[%s2 + $0x18] sm:$0xff]
    %v1337 = vld [vmem:[%s2 + $0x20] sm:$0xff]
    %v1338 = vld [vmem:[%s2 + $0x28] sm:$0xff]
    %v1339 = vld [vmem:[%s2 + $0x30] sm:$0xff]
    %v1340 = vld [vmem:[%s2 + $0x38] sm:$0xff]
    %1342 = vset.pattern.permute.xlu0 0
    %1343 = vperm.xlu0 %1342, %v1333
    %v1344 = vpop.permute.xlu0 %1343
    %1347 = vset.pattern.permute.xlu0 0
    %1348 = vperm.xlu0 %1347, %v1334
    %v1349 = vpop.permute.xlu0 %1348
    %1352 = vset.pattern.permute.xlu0 0
    %1353 = vperm.xlu0 %1352, %v1335
    %v1354 = vpop.permute.xlu0 %1353
    %1357 = vset.pattern.permute.xlu0 0
    %1358 = vperm.xlu0 %1357, %v1336
    %v1359 = vpop.permute.xlu0 %1358
    %1362 = vset.pattern.permute.xlu0 0
    %1363 = vperm.xlu0 %1362, %v1337
    %v1364 = vpop.permute.xlu0 %1363
    %1367 = vset.pattern.permute.xlu0 0
    %1368 = vperm.xlu0 %1367, %v1338
    %v1369 = vpop.permute.xlu0 %1368
    %1372 = vset.pattern.permute.xlu0 0
    %1373 = vperm.xlu0 %1372, %v1339
    %v1374 = vpop.permute.xlu0 %1373
    %1377 = vset.pattern.permute.xlu0 0
    %1378 = vperm.xlu0 %1377, %v1340
    %v1379 = vpop.permute.xlu0 %1378
    %v1381 = vmul.f32 %v1344, %v87
    %v1382 = vmul.f32 %v1349, %v87
    %v1383 = vmul.f32 %v1354, %v87
    %v1384 = vmul.f32 %v1359, %v87
    %v1385 = vmul.f32 %v1364, %v87
    %v1386 = vmul.f32 %v1369, %v87
    %v1387 = vmul.f32 %v1374, %v87
    %v1388 = vmul.f32 %v1379, %v87
    %v1389 = vand.u32 2147483647, %v1381
    %vm1390 = vcmp.le.f32.partialorder %v1389, 0.7853982
    %vm1391 = vcmp.lt.s32.totalorder %v1381, 0
    %v1392 = vand.u32 %v1381, 2139095040
    %v1393 = vshrl.u32 %v1392, 23
    %v1394 = vsub.s32 %v1393, 127
    %v1395 = vand.u32 2147483647, %v1381
    %v1396 = vand.u32 %v1395, 8388607
    %v1397 = vor.u32 %v1396, 8388608
    %v1398 = vsub.s32 0, %v1397
    %v1399 = vadd.s32 %v1394, 1
    %vm1400 = vcmp.gt.s32.totalorder %v1399, 0
    %v1401 = vsel %vm1400, %v1399, 0
    %v1402 = vshrl.u32 %v1401, 5
    %v1403 = vand.u32 %v1401, 31
    %v1404 = vsub.s32 32, %v1403
    %v1405 = vshrl.u32 683565275, %v1404
    %v1406 = vshll.u32 683565275, %v1403
    %v1407 = vshrl.u32 2475754826, %v1404
    %v1408 = vor.u32 %v1406, %v1407
    %v1409 = vshll.u32 2475754826, %v1403
    %v1410 = vshrl.u32 2131351028, %v1404
    %v1411 = vor.u32 %v1409, %v1410
    %v1412 = vshll.u32 2131351028, %v1403
    %v1413 = vshrl.u32 2102212464, %v1404
    %v1414 = vor.u32 %v1412, %v1413
    %v1415 = vshll.u32 2102212464, %v1403
    %v1416 = vshrl.u32 920167782, %v1404
    %v1417 = vor.u32 %v1415, %v1416
    %v1418 = vshll.u32 920167782, %v1403
    %v1419 = vshrl.u32 1326507024, %v1404
    %v1420 = vor.u32 %v1418, %v1419
    %vm1421 = vcmp.lt.s32.totalorder %v1402, 1
    %vm1422 = vcmp.lt.s32.totalorder %v1402, 2
    %vm1423 = vcmp.lt.s32.totalorder %v1402, 3
    %vm1424 = vcmp.lt.s32.totalorder %v1402, 4
    %v1425 = vsel %vm1421, %v1405, %v1408
    %v1426 = vsel %vm1424, %v1414, 2102212464
    %v1427 = vsel %vm1423, %v1411, %v1426
    %v1428 = vsel %vm1422, %v1425, %v1427
    %v1429 = vsel %vm1421, %v1408, %v1411
    %v1430 = vsel %vm1424, %v1417, 920167782
    %v1431 = vsel %vm1423, %v1414, %v1430
    %v1432 = vsel %vm1422, %v1429, %v1431
    %v1433 = vsel %vm1421, %v1411, %v1414
    %v1434 = vsel %vm1424, %v1420, 1326507024
    %v1435 = vsel %vm1423, %v1417, %v1434
    %v1436 = vsel %vm1422, %v1433, %v1435
    %v1437 = vshll.u32 %v1397, 8
    %v1438 = vand.u32 %v1437, 65535
    %v1439 = vshrl.u32 %v1437, 16
    %v1440 = vand.u32 %v1436, 65535
    %v1441 = vshrl.u32 %v1436, 16
    %v1442 = vmul.u32 %v1438, %v1440
    %v1443 = vmul.u32 %v1438, %v1441
    %v1444 = vmul.u32 %v1439, %v1440
    %v1445 = vmul.u32 %v1439, %v1441
    %v1446 = vshll.u32 %v1443, 16
    %v1447 = vshrl.u32 %v1443, 16
    %v1448 = vshll.u32 %v1444, 16
    %v1449 = vshrl.u32 %v1444, 16
    %vm1450 = vc.u32 %v1442, %v1446
    %v1451 = vsel %vm1450, 1, 0
    %v1452 = vadd.s32 %v1442, %v1446
    %v1453 = vadd.s32 %v1445, %v1451
    %vm1454 = vc.u32 %v1452, %v1448
    %v1455 = vsel %vm1454, 1, 0
    %v1456 = vadd.s32 %v1452, %v1448
    %v1457 = vadd.s32 %v1453, %v1455
    %v1458 = vadd.s32 %v1457, %v1447
    %v1459 = vadd.s32 %v1458, %v1449
    %v1460 = vand.u32 %v1437, 65535
    %v1461 = vshrl.u32 %v1437, 16
    %v1462 = vand.u32 %v1432, 65535
    %v1463 = vshrl.u32 %v1432, 16
    %v1464 = vmul.u32 %v1460, %v1462
    %v1465 = vmul.u32 %v1460, %v1463
    %v1466 = vmul.u32 %v1461, %v1462
    %v1467 = vmul.u32 %v1461, %v1463
    %v1468 = vshll.u32 %v1465, 16
    %v1469 = vshrl.u32 %v1465, 16
    %v1470 = vshll.u32 %v1466, 16
    %v1471 = vshrl.u32 %v1466, 16
    %vm1472 = vc.u32 %v1464, %v1468
    %v1473 = vsel %vm1472, 1, 0
    %v1474 = vadd.s32 %v1464, %v1468
    %v1475 = vadd.s32 %v1467, %v1473
    %vm1476 = vc.u32 %v1474, %v1470
    %v1477 = vsel %vm1476, 1, 0
    %v1478 = vadd.s32 %v1474, %v1470
    %v1479 = vadd.s32 %v1475, %v1477
    %v1480 = vadd.s32 %v1479, %v1469
    %v1481 = vadd.s32 %v1480, %v1471
    %v1482 = vmul.u32 %v1437, %v1428
    %v1483 = vadd.s32 %v1459, %v1478
    %vm1484 = vc.u32 %v1459, %v1478
    %v1485 = vadd.s32 %v1481, 1
    %v1486 = vsel %vm1484, %v1485, %v1481
    %v1487 = vadd.s32 %v1482, %v1486
    %v1488 = vadd.s32 %v1487, 536870912
    %v1489 = vshrl.u32 %v1488, 30
    %v1490 = vshll.u32 %v1489, 30
    %v1491 = vsub.s32 %v1487, %v1490
    %vm1492 = vcmp.lt.s32.totalorder %v1491, 0
    %v1493 = vsub.s32 0, %v1491
    %v1494 = vsel %vm1492, %v1493, %v1491
    %v1495 = vclz %v1494
    %v1496 = vsub.s32 %v1495, 2
    %vm1497 = vcmp.gt.s32.totalorder 0, %v1496
    %v1498 = vsel %vm1497, 0, %v1496
    %v1499 = vsub.s32 32, %v1498
    %v1500 = vshll.u32 %v1491, %v1498
    %v1501 = vshrl.u32 %v1483, %v1499
    %v1502 = vor.u32 %v1500, %v1501
    %v1503 = vsub.s32 4294967266, %v1498
    %v1504 = vadd.s32 %v1503, 127
    %v1505 = vshll.u32 %v1504, 23
    %v1506 = vor.u32 4788187, %v1505
    %v1507 = vand.u32 2147483647, %v1506
    %v1509 = vcvt.s32.f32 %v1502
    %v1510 = vmul.f32 %v1509, %v1507
    %v1511 = vxor.u32 %v1510, 2147483648
    %v1512 = vsel %vm1391, %v1511, %v1510
    %v1513 = vsub.s32 4, %v1489
    %v1514 = vsel %vm1391, %v1513, %v1489
    %v1515 = vsel %vm1390, %v1381, %v1512
    %v1516 = vsel %vm1390, 0, %v1514
    %v1517 = vmul.f32 %v1515, %v1515
    %v1518 = vmul.f32 %v1517, -0.001358992
    %v1519 = vadd.f32 %v1518, 0.041655596
    %v1520 = vmul.f32 %v1517, %v1519
    %v1521 = vadd.f32 %v1520, -0.4999988
    %v1522 = vmul.f32 %v1517, %v1521
    %v1523 = vadd.f32 1.0, %v1522
    %v1524 = vmul.f32 %v1515, %v1515
    %v1525 = vmul.f32 %v1524, -0.00019511016
    %v1526 = vadd.f32 %v1525, 0.008332121
    %v1527 = vmul.f32 %v1524, %v1526
    %v1528 = vadd.f32 %v1527, -0.16666654
    %v1529 = vmul.f32 %v1524, %v1528
    %v1530 = vadd.f32 %v1529, 1.0
    %v1531 = vmul.f32 %v1530, %v1515
    %vm1532 = vweird.f32 %v1381
    %v1533 = vand.u32 %v1516, 3
    %vm1534 = vcmp.lt.s32.totalorder %v1533, 2
    %vm1535 = vcmp.eq.s32.totalorder %v1533, 0
    %v1536 = vxor.u32 %v1531, 2147483648
    %v1537 = vsel %vm1535, %v1523, %v1536
    %vm1538 = vcmp.eq.s32.totalorder %v1533, 2
    %v1539 = vxor.u32 %v1523, 2147483648
    %v1540 = vsel %vm1538, %v1539, %v1531
    %v1541 = vsel %vm1534, %v1537, %v1540
    %v1542 = vsel %vm1532, nan, %v1541
    %v1543 = vand.u32 2147483647, %v1382
    %vm1544 = vcmp.le.f32.partialorder %v1543, 0.7853982
    %vm1545 = vcmp.lt.s32.totalorder %v1382, 0
    %v1546 = vand.u32 %v1382, 2139095040
    %v1547 = vshrl.u32 %v1546, 23
    %v1548 = vsub.s32 %v1547, 127
    %v1549 = vand.u32 2147483647, %v1382
    %v1550 = vand.u32 %v1549, 8388607
    %v1551 = vor.u32 %v1550, 8388608
    %v1552 = vsub.s32 0, %v1551
    %v1553 = vadd.s32 %v1548, 1
    %vm1554 = vcmp.gt.s32.totalorder %v1553, 0
    %v1555 = vsel %vm1554, %v1553, 0
    %v1556 = vshrl.u32 %v1555, 5
    %v1557 = vand.u32 %v1555, 31
    %v1558 = vsub.s32 32, %v1557
    %v1559 = vshrl.u32 683565275, %v1558
    %v1560 = vshll.u32 683565275, %v1557
    %v1561 = vshrl.u32 2475754826, %v1558
    %v1562 = vor.u32 %v1560, %v1561
    %v1563 = vshll.u32 2475754826, %v1557
    %v1564 = vshrl.u32 2131351028, %v1558
    %v1565 = vor.u32 %v1563, %v1564
    %v1566 = vshll.u32 2131351028, %v1557
    %v1567 = vshrl.u32 2102212464, %v1558
    %v1568 = vor.u32 %v1566, %v1567
    %v1569 = vshll.u32 2102212464, %v1557
    %v1570 = vshrl.u32 920167782, %v1558
    %v1571 = vor.u32 %v1569, %v1570
    %v1572 = vshll.u32 920167782, %v1557
    %v1573 = vshrl.u32 1326507024, %v1558
    %v1574 = vor.u32 %v1572, %v1573
    %vm1575 = vcmp.lt.s32.totalorder %v1556, 1
    %vm1576 = vcmp.lt.s32.totalorder %v1556, 2
    %vm1577 = vcmp.lt.s32.totalorder %v1556, 3
    %vm1578 = vcmp.lt.s32.totalorder %v1556, 4
    %v1579 = vsel %vm1575, %v1559, %v1562
    %v1580 = vsel %vm1578, %v1568, 2102212464
    %v1581 = vsel %vm1577, %v1565, %v1580
    %v1582 = vsel %vm1576, %v1579, %v1581
    %v1583 = vsel %vm1575, %v1562, %v1565
    %v1584 = vsel %vm1578, %v1571, 920167782
    %v1585 = vsel %vm1577, %v1568, %v1584
    %v1586 = vsel %vm1576, %v1583, %v1585
    %v1587 = vsel %vm1575, %v1565, %v1568
    %v1588 = vsel %vm1578, %v1574, 1326507024
    %v1589 = vsel %vm1577, %v1571, %v1588
    %v1590 = vsel %vm1576, %v1587, %v1589
    %v1591 = vshll.u32 %v1551, 8
    %v1592 = vand.u32 %v1591, 65535
    %v1593 = vshrl.u32 %v1591, 16
    %v1594 = vand.u32 %v1590, 65535
    %v1595 = vshrl.u32 %v1590, 16
    %v1596 = vmul.u32 %v1592, %v1594
    %v1597 = vmul.u32 %v1592, %v1595
    %v1598 = vmul.u32 %v1593, %v1594
    %v1599 = vmul.u32 %v1593, %v1595
    %v1600 = vshll.u32 %v1597, 16
    %v1601 = vshrl.u32 %v1597, 16
    %v1602 = vshll.u32 %v1598, 16
    %v1603 = vshrl.u32 %v1598, 16
    %vm1604 = vc.u32 %v1596, %v1600
    %v1605 = vsel %vm1604, 1, 0
    %v1606 = vadd.s32 %v1596, %v1600
    %v1607 = vadd.s32 %v1599, %v1605
    %vm1608 = vc.u32 %v1606, %v1602
    %v1609 = vsel %vm1608, 1, 0
    %v1610 = vadd.s32 %v1606, %v1602
    %v1611 = vadd.s32 %v1607, %v1609
    %v1612 = vadd.s32 %v1611, %v1601
    %v1613 = vadd.s32 %v1612, %v1603
    %v1614 = vand.u32 %v1591, 65535
    %v1615 = vshrl.u32 %v1591, 16
    %v1616 = vand.u32 %v1586, 65535
    %v1617 = vshrl.u32 %v1586, 16
    %v1618 = vmul.u32 %v1614, %v1616
    %v1619 = vmul.u32 %v1614, %v1617
    %v1620 = vmul.u32 %v1615, %v1616
    %v1621 = vmul.u32 %v1615, %v1617
    %v1622 = vshll.u32 %v1619, 16
    %v1623 = vshrl.u32 %v1619, 16
    %v1624 = vshll.u32 %v1620, 16
    %v1625 = vshrl.u32 %v1620, 16
    %vm1626 = vc.u32 %v1618, %v1622
    %v1627 = vsel %vm1626, 1, 0
    %v1628 = vadd.s32 %v1618, %v1622
    %v1629 = vadd.s32 %v1621, %v1627
    %vm1630 = vc.u32 %v1628, %v1624
    %v1631 = vsel %vm1630, 1, 0
    %v1632 = vadd.s32 %v1628, %v1624
    %v1633 = vadd.s32 %v1629, %v1631
    %v1634 = vadd.s32 %v1633, %v1623
    %v1635 = vadd.s32 %v1634, %v1625
    %v1636 = vmul.u32 %v1591, %v1582
    %v1637 = vadd.s32 %v1613, %v1632
    %vm1638 = vc.u32 %v1613, %v1632
    %v1639 = vadd.s32 %v1635, 1
    %v1640 = vsel %vm1638, %v1639, %v1635
    %v1641 = vadd.s32 %v1636, %v1640
    %v1642 = vadd.s32 %v1641, 536870912
    %v1643 = vshrl.u32 %v1642, 30
    %v1644 = vshll.u32 %v1643, 30
    %v1645 = vsub.s32 %v1641, %v1644
    %vm1646 = vcmp.lt.s32.totalorder %v1645, 0
    %v1647 = vsub.s32 0, %v1645
    %v1648 = vsel %vm1646, %v1647, %v1645
    %v1649 = vclz %v1648
    %v1650 = vsub.s32 %v1649, 2
    %vm1651 = vcmp.gt.s32.totalorder 0, %v1650
    %v1652 = vsel %vm1651, 0, %v1650
    %v1653 = vsub.s32 32, %v1652
    %v1654 = vshll.u32 %v1645, %v1652
    %v1655 = vshrl.u32 %v1637, %v1653
    %v1656 = vor.u32 %v1654, %v1655
    %v1657 = vsub.s32 4294967266, %v1652
    %v1658 = vadd.s32 %v1657, 127
    %v1659 = vshll.u32 %v1658, 23
    %v1660 = vor.u32 4788187, %v1659
    %v1661 = vand.u32 2147483647, %v1660
    %v1663 = vcvt.s32.f32 %v1656
    %v1664 = vmul.f32 %v1663, %v1661
    %v1665 = vxor.u32 %v1664, 2147483648
    %v1666 = vsel %vm1545, %v1665, %v1664
    %v1667 = vsub.s32 4, %v1643
    %v1668 = vsel %vm1545, %v1667, %v1643
    %v1669 = vsel %vm1544, %v1382, %v1666
    %v1670 = vsel %vm1544, 0, %v1668
    %v1671 = vmul.f32 %v1669, %v1669
    %v1672 = vmul.f32 %v1671, -0.001358992
    %v1673 = vadd.f32 %v1672, 0.041655596
    %v1674 = vmul.f32 %v1671, %v1673
    %v1675 = vadd.f32 %v1674, -0.4999988
    %v1676 = vmul.f32 %v1671, %v1675
    %v1677 = vadd.f32 1.0, %v1676
    %v1678 = vmul.f32 %v1669, %v1669
    %v1679 = vmul.f32 %v1678, -0.00019511016
    %v1680 = vadd.f32 %v1679, 0.008332121
    %v1681 = vmul.f32 %v1678, %v1680
    %v1682 = vadd.f32 %v1681, -0.16666654
    %v1683 = vmul.f32 %v1678, %v1682
    %v1684 = vadd.f32 %v1683, 1.0
    %v1685 = vmul.f32 %v1684, %v1669
    %vm1686 = vweird.f32 %v1382
    %v1687 = vand.u32 %v1670, 3
    %vm1688 = vcmp.lt.s32.totalorder %v1687, 2
    %vm1689 = vcmp.eq.s32.totalorder %v1687, 0
    %v1690 = vxor.u32 %v1685, 2147483648
    %v1691 = vsel %vm1689, %v1677, %v1690
    %vm1692 = vcmp.eq.s32.totalorder %v1687, 2
    %v1693 = vxor.u32 %v1677, 2147483648
    %v1694 = vsel %vm1692, %v1693, %v1685
    %v1695 = vsel %vm1688, %v1691, %v1694
    %v1696 = vsel %vm1686, nan, %v1695
    %v1697 = vand.u32 2147483647, %v1383
    %vm1698 = vcmp.le.f32.partialorder %v1697, 0.7853982
    %vm1699 = vcmp.lt.s32.totalorder %v1383, 0
    %v1700 = vand.u32 %v1383, 2139095040
    %v1701 = vshrl.u32 %v1700, 23
    %v1702 = vsub.s32 %v1701, 127
    %v1703 = vand.u32 2147483647, %v1383
    %v1704 = vand.u32 %v1703, 8388607
    %v1705 = vor.u32 %v1704, 8388608
    %v1706 = vsub.s32 0, %v1705
    %v1707 = vadd.s32 %v1702, 1
    %vm1708 = vcmp.gt.s32.totalorder %v1707, 0
    %v1709 = vsel %vm1708, %v1707, 0
    %v1710 = vshrl.u32 %v1709, 5
    %v1711 = vand.u32 %v1709, 31
    %v1712 = vsub.s32 32, %v1711
    %v1713 = vshrl.u32 683565275, %v1712
    %v1714 = vshll.u32 683565275, %v1711
    %v1715 = vshrl.u32 2475754826, %v1712
    %v1716 = vor.u32 %v1714, %v1715
    %v1717 = vshll.u32 2475754826, %v1711
    %v1718 = vshrl.u32 2131351028, %v1712
    %v1719 = vor.u32 %v1717, %v1718
    %v1720 = vshll.u32 2131351028, %v1711
    %v1721 = vshrl.u32 2102212464, %v1712
    %v1722 = vor.u32 %v1720, %v1721
    %v1723 = vshll.u32 2102212464, %v1711
    %v1724 = vshrl.u32 920167782, %v1712
    %v1725 = vor.u32 %v1723, %v1724
    %v1726 = vshll.u32 920167782, %v1711
    %v1727 = vshrl.u32 1326507024, %v1712
    %v1728 = vor.u32 %v1726, %v1727
    %vm1729 = vcmp.lt.s32.totalorder %v1710, 1
    %vm1730 = vcmp.lt.s32.totalorder %v1710, 2
    %vm1731 = vcmp.lt.s32.totalorder %v1710, 3
    %vm1732 = vcmp.lt.s32.totalorder %v1710, 4
    %v1733 = vsel %vm1729, %v1713, %v1716
    %v1734 = vsel %vm1732, %v1722, 2102212464
    %v1735 = vsel %vm1731, %v1719, %v1734
    %v1736 = vsel %vm1730, %v1733, %v1735
    %v1737 = vsel %vm1729, %v1716, %v1719
    %v1738 = vsel %vm1732, %v1725, 920167782
    %v1739 = vsel %vm1731, %v1722, %v1738
    %v1740 = vsel %vm1730, %v1737, %v1739
    %v1741 = vsel %vm1729, %v1719, %v1722
    %v1742 = vsel %vm1732, %v1728, 1326507024
    %v1743 = vsel %vm1731, %v1725, %v1742
    %v1744 = vsel %vm1730, %v1741, %v1743
    %v1745 = vshll.u32 %v1705, 8
    %v1746 = vand.u32 %v1745, 65535
    %v1747 = vshrl.u32 %v1745, 16
    %v1748 = vand.u32 %v1744, 65535
    %v1749 = vshrl.u32 %v1744, 16
    %v1750 = vmul.u32 %v1746, %v1748
    %v1751 = vmul.u32 %v1746, %v1749
    %v1752 = vmul.u32 %v1747, %v1748
    %v1753 = vmul.u32 %v1747, %v1749
    %v1754 = vshll.u32 %v1751, 16
    %v1755 = vshrl.u32 %v1751, 16
    %v1756 = vshll.u32 %v1752, 16
    %v1757 = vshrl.u32 %v1752, 16
    %vm1758 = vc.u32 %v1750, %v1754
    %v1759 = vsel %vm1758, 1, 0
    %v1760 = vadd.s32 %v1750, %v1754
    %v1761 = vadd.s32 %v1753, %v1759
    %vm1762 = vc.u32 %v1760, %v1756
    %v1763 = vsel %vm1762, 1, 0
    %v1764 = vadd.s32 %v1760, %v1756
    %v1765 = vadd.s32 %v1761, %v1763
    %v1766 = vadd.s32 %v1765, %v1755
    %v1767 = vadd.s32 %v1766, %v1757
    %v1768 = vand.u32 %v1745, 65535
    %v1769 = vshrl.u32 %v1745, 16
    %v1770 = vand.u32 %v1740, 65535
    %v1771 = vshrl.u32 %v1740, 16
    %v1772 = vmul.u32 %v1768, %v1770
    %v1773 = vmul.u32 %v1768, %v1771
    %v1774 = vmul.u32 %v1769, %v1770
    %v1775 = vmul.u32 %v1769, %v1771
    %v1776 = vshll.u32 %v1773, 16
    %v1777 = vshrl.u32 %v1773, 16
    %v1778 = vshll.u32 %v1774, 16
    %v1779 = vshrl.u32 %v1774, 16
    %vm1780 = vc.u32 %v1772, %v1776
    %v1781 = vsel %vm1780, 1, 0
    %v1782 = vadd.s32 %v1772, %v1776
    %v1783 = vadd.s32 %v1775, %v1781
    %vm1784 = vc.u32 %v1782, %v1778
    %v1785 = vsel %vm1784, 1, 0
    %v1786 = vadd.s32 %v1782, %v1778
    %v1787 = vadd.s32 %v1783, %v1785
    %v1788 = vadd.s32 %v1787, %v1777
    %v1789 = vadd.s32 %v1788, %v1779
    %v1790 = vmul.u32 %v1745, %v1736
    %v1791 = vadd.s32 %v1767, %v1786
    %vm1792 = vc.u32 %v1767, %v1786
    %v1793 = vadd.s32 %v1789, 1
    %v1794 = vsel %vm1792, %v1793, %v1789
    %v1795 = vadd.s32 %v1790, %v1794
    %v1796 = vadd.s32 %v1795, 536870912
    %v1797 = vshrl.u32 %v1796, 30
    %v1798 = vshll.u32 %v1797, 30
    %v1799 = vsub.s32 %v1795, %v1798
    %vm1800 = vcmp.lt.s32.totalorder %v1799, 0
    %v1801 = vsub.s32 0, %v1799
    %v1802 = vsel %vm1800, %v1801, %v1799
    %v1803 = vclz %v1802
    %v1804 = vsub.s32 %v1803, 2
    %vm1805 = vcmp.gt.s32.totalorder 0, %v1804
    %v1806 = vsel %vm1805, 0, %v1804
    %v1807 = vsub.s32 32, %v1806
    %v1808 = vshll.u32 %v1799, %v1806
    %v1809 = vshrl.u32 %v1791, %v1807
    %v1810 = vor.u32 %v1808, %v1809
    %v1811 = vsub.s32 4294967266, %v1806
    %v1812 = vadd.s32 %v1811, 127
    %v1813 = vshll.u32 %v1812, 23
    %v1814 = vor.u32 4788187, %v1813
    %v1815 = vand.u32 2147483647, %v1814
    %v1817 = vcvt.s32.f32 %v1810
    %v1818 = vmul.f32 %v1817, %v1815
    %v1819 = vxor.u32 %v1818, 2147483648
    %v1820 = vsel %vm1699, %v1819, %v1818
    %v1821 = vsub.s32 4, %v1797
    %v1822 = vsel %vm1699, %v1821, %v1797
    %v1823 = vsel %vm1698, %v1383, %v1820
    %v1824 = vsel %vm1698, 0, %v1822
    %v1825 = vmul.f32 %v1823, %v1823
    %v1826 = vmul.f32 %v1825, -0.001358992
    %v1827 = vadd.f32 %v1826, 0.041655596
    %v1828 = vmul.f32 %v1825, %v1827
    %v1829 = vadd.f32 %v1828, -0.4999988
    %v1830 = vmul.f32 %v1825, %v1829
    %v1831 = vadd.f32 1.0, %v1830
    %v1832 = vmul.f32 %v1823, %v1823
    %v1833 = vmul.f32 %v1832, -0.00019511016
    %v1834 = vadd.f32 %v1833, 0.008332121
    %v1835 = vmul.f32 %v1832, %v1834
    %v1836 = vadd.f32 %v1835, -0.16666654
    %v1837 = vmul.f32 %v1832, %v1836
    %v1838 = vadd.f32 %v1837, 1.0
    %v1839 = vmul.f32 %v1838, %v1823
    %vm1840 = vweird.f32 %v1383
    %v1841 = vand.u32 %v1824, 3
    %vm1842 = vcmp.lt.s32.totalorder %v1841, 2
    %vm1843 = vcmp.eq.s32.totalorder %v1841, 0
    %v1844 = vxor.u32 %v1839, 2147483648
    %v1845 = vsel %vm1843, %v1831, %v1844
    %vm1846 = vcmp.eq.s32.totalorder %v1841, 2
    %v1847 = vxor.u32 %v1831, 2147483648
    %v1848 = vsel %vm1846, %v1847, %v1839
    %v1849 = vsel %vm1842, %v1845, %v1848
    %v1850 = vsel %vm1840, nan, %v1849
    %v1851 = vand.u32 2147483647, %v1384
    %vm1852 = vcmp.le.f32.partialorder %v1851, 0.7853982
    %vm1853 = vcmp.lt.s32.totalorder %v1384, 0
    %v1854 = vand.u32 %v1384, 2139095040
    %v1855 = vshrl.u32 %v1854, 23
    %v1856 = vsub.s32 %v1855, 127
    %v1857 = vand.u32 2147483647, %v1384
    %v1858 = vand.u32 %v1857, 8388607
    %v1859 = vor.u32 %v1858, 8388608
    %v1860 = vsub.s32 0, %v1859
    %v1861 = vadd.s32 %v1856, 1
    %vm1862 = vcmp.gt.s32.totalorder %v1861, 0
    %v1863 = vsel %vm1862, %v1861, 0
    %v1864 = vshrl.u32 %v1863, 5
    %v1865 = vand.u32 %v1863, 31
    %v1866 = vsub.s32 32, %v1865
    %v1867 = vshrl.u32 683565275, %v1866
    %v1868 = vshll.u32 683565275, %v1865
    %v1869 = vshrl.u32 2475754826, %v1866
    %v1870 = vor.u32 %v1868, %v1869
    %v1871 = vshll.u32 2475754826, %v1865
    %v1872 = vshrl.u32 2131351028, %v1866
    %v1873 = vor.u32 %v1871, %v1872
    %v1874 = vshll.u32 2131351028, %v1865
    %v1875 = vshrl.u32 2102212464, %v1866
    %v1876 = vor.u32 %v1874, %v1875
    %v1877 = vshll.u32 2102212464, %v1865
    %v1878 = vshrl.u32 920167782, %v1866
    %v1879 = vor.u32 %v1877, %v1878
    %v1880 = vshll.u32 920167782, %v1865
    %v1881 = vshrl.u32 1326507024, %v1866
    %v1882 = vor.u32 %v1880, %v1881
    %vm1883 = vcmp.lt.s32.totalorder %v1864, 1
    %vm1884 = vcmp.lt.s32.totalorder %v1864, 2
    %vm1885 = vcmp.lt.s32.totalorder %v1864, 3
    %vm1886 = vcmp.lt.s32.totalorder %v1864, 4
    %v1887 = vsel %vm1883, %v1867, %v1870
    %v1888 = vsel %vm1886, %v1876, 2102212464
    %v1889 = vsel %vm1885, %v1873, %v1888
    %v1890 = vsel %vm1884, %v1887, %v1889
    %v1891 = vsel %vm1883, %v1870, %v1873
    %v1892 = vsel %vm1886, %v1879, 920167782
    %v1893 = vsel %vm1885, %v1876, %v1892
    %v1894 = vsel %vm1884, %v1891, %v1893
    %v1895 = vsel %vm1883, %v1873, %v1876
    %v1896 = vsel %vm1886, %v1882, 1326507024
    %v1897 = vsel %vm1885, %v1879, %v1896
    %v1898 = vsel %vm1884, %v1895, %v1897
    %v1899 = vshll.u32 %v1859, 8
    %v1900 = vand.u32 %v1899, 65535
    %v1901 = vshrl.u32 %v1899, 16
    %v1902 = vand.u32 %v1898, 65535
    %v1903 = vshrl.u32 %v1898, 16
    %v1904 = vmul.u32 %v1900, %v1902
    %v1905 = vmul.u32 %v1900, %v1903
    %v1906 = vmul.u32 %v1901, %v1902
    %v1907 = vmul.u32 %v1901, %v1903
    %v1908 = vshll.u32 %v1905, 16
    %v1909 = vshrl.u32 %v1905, 16
    %v1910 = vshll.u32 %v1906, 16
    %v1911 = vshrl.u32 %v1906, 16
    %vm1912 = vc.u32 %v1904, %v1908
    %v1913 = vsel %vm1912, 1, 0
    %v1914 = vadd.s32 %v1904, %v1908
    %v1915 = vadd.s32 %v1907, %v1913
    %vm1916 = vc.u32 %v1914, %v1910
    %v1917 = vsel %vm1916, 1, 0
    %v1918 = vadd.s32 %v1914, %v1910
    %v1919 = vadd.s32 %v1915, %v1917
    %v1920 = vadd.s32 %v1919, %v1909
    %v1921 = vadd.s32 %v1920, %v1911
    %v1922 = vand.u32 %v1899, 65535
    %v1923 = vshrl.u32 %v1899, 16
    %v1924 = vand.u32 %v1894, 65535
    %v1925 = vshrl.u32 %v1894, 16
    %v1926 = vmul.u32 %v1922, %v1924
    %v1927 = vmul.u32 %v1922, %v1925
    %v1928 = vmul.u32 %v1923, %v1924
    %v1929 = vmul.u32 %v1923, %v1925
    %v1930 = vshll.u32 %v1927, 16
    %v1931 = vshrl.u32 %v1927, 16
    %v1932 = vshll.u32 %v1928, 16
    %v1933 = vshrl.u32 %v1928, 16
    %vm1934 = vc.u32 %v1926, %v1930
    %v1935 = vsel %vm1934, 1, 0
    %v1936 = vadd.s32 %v1926, %v1930
    %v1937 = vadd.s32 %v1929, %v1935
    %vm1938 = vc.u32 %v1936, %v1932
    %v1939 = vsel %vm1938, 1, 0
    %v1940 = vadd.s32 %v1936, %v1932
    %v1941 = vadd.s32 %v1937, %v1939
    %v1942 = vadd.s32 %v1941, %v1931
    %v1943 = vadd.s32 %v1942, %v1933
    %v1944 = vmul.u32 %v1899, %v1890
    %v1945 = vadd.s32 %v1921, %v1940
    %vm1946 = vc.u32 %v1921, %v1940
    %v1947 = vadd.s32 %v1943, 1
    %v1948 = vsel %vm1946, %v1947, %v1943
    %v1949 = vadd.s32 %v1944, %v1948
    %v1950 = vadd.s32 %v1949, 536870912
    %v1951 = vshrl.u32 %v1950, 30
    %v1952 = vshll.u32 %v1951, 30
    %v1953 = vsub.s32 %v1949, %v1952
    %vm1954 = vcmp.lt.s32.totalorder %v1953, 0
    %v1955 = vsub.s32 0, %v1953
    %v1956 = vsel %vm1954, %v1955, %v1953
    %v1957 = vclz %v1956
    %v1958 = vsub.s32 %v1957, 2
    %vm1959 = vcmp.gt.s32.totalorder 0, %v1958
    %v1960 = vsel %vm1959, 0, %v1958
    %v1961 = vsub.s32 32, %v1960
    %v1962 = vshll.u32 %v1953, %v1960
    %v1963 = vshrl.u32 %v1945, %v1961
    %v1964 = vor.u32 %v1962, %v1963
    %v1965 = vsub.s32 4294967266, %v1960
    %v1966 = vadd.s32 %v1965, 127
    %v1967 = vshll.u32 %v1966, 23
    %v1968 = vor.u32 4788187, %v1967
    %v1969 = vand.u32 2147483647, %v1968
    %v1971 = vcvt.s32.f32 %v1964
    %v1972 = vmul.f32 %v1971, %v1969
    %v1973 = vxor.u32 %v1972, 2147483648
    %v1974 = vsel %vm1853, %v1973, %v1972
    %v1975 = vsub.s32 4, %v1951
    %v1976 = vsel %vm1853, %v1975, %v1951
    %v1977 = vsel %vm1852, %v1384, %v1974
    %v1978 = vsel %vm1852, 0, %v1976
    %v1979 = vmul.f32 %v1977, %v1977
    %v1980 = vmul.f32 %v1979, -0.001358992
    %v1981 = vadd.f32 %v1980, 0.041655596
    %v1982 = vmul.f32 %v1979, %v1981
    %v1983 = vadd.f32 %v1982, -0.4999988
    %v1984 = vmul.f32 %v1979, %v1983
    %v1985 = vadd.f32 1.0, %v1984
    %v1986 = vmul.f32 %v1977, %v1977
    %v1987 = vmul.f32 %v1986, -0.00019511016
    %v1988 = vadd.f32 %v1987, 0.008332121
    %v1989 = vmul.f32 %v1986, %v1988
    %v1990 = vadd.f32 %v1989, -0.16666654
    %v1991 = vmul.f32 %v1986, %v1990
    %v1992 = vadd.f32 %v1991, 1.0
    %v1993 = vmul.f32 %v1992, %v1977
    %vm1994 = vweird.f32 %v1384
    %v1995 = vand.u32 %v1978, 3
    %vm1996 = vcmp.lt.s32.totalorder %v1995, 2
    %vm1997 = vcmp.eq.s32.totalorder %v1995, 0
    %v1998 = vxor.u32 %v1993, 2147483648
    %v1999 = vsel %vm1997, %v1985, %v1998
    %vm2000 = vcmp.eq.s32.totalorder %v1995, 2
    %v2001 = vxor.u32 %v1985, 2147483648
    %v2002 = vsel %vm2000, %v2001, %v1993
    %v2003 = vsel %vm1996, %v1999, %v2002
    %v2004 = vsel %vm1994, nan, %v2003
    %v2005 = vand.u32 2147483647, %v1385
    %vm2006 = vcmp.le.f32.partialorder %v2005, 0.7853982
    %vm2007 = vcmp.lt.s32.totalorder %v1385, 0
    %v2008 = vand.u32 %v1385, 2139095040
    %v2009 = vshrl.u32 %v2008, 23
    %v2010 = vsub.s32 %v2009, 127
    %v2011 = vand.u32 2147483647, %v1385
    %v2012 = vand.u32 %v2011, 8388607
    %v2013 = vor.u32 %v2012, 8388608
    %v2014 = vsub.s32 0, %v2013
    %v2015 = vadd.s32 %v2010, 1
    %vm2016 = vcmp.gt.s32.totalorder %v2015, 0
    %v2017 = vsel %vm2016, %v2015, 0
    %v2018 = vshrl.u32 %v2017, 5
    %v2019 = vand.u32 %v2017, 31
    %v2020 = vsub.s32 32, %v2019
    %v2021 = vshrl.u32 683565275, %v2020
    %v2022 = vshll.u32 683565275, %v2019
    %v2023 = vshrl.u32 2475754826, %v2020
    %v2024 = vor.u32 %v2022, %v2023
    %v2025 = vshll.u32 2475754826, %v2019
    %v2026 = vshrl.u32 2131351028, %v2020
    %v2027 = vor.u32 %v2025, %v2026
    %v2028 = vshll.u32 2131351028, %v2019
    %v2029 = vshrl.u32 2102212464, %v2020
    %v2030 = vor.u32 %v2028, %v2029
    %v2031 = vshll.u32 2102212464, %v2019
    %v2032 = vshrl.u32 920167782, %v2020
    %v2033 = vor.u32 %v2031, %v2032
    %v2034 = vshll.u32 920167782, %v2019
    %v2035 = vshrl.u32 1326507024, %v2020
    %v2036 = vor.u32 %v2034, %v2035
    %vm2037 = vcmp.lt.s32.totalorder %v2018, 1
    %vm2038 = vcmp.lt.s32.totalorder %v2018, 2
    %vm2039 = vcmp.lt.s32.totalorder %v2018, 3
    %vm2040 = vcmp.lt.s32.totalorder %v2018, 4
    %v2041 = vsel %vm2037, %v2021, %v2024
    %v2042 = vsel %vm2040, %v2030, 2102212464
    %v2043 = vsel %vm2039, %v2027, %v2042
    %v2044 = vsel %vm2038, %v2041, %v2043
    %v2045 = vsel %vm2037, %v2024, %v2027
    %v2046 = vsel %vm2040, %v2033, 920167782
    %v2047 = vsel %vm2039, %v2030, %v2046
    %v2048 = vsel %vm2038, %v2045, %v2047
    %v2049 = vsel %vm2037, %v2027, %v2030
    %v2050 = vsel %vm2040, %v2036, 1326507024
    %v2051 = vsel %vm2039, %v2033, %v2050
    %v2052 = vsel %vm2038, %v2049, %v2051
    %v2053 = vshll.u32 %v2013, 8
    %v2054 = vand.u32 %v2053, 65535
    %v2055 = vshrl.u32 %v2053, 16
    %v2056 = vand.u32 %v2052, 65535
    %v2057 = vshrl.u32 %v2052, 16
    %v2058 = vmul.u32 %v2054, %v2056
    %v2059 = vmul.u32 %v2054, %v2057
    %v2060 = vmul.u32 %v2055, %v2056
    %v2061 = vmul.u32 %v2055, %v2057
    %v2062 = vshll.u32 %v2059, 16
    %v2063 = vshrl.u32 %v2059, 16
    %v2064 = vshll.u32 %v2060, 16
    %v2065 = vshrl.u32 %v2060, 16
    %vm2066 = vc.u32 %v2058, %v2062
    %v2067 = vsel %vm2066, 1, 0
    %v2068 = vadd.s32 %v2058, %v2062
    %v2069 = vadd.s32 %v2061, %v2067
    %vm2070 = vc.u32 %v2068, %v2064
    %v2071 = vsel %vm2070, 1, 0
    %v2072 = vadd.s32 %v2068, %v2064
    %v2073 = vadd.s32 %v2069, %v2071
    %v2074 = vadd.s32 %v2073, %v2063
    %v2075 = vadd.s32 %v2074, %v2065
    %v2076 = vand.u32 %v2053, 65535
    %v2077 = vshrl.u32 %v2053, 16
    %v2078 = vand.u32 %v2048, 65535
    %v2079 = vshrl.u32 %v2048, 16
    %v2080 = vmul.u32 %v2076, %v2078
    %v2081 = vmul.u32 %v2076, %v2079
    %v2082 = vmul.u32 %v2077, %v2078
    %v2083 = vmul.u32 %v2077, %v2079
    %v2084 = vshll.u32 %v2081, 16
    %v2085 = vshrl.u32 %v2081, 16
    %v2086 = vshll.u32 %v2082, 16
    %v2087 = vshrl.u32 %v2082, 16
    %vm2088 = vc.u32 %v2080, %v2084
    %v2089 = vsel %vm2088, 1, 0
    %v2090 = vadd.s32 %v2080, %v2084
    %v2091 = vadd.s32 %v2083, %v2089
    %vm2092 = vc.u32 %v2090, %v2086
    %v2093 = vsel %vm2092, 1, 0
    %v2094 = vadd.s32 %v2090, %v2086
    %v2095 = vadd.s32 %v2091, %v2093
    %v2096 = vadd.s32 %v2095, %v2085
    %v2097 = vadd.s32 %v2096, %v2087
    %v2098 = vmul.u32 %v2053, %v2044
    %v2099 = vadd.s32 %v2075, %v2094
    %vm2100 = vc.u32 %v2075, %v2094
    %v2101 = vadd.s32 %v2097, 1
    %v2102 = vsel %vm2100, %v2101, %v2097
    %v2103 = vadd.s32 %v2098, %v2102
    %v2104 = vadd.s32 %v2103, 536870912
    %v2105 = vshrl.u32 %v2104, 30
    %v2106 = vshll.u32 %v2105, 30
    %v2107 = vsub.s32 %v2103, %v2106
    %vm2108 = vcmp.lt.s32.totalorder %v2107, 0
    %v2109 = vsub.s32 0, %v2107
    %v2110 = vsel %vm2108, %v2109, %v2107
    %v2111 = vclz %v2110
    %v2112 = vsub.s32 %v2111, 2
    %vm2113 = vcmp.gt.s32.totalorder 0, %v2112
    %v2114 = vsel %vm2113, 0, %v2112
    %v2115 = vsub.s32 32, %v2114
    %v2116 = vshll.u32 %v2107, %v2114
    %v2117 = vshrl.u32 %v2099, %v2115
    %v2118 = vor.u32 %v2116, %v2117
    %v2119 = vsub.s32 4294967266, %v2114
    %v2120 = vadd.s32 %v2119, 127
    %v2121 = vshll.u32 %v2120, 23
    %v2122 = vor.u32 4788187, %v2121
    %v2123 = vand.u32 2147483647, %v2122
    %v2125 = vcvt.s32.f32 %v2118
    %v2126 = vmul.f32 %v2125, %v2123
    %v2127 = vxor.u32 %v2126, 2147483648
    %v2128 = vsel %vm2007, %v2127, %v2126
    %v2129 = vsub.s32 4, %v2105
    %v2130 = vsel %vm2007, %v2129, %v2105
    %v2131 = vsel %vm2006, %v1385, %v2128
    %v2132 = vsel %vm2006, 0, %v2130
    %v2133 = vmul.f32 %v2131, %v2131
    %v2134 = vmul.f32 %v2133, -0.001358992
    %v2135 = vadd.f32 %v2134, 0.041655596
    %v2136 = vmul.f32 %v2133, %v2135
    %v2137 = vadd.f32 %v2136, -0.4999988
    %v2138 = vmul.f32 %v2133, %v2137
    %v2139 = vadd.f32 1.0, %v2138
    %v2140 = vmul.f32 %v2131, %v2131
    %v2141 = vmul.f32 %v2140, -0.00019511016
    %v2142 = vadd.f32 %v2141, 0.008332121
    %v2143 = vmul.f32 %v2140, %v2142
    %v2144 = vadd.f32 %v2143, -0.16666654
    %v2145 = vmul.f32 %v2140, %v2144
    %v2146 = vadd.f32 %v2145, 1.0
    %v2147 = vmul.f32 %v2146, %v2131
    %vm2148 = vweird.f32 %v1385
    %v2149 = vand.u32 %v2132, 3
    %vm2150 = vcmp.lt.s32.totalorder %v2149, 2
    %vm2151 = vcmp.eq.s32.totalorder %v2149, 0
    %v2152 = vxor.u32 %v2147, 2147483648
    %v2153 = vsel %vm2151, %v2139, %v2152
    %vm2154 = vcmp.eq.s32.totalorder %v2149, 2
    %v2155 = vxor.u32 %v2139, 2147483648
    %v2156 = vsel %vm2154, %v2155, %v2147
    %v2157 = vsel %vm2150, %v2153, %v2156
    %v2158 = vsel %vm2148, nan, %v2157
    %v2159 = vand.u32 2147483647, %v1386
    %vm2160 = vcmp.le.f32.partialorder %v2159, 0.7853982
    %vm2161 = vcmp.lt.s32.totalorder %v1386, 0
    %v2162 = vand.u32 %v1386, 2139095040
    %v2163 = vshrl.u32 %v2162, 23
    %v2164 = vsub.s32 %v2163, 127
    %v2165 = vand.u32 2147483647, %v1386
    %v2166 = vand.u32 %v2165, 8388607
    %v2167 = vor.u32 %v2166, 8388608
    %v2168 = vsub.s32 0, %v2167
    %v2169 = vadd.s32 %v2164, 1
    %vm2170 = vcmp.gt.s32.totalorder %v2169, 0
    %v2171 = vsel %vm2170, %v2169, 0
    %v2172 = vshrl.u32 %v2171, 5
    %v2173 = vand.u32 %v2171, 31
    %v2174 = vsub.s32 32, %v2173
    %v2175 = vshrl.u32 683565275, %v2174
    %v2176 = vshll.u32 683565275, %v2173
    %v2177 = vshrl.u32 2475754826, %v2174
    %v2178 = vor.u32 %v2176, %v2177
    %v2179 = vshll.u32 2475754826, %v2173
    %v2180 = vshrl.u32 2131351028, %v2174
    %v2181 = vor.u32 %v2179, %v2180
    %v2182 = vshll.u32 2131351028, %v2173
    %v2183 = vshrl.u32 2102212464, %v2174
    %v2184 = vor.u32 %v2182, %v2183
    %v2185 = vshll.u32 2102212464, %v2173
    %v2186 = vshrl.u32 920167782, %v2174
    %v2187 = vor.u32 %v2185, %v2186
    %v2188 = vshll.u32 920167782, %v2173
    %v2189 = vshrl.u32 1326507024, %v2174
    %v2190 = vor.u32 %v2188, %v2189
    %vm2191 = vcmp.lt.s32.totalorder %v2172, 1
    %vm2192 = vcmp.lt.s32.totalorder %v2172, 2
    %vm2193 = vcmp.lt.s32.totalorder %v2172, 3
    %vm2194 = vcmp.lt.s32.totalorder %v2172, 4
    %v2195 = vsel %vm2191, %v2175, %v2178
    %v2196 = vsel %vm2194, %v2184, 2102212464
    %v2197 = vsel %vm2193, %v2181, %v2196
    %v2198 = vsel %vm2192, %v2195, %v2197
    %v2199 = vsel %vm2191, %v2178, %v2181
    %v2200 = vsel %vm2194, %v2187, 920167782
    %v2201 = vsel %vm2193, %v2184, %v2200
    %v2202 = vsel %vm2192, %v2199, %v2201
    %v2203 = vsel %vm2191, %v2181, %v2184
    %v2204 = vsel %vm2194, %v2190, 1326507024
    %v2205 = vsel %vm2193, %v2187, %v2204
    %v2206 = vsel %vm2192, %v2203, %v2205
    %v2207 = vshll.u32 %v2167, 8
    %v2208 = vand.u32 %v2207, 65535
    %v2209 = vshrl.u32 %v2207, 16
    %v2210 = vand.u32 %v2206, 65535
    %v2211 = vshrl.u32 %v2206, 16
    %v2212 = vmul.u32 %v2208, %v2210
    %v2213 = vmul.u32 %v2208, %v2211
    %v2214 = vmul.u32 %v2209, %v2210
    %v2215 = vmul.u32 %v2209, %v2211
    %v2216 = vshll.u32 %v2213, 16
    %v2217 = vshrl.u32 %v2213, 16
    %v2218 = vshll.u32 %v2214, 16
    %v2219 = vshrl.u32 %v2214, 16
    %vm2220 = vc.u32 %v2212, %v2216
    %v2221 = vsel %vm2220, 1, 0
    %v2222 = vadd.s32 %v2212, %v2216
    %v2223 = vadd.s32 %v2215, %v2221
    %vm2224 = vc.u32 %v2222, %v2218
    %v2225 = vsel %vm2224, 1, 0
    %v2226 = vadd.s32 %v2222, %v2218
    %v2227 = vadd.s32 %v2223, %v2225
    %v2228 = vadd.s32 %v2227, %v2217
    %v2229 = vadd.s32 %v2228, %v2219
    %v2230 = vand.u32 %v2207, 65535
    %v2231 = vshrl.u32 %v2207, 16
    %v2232 = vand.u32 %v2202, 65535
    %v2233 = vshrl.u32 %v2202, 16
    %v2234 = vmul.u32 %v2230, %v2232
    %v2235 = vmul.u32 %v2230, %v2233
    %v2236 = vmul.u32 %v2231, %v2232
    %v2237 = vmul.u32 %v2231, %v2233
    %v2238 = vshll.u32 %v2235, 16
    %v2239 = vshrl.u32 %v2235, 16
    %v2240 = vshll.u32 %v2236, 16
    %v2241 = vshrl.u32 %v2236, 16
    %vm2242 = vc.u32 %v2234, %v2238
    %v2243 = vsel %vm2242, 1, 0
    %v2244 = vadd.s32 %v2234, %v2238
    %v2245 = vadd.s32 %v2237, %v2243
    %vm2246 = vc.u32 %v2244, %v2240
    %v2247 = vsel %vm2246, 1, 0
    %v2248 = vadd.s32 %v2244, %v2240
    %v2249 = vadd.s32 %v2245, %v2247
    %v2250 = vadd.s32 %v2249, %v2239
    %v2251 = vadd.s32 %v2250, %v2241
    %v2252 = vmul.u32 %v2207, %v2198
    %v2253 = vadd.s32 %v2229, %v2248
    %vm2254 = vc.u32 %v2229, %v2248
    %v2255 = vadd.s32 %v2251, 1
    %v2256 = vsel %vm2254, %v2255, %v2251
    %v2257 = vadd.s32 %v2252, %v2256
    %v2258 = vadd.s32 %v2257, 536870912
    %v2259 = vshrl.u32 %v2258, 30
    %v2260 = vshll.u32 %v2259, 30
    %v2261 = vsub.s32 %v2257, %v2260
    %vm2262 = vcmp.lt.s32.totalorder %v2261, 0
    %v2263 = vsub.s32 0, %v2261
    %v2264 = vsel %vm2262, %v2263, %v2261
    %v2265 = vclz %v2264
    %v2266 = vsub.s32 %v2265, 2
    %vm2267 = vcmp.gt.s32.totalorder 0, %v2266
    %v2268 = vsel %vm2267, 0, %v2266
    %v2269 = vsub.s32 32, %v2268
    %v2270 = vshll.u32 %v2261, %v2268
    %v2271 = vshrl.u32 %v2253, %v2269
    %v2272 = vor.u32 %v2270, %v2271
    %v2273 = vsub.s32 4294967266, %v2268
    %v2274 = vadd.s32 %v2273, 127
    %v2275 = vshll.u32 %v2274, 23
    %v2276 = vor.u32 4788187, %v2275
    %v2277 = vand.u32 2147483647, %v2276
    %v2279 = vcvt.s32.f32 %v2272
    %v2280 = vmul.f32 %v2279, %v2277
    %v2281 = vxor.u32 %v2280, 2147483648
    %v2282 = vsel %vm2161, %v2281, %v2280
    %v2283 = vsub.s32 4, %v2259
    %v2284 = vsel %vm2161, %v2283, %v2259
    %v2285 = vsel %vm2160, %v1386, %v2282
    %v2286 = vsel %vm2160, 0, %v2284
    %v2287 = vmul.f32 %v2285, %v2285
    %v2288 = vmul.f32 %v2287, -0.001358992
    %v2289 = vadd.f32 %v2288, 0.041655596
    %v2290 = vmul.f32 %v2287, %v2289
    %v2291 = vadd.f32 %v2290, -0.4999988
    %v2292 = vmul.f32 %v2287, %v2291
    %v2293 = vadd.f32 1.0, %v2292
    %v2294 = vmul.f32 %v2285, %v2285
    %v2295 = vmul.f32 %v2294, -0.00019511016
    %v2296 = vadd.f32 %v2295, 0.008332121
    %v2297 = vmul.f32 %v2294, %v2296
    %v2298 = vadd.f32 %v2297, -0.16666654
    %v2299 = vmul.f32 %v2294, %v2298
    %v2300 = vadd.f32 %v2299, 1.0
    %v2301 = vmul.f32 %v2300, %v2285
    %vm2302 = vweird.f32 %v1386
    %v2303 = vand.u32 %v2286, 3
    %vm2304 = vcmp.lt.s32.totalorder %v2303, 2
    %vm2305 = vcmp.eq.s32.totalorder %v2303, 0
    %v2306 = vxor.u32 %v2301, 2147483648
    %v2307 = vsel %vm2305, %v2293, %v2306
    %vm2308 = vcmp.eq.s32.totalorder %v2303, 2
    %v2309 = vxor.u32 %v2293, 2147483648
    %v2310 = vsel %vm2308, %v2309, %v2301
    %v2311 = vsel %vm2304, %v2307, %v2310
    %v2312 = vsel %vm2302, nan, %v2311
    %v2313 = vand.u32 2147483647, %v1387
    %vm2314 = vcmp.le.f32.partialorder %v2313, 0.7853982
    %vm2315 = vcmp.lt.s32.totalorder %v1387, 0
    %v2316 = vand.u32 %v1387, 2139095040
    %v2317 = vshrl.u32 %v2316, 23
    %v2318 = vsub.s32 %v2317, 127
    %v2319 = vand.u32 2147483647, %v1387
    %v2320 = vand.u32 %v2319, 8388607
    %v2321 = vor.u32 %v2320, 8388608
    %v2322 = vsub.s32 0, %v2321
    %v2323 = vadd.s32 %v2318, 1
    %vm2324 = vcmp.gt.s32.totalorder %v2323, 0
    %v2325 = vsel %vm2324, %v2323, 0
    %v2326 = vshrl.u32 %v2325, 5
    %v2327 = vand.u32 %v2325, 31
    %v2328 = vsub.s32 32, %v2327
    %v2329 = vshrl.u32 683565275, %v2328
    %v2330 = vshll.u32 683565275, %v2327
    %v2331 = vshrl.u32 2475754826, %v2328
    %v2332 = vor.u32 %v2330, %v2331
    %v2333 = vshll.u32 2475754826, %v2327
    %v2334 = vshrl.u32 2131351028, %v2328
    %v2335 = vor.u32 %v2333, %v2334
    %v2336 = vshll.u32 2131351028, %v2327
    %v2337 = vshrl.u32 2102212464, %v2328
    %v2338 = vor.u32 %v2336, %v2337
    %v2339 = vshll.u32 2102212464, %v2327
    %v2340 = vshrl.u32 920167782, %v2328
    %v2341 = vor.u32 %v2339, %v2340
    %v2342 = vshll.u32 920167782, %v2327
    %v2343 = vshrl.u32 1326507024, %v2328
    %v2344 = vor.u32 %v2342, %v2343
    %vm2345 = vcmp.lt.s32.totalorder %v2326, 1
    %vm2346 = vcmp.lt.s32.totalorder %v2326, 2
    %vm2347 = vcmp.lt.s32.totalorder %v2326, 3
    %vm2348 = vcmp.lt.s32.totalorder %v2326, 4
    %v2349 = vsel %vm2345, %v2329, %v2332
    %v2350 = vsel %vm2348, %v2338, 2102212464
    %v2351 = vsel %vm2347, %v2335, %v2350
    %v2352 = vsel %vm2346, %v2349, %v2351
    %v2353 = vsel %vm2345, %v2332, %v2335
    %v2354 = vsel %vm2348, %v2341, 920167782
    %v2355 = vsel %vm2347, %v2338, %v2354
    %v2356 = vsel %vm2346, %v2353, %v2355
    %v2357 = vsel %vm2345, %v2335, %v2338
    %v2358 = vsel %vm2348, %v2344, 1326507024
    %v2359 = vsel %vm2347, %v2341, %v2358
    %v2360 = vsel %vm2346, %v2357, %v2359
    %v2361 = vshll.u32 %v2321, 8
    %v2362 = vand.u32 %v2361, 65535
    %v2363 = vshrl.u32 %v2361, 16
    %v2364 = vand.u32 %v2360, 65535
    %v2365 = vshrl.u32 %v2360, 16
    %v2366 = vmul.u32 %v2362, %v2364
    %v2367 = vmul.u32 %v2362, %v2365
    %v2368 = vmul.u32 %v2363, %v2364
    %v2369 = vmul.u32 %v2363, %v2365
    %v2370 = vshll.u32 %v2367, 16
    %v2371 = vshrl.u32 %v2367, 16
    %v2372 = vshll.u32 %v2368, 16
    %v2373 = vshrl.u32 %v2368, 16
    %vm2374 = vc.u32 %v2366, %v2370
    %v2375 = vsel %vm2374, 1, 0
    %v2376 = vadd.s32 %v2366, %v2370
    %v2377 = vadd.s32 %v2369, %v2375
    %vm2378 = vc.u32 %v2376, %v2372
    %v2379 = vsel %vm2378, 1, 0
    %v2380 = vadd.s32 %v2376, %v2372
    %v2381 = vadd.s32 %v2377, %v2379
    %v2382 = vadd.s32 %v2381, %v2371
    %v2383 = vadd.s32 %v2382, %v2373
    %v2384 = vand.u32 %v2361, 65535
    %v2385 = vshrl.u32 %v2361, 16
    %v2386 = vand.u32 %v2356, 65535
    %v2387 = vshrl.u32 %v2356, 16
    %v2388 = vmul.u32 %v2384, %v2386
    %v2389 = vmul.u32 %v2384, %v2387
    %v2390 = vmul.u32 %v2385, %v2386
    %v2391 = vmul.u32 %v2385, %v2387
    %v2392 = vshll.u32 %v2389, 16
    %v2393 = vshrl.u32 %v2389, 16
    %v2394 = vshll.u32 %v2390, 16
    %v2395 = vshrl.u32 %v2390, 16
    %vm2396 = vc.u32 %v2388, %v2392
    %v2397 = vsel %vm2396, 1, 0
    %v2398 = vadd.s32 %v2388, %v2392
    %v2399 = vadd.s32 %v2391, %v2397
    %vm2400 = vc.u32 %v2398, %v2394
    %v2401 = vsel %vm2400, 1, 0
    %v2402 = vadd.s32 %v2398, %v2394
    %v2403 = vadd.s32 %v2399, %v2401
    %v2404 = vadd.s32 %v2403, %v2393
    %v2405 = vadd.s32 %v2404, %v2395
    %v2406 = vmul.u32 %v2361, %v2352
    %v2407 = vadd.s32 %v2383, %v2402
    %vm2408 = vc.u32 %v2383, %v2402
    %v2409 = vadd.s32 %v2405, 1
    %v2410 = vsel %vm2408, %v2409, %v2405
    %v2411 = vadd.s32 %v2406, %v2410
    %v2412 = vadd.s32 %v2411, 536870912
    %v2413 = vshrl.u32 %v2412, 30
    %v2414 = vshll.u32 %v2413, 30
    %v2415 = vsub.s32 %v2411, %v2414
    %vm2416 = vcmp.lt.s32.totalorder %v2415, 0
    %v2417 = vsub.s32 0, %v2415
    %v2418 = vsel %vm2416, %v2417, %v2415
    %v2419 = vclz %v2418
    %v2420 = vsub.s32 %v2419, 2
    %vm2421 = vcmp.gt.s32.totalorder 0, %v2420
    %v2422 = vsel %vm2421, 0, %v2420
    %v2423 = vsub.s32 32, %v2422
    %v2424 = vshll.u32 %v2415, %v2422
    %v2425 = vshrl.u32 %v2407, %v2423
    %v2426 = vor.u32 %v2424, %v2425
    %v2427 = vsub.s32 4294967266, %v2422
    %v2428 = vadd.s32 %v2427, 127
    %v2429 = vshll.u32 %v2428, 23
    %v2430 = vor.u32 4788187, %v2429
    %v2431 = vand.u32 2147483647, %v2430
    %v2433 = vcvt.s32.f32 %v2426
    %v2434 = vmul.f32 %v2433, %v2431
    %v2435 = vxor.u32 %v2434, 2147483648
    %v2436 = vsel %vm2315, %v2435, %v2434
    %v2437 = vsub.s32 4, %v2413
    %v2438 = vsel %vm2315, %v2437, %v2413
    %v2439 = vsel %vm2314, %v1387, %v2436
    %v2440 = vsel %vm2314, 0, %v2438
    %v2441 = vmul.f32 %v2439, %v2439
    %v2442 = vmul.f32 %v2441, -0.001358992
    %v2443 = vadd.f32 %v2442, 0.041655596
    %v2444 = vmul.f32 %v2441, %v2443
    %v2445 = vadd.f32 %v2444, -0.4999988
    %v2446 = vmul.f32 %v2441, %v2445
    %v2447 = vadd.f32 1.0, %v2446
    %v2448 = vmul.f32 %v2439, %v2439
    %v2449 = vmul.f32 %v2448, -0.00019511016
    %v2450 = vadd.f32 %v2449, 0.008332121
    %v2451 = vmul.f32 %v2448, %v2450
    %v2452 = vadd.f32 %v2451, -0.16666654
    %v2453 = vmul.f32 %v2448, %v2452
    %v2454 = vadd.f32 %v2453, 1.0
    %v2455 = vmul.f32 %v2454, %v2439
    %vm2456 = vweird.f32 %v1387
    %v2457 = vand.u32 %v2440, 3
    %vm2458 = vcmp.lt.s32.totalorder %v2457, 2
    %vm2459 = vcmp.eq.s32.totalorder %v2457, 0
    %v2460 = vxor.u32 %v2455, 2147483648
    %v2461 = vsel %vm2459, %v2447, %v2460
    %vm2462 = vcmp.eq.s32.totalorder %v2457, 2
    %v2463 = vxor.u32 %v2447, 2147483648
    %v2464 = vsel %vm2462, %v2463, %v2455
    %v2465 = vsel %vm2458, %v2461, %v2464
    %v2466 = vsel %vm2456, nan, %v2465
    %v2467 = vand.u32 2147483647, %v1388
    %vm2468 = vcmp.le.f32.partialorder %v2467, 0.7853982
    %vm2469 = vcmp.lt.s32.totalorder %v1388, 0
    %v2470 = vand.u32 %v1388, 2139095040
    %v2471 = vshrl.u32 %v2470, 23
    %v2472 = vsub.s32 %v2471, 127
    %v2473 = vand.u32 2147483647, %v1388
    %v2474 = vand.u32 %v2473, 8388607
    %v2475 = vor.u32 %v2474, 8388608
    %v2476 = vsub.s32 0, %v2475
    %v2477 = vadd.s32 %v2472, 1
    %vm2478 = vcmp.gt.s32.totalorder %v2477, 0
    %v2479 = vsel %vm2478, %v2477, 0
    %v2480 = vshrl.u32 %v2479, 5
    %v2481 = vand.u32 %v2479, 31
    %v2482 = vsub.s32 32, %v2481
    %v2483 = vshrl.u32 683565275, %v2482
    %v2484 = vshll.u32 683565275, %v2481
    %v2485 = vshrl.u32 2475754826, %v2482
    %v2486 = vor.u32 %v2484, %v2485
    %v2487 = vshll.u32 2475754826, %v2481
    %v2488 = vshrl.u32 2131351028, %v2482
    %v2489 = vor.u32 %v2487, %v2488
    %v2490 = vshll.u32 2131351028, %v2481
    %v2491 = vshrl.u32 2102212464, %v2482
    %v2492 = vor.u32 %v2490, %v2491
    %v2493 = vshll.u32 2102212464, %v2481
    %v2494 = vshrl.u32 920167782, %v2482
    %v2495 = vor.u32 %v2493, %v2494
    %v2496 = vshll.u32 920167782, %v2481
    %v2497 = vshrl.u32 1326507024, %v2482
    %v2498 = vor.u32 %v2496, %v2497
    %vm2499 = vcmp.lt.s32.totalorder %v2480, 1
    %vm2500 = vcmp.lt.s32.totalorder %v2480, 2
    %vm2501 = vcmp.lt.s32.totalorder %v2480, 3
    %vm2502 = vcmp.lt.s32.totalorder %v2480, 4
    %v2503 = vsel %vm2499, %v2483, %v2486
    %v2504 = vsel %vm2502, %v2492, 2102212464
    %v2505 = vsel %vm2501, %v2489, %v2504
    %v2506 = vsel %vm2500, %v2503, %v2505
    %v2507 = vsel %vm2499, %v2486, %v2489
    %v2508 = vsel %vm2502, %v2495, 920167782
    %v2509 = vsel %vm2501, %v2492, %v2508
    %v2510 = vsel %vm2500, %v2507, %v2509
    %v2511 = vsel %vm2499, %v2489, %v2492
    %v2512 = vsel %vm2502, %v2498, 1326507024
    %v2513 = vsel %vm2501, %v2495, %v2512
    %v2514 = vsel %vm2500, %v2511, %v2513
    %v2515 = vshll.u32 %v2475, 8
    %v2516 = vand.u32 %v2515, 65535
    %v2517 = vshrl.u32 %v2515, 16
    %v2518 = vand.u32 %v2514, 65535
    %v2519 = vshrl.u32 %v2514, 16
    %v2520 = vmul.u32 %v2516, %v2518
    %v2521 = vmul.u32 %v2516, %v2519
    %v2522 = vmul.u32 %v2517, %v2518
    %v2523 = vmul.u32 %v2517, %v2519
    %v2524 = vshll.u32 %v2521, 16
    %v2525 = vshrl.u32 %v2521, 16
    %v2526 = vshll.u32 %v2522, 16
    %v2527 = vshrl.u32 %v2522, 16
    %vm2528 = vc.u32 %v2520, %v2524
    %v2529 = vsel %vm2528, 1, 0
    %v2530 = vadd.s32 %v2520, %v2524
    %v2531 = vadd.s32 %v2523, %v2529
    %vm2532 = vc.u32 %v2530, %v2526
    %v2533 = vsel %vm2532, 1, 0
    %v2534 = vadd.s32 %v2530, %v2526
    %v2535 = vadd.s32 %v2531, %v2533
    %v2536 = vadd.s32 %v2535, %v2525
    %v2537 = vadd.s32 %v2536, %v2527
    %v2538 = vand.u32 %v2515, 65535
    %v2539 = vshrl.u32 %v2515, 16
    %v2540 = vand.u32 %v2510, 65535
    %v2541 = vshrl.u32 %v2510, 16
    %v2542 = vmul.u32 %v2538, %v2540
    %v2543 = vmul.u32 %v2538, %v2541
    %v2544 = vmul.u32 %v2539, %v2540
    %v2545 = vmul.u32 %v2539, %v2541
    %v2546 = vshll.u32 %v2543, 16
    %v2547 = vshrl.u32 %v2543, 16
    %v2548 = vshll.u32 %v2544, 16
    %v2549 = vshrl.u32 %v2544, 16
    %vm2550 = vc.u32 %v2542, %v2546
    %v2551 = vsel %vm2550, 1, 0
    %v2552 = vadd.s32 %v2542, %v2546
    %v2553 = vadd.s32 %v2545, %v2551
    %vm2554 = vc.u32 %v2552, %v2548
    %v2555 = vsel %vm2554, 1, 0
    %v2556 = vadd.s32 %v2552, %v2548
    %v2557 = vadd.s32 %v2553, %v2555
    %v2558 = vadd.s32 %v2557, %v2547
    %v2559 = vadd.s32 %v2558, %v2549
    %v2560 = vmul.u32 %v2515, %v2506
    %v2561 = vadd.s32 %v2537, %v2556
    %vm2562 = vc.u32 %v2537, %v2556
    %v2563 = vadd.s32 %v2559, 1
    %v2564 = vsel %vm2562, %v2563, %v2559
    %v2565 = vadd.s32 %v2560, %v2564
    %v2566 = vadd.s32 %v2565, 536870912
    %v2567 = vshrl.u32 %v2566, 30
    %v2568 = vshll.u32 %v2567, 30
    %v2569 = vsub.s32 %v2565, %v2568
    %vm2570 = vcmp.lt.s32.totalorder %v2569, 0
    %v2571 = vsub.s32 0, %v2569
    %v2572 = vsel %vm2570, %v2571, %v2569
    %v2573 = vclz %v2572
    %v2574 = vsub.s32 %v2573, 2
    %vm2575 = vcmp.gt.s32.totalorder 0, %v2574
    %v2576 = vsel %vm2575, 0, %v2574
    %v2577 = vsub.s32 32, %v2576
    %v2578 = vshll.u32 %v2569, %v2576
    %v2579 = vshrl.u32 %v2561, %v2577
    %v2580 = vor.u32 %v2578, %v2579
    %v2581 = vsub.s32 4294967266, %v2576
    %v2582 = vadd.s32 %v2581, 127
    %v2583 = vshll.u32 %v2582, 23
    %v2584 = vor.u32 4788187, %v2583
    %v2585 = vand.u32 2147483647, %v2584
    %v2587 = vcvt.s32.f32 %v2580
    %v2588 = vmul.f32 %v2587, %v2585
    %v2589 = vxor.u32 %v2588, 2147483648
    %v2590 = vsel %vm2469, %v2589, %v2588
    %v2591 = vsub.s32 4, %v2567
    %v2592 = vsel %vm2469, %v2591, %v2567
    %v2593 = vsel %vm2468, %v1388, %v2590
    %v2594 = vsel %vm2468, 0, %v2592
    %v2595 = vmul.f32 %v2593, %v2593
    %v2596 = vmul.f32 %v2595, -0.001358992
    %v2597 = vadd.f32 %v2596, 0.041655596
    %v2598 = vmul.f32 %v2595, %v2597
    %v2599 = vadd.f32 %v2598, -0.4999988
    %v2600 = vmul.f32 %v2595, %v2599
    %v2601 = vadd.f32 1.0, %v2600
    %v2602 = vmul.f32 %v2593, %v2593
    %v2603 = vmul.f32 %v2602, -0.00019511016
    %v2604 = vadd.f32 %v2603, 0.008332121
    %v2605 = vmul.f32 %v2602, %v2604
    %v2606 = vadd.f32 %v2605, -0.16666654
    %v2607 = vmul.f32 %v2602, %v2606
    %v2608 = vadd.f32 %v2607, 1.0
    %v2609 = vmul.f32 %v2608, %v2593
    %vm2610 = vweird.f32 %v1388
    %v2611 = vand.u32 %v2594, 3
    %vm2612 = vcmp.lt.s32.totalorder %v2611, 2
    %vm2613 = vcmp.eq.s32.totalorder %v2611, 0
    %v2614 = vxor.u32 %v2609, 2147483648
    %v2615 = vsel %vm2613, %v2601, %v2614
    %vm2616 = vcmp.eq.s32.totalorder %v2611, 2
    %v2617 = vxor.u32 %v2601, 2147483648
    %v2618 = vsel %vm2616, %v2617, %v2609
    %v2619 = vsel %vm2612, %v2615, %v2618
    %v2620 = vsel %vm2610, nan, %v2619
    %v2621 = vpack.c.bf16 %v1696, %v1542
    %v2622 = vpack.c.bf16 %v2004, %v1850
    %v2623 = vpack.c.bf16 %v2312, %v2158
    %v2624 = vpack.c.bf16 %v2620, %v2466
    %v2625 = vld [vmem:[%s0] sm:$0xf]
    %v2626 = vld [vmem:[%s0 + $0x4] sm:$0xf]
    %v2627 = vld [vmem:[%s0 + $0x8] sm:$0xf]
    %v2628 = vld [vmem:[%s0 + $0xc] sm:$0xf]
    %v2629 = vld [vmem:[%s0 + $0x10] sm:$0xf]
    %v2630 = vld [vmem:[%s0 + $0x14] sm:$0xf]
    %v2631 = vld [vmem:[%s0 + $0x18] sm:$0xf]
    %v2632 = vld [vmem:[%s0 + $0x1c] sm:$0xf]
    %v2633 = vld [vmem:[%s4] sm:$0xf]
    %v2634 = vld [vmem:[%s4 + $0x4] sm:$0xf]
    %v2635 = vld [vmem:[%s4 + $0x8] sm:$0xf]
    %v2636 = vld [vmem:[%s4 + $0xc] sm:$0xf]
    %v2637 = vld [vmem:[%s4 + $0x10] sm:$0xf]
    %v2638 = vld [vmem:[%s4 + $0x14] sm:$0xf]
    %v2639 = vld [vmem:[%s4 + $0x18] sm:$0xf]
    %v2640 = vld [vmem:[%s4 + $0x1c] sm:$0xf]
    %v2641 = vld [vmem:[%s4 + $0x20] sm:$0xf]
    %v2642 = vld [vmem:[%s4 + $0x24] sm:$0xf]
    %v2643 = vld [vmem:[%s4 + $0x28] sm:$0xf]
    %v2644 = vld [vmem:[%s4 + $0x2c] sm:$0xf]
    %v2645 = vld [vmem:[%s5] sm:$0xf]
    %v2646 = vld [vmem:[%s5 + $0x4] sm:$0xf]
    %v2647 = vld [vmem:[%s5 + $0x8] sm:$0xf]
    %v2648 = vld [vmem:[%s5 + $0xc] sm:$0xf]
    %v2653 = vunpack.c.l.b16 %v2645
    %v2654 = vunpack.c.l.b16 %v2646
    %v2655 = vunpack.c.l.b16 %v2647
    %v2656 = vunpack.c.l.b16 %v2648
    %v2657 = vpack.c.b16 %v2654, %v2653
    %v2658 = vpack.c.b16 %v2656, %v2655
    %vm2661 = vcmask 261120
    %v2663 = vsel %vm2661, %v1329, 0
    %v2666 = vsel %vm2661, %v1330, 0
    %v2669 = vsel %vm2661, %v1331, 0
    %v2672 = vsel %vm2661, %v1332, 0
    %2674 = vmatpush.bf16.msra.mxu0 0
    %2675 = vmatpush.bf16.msra.mxu0 0
    %2676 = vmatpush.bf16.msra.mxu0 0
    %2677 = vmatpush.bf16.msra.mxu0 0
    %2678 = vmatpush.bf16.msra.mxu0 0
    %2679 = vmatpush.bf16.msra.mxu0 0
    %2680 = vmatpush.bf16.msra.mxu0 %v2658
    %2681 = vmatpush.bf16.msra.mxu0 %v2657
    %2682 = vmatmul.bf16.gmra.mxu0 %v2663
    %v2683 = vpop.f32.mrf.mxu0
    %v2684 = vadd.f32 0.0, %v2683
    %v2685 = vpop.f32.mrf.mxu0
    %v2686 = vadd.f32 0.0, %v2685
    %2687 = vmatmul.bf16.gmra.mxu0 %v2666
    %v2688 = vpop.f32.mrf.mxu0
    %v2689 = vadd.f32 0.0, %v2688
    %v2690 = vpop.f32.mrf.mxu0
    %v2691 = vadd.f32 0.0, %v2690
    %2692 = vmatmul.bf16.gmra.mxu0 %v2669
    %v2693 = vpop.f32.mrf.mxu0
    %v2694 = vadd.f32 0.0, %v2693
    %v2695 = vpop.f32.mrf.mxu0
    %v2696 = vadd.f32 0.0, %v2695
    %2697 = vmatmul.bf16.gmra.mxu0 %v2672
    %v2698 = vpop.f32.mrf.mxu0
    %v2699 = vadd.f32 0.0, %v2698
    %v2700 = vpop.f32.mrf.mxu0
    %v2701 = vadd.f32 0.0, %v2700
    %2702 = vdwg.mxu0
    %v2711 = vunpack.c.l.b16 %v2625
    %v2712 = vunpack.c.l.b16 %v2626
    %v2713 = vunpack.c.l.b16 %v2627
    %v2714 = vunpack.c.l.b16 %v2628
    %v2715 = vunpack.c.l.b16 %v2629
    %v2716 = vunpack.c.l.b16 %v2630
    %v2717 = vunpack.c.l.b16 %v2631
    %v2718 = vunpack.c.l.b16 %v2632
    %v2719 = vpack.c.b16 %v2712, %v2711
    %v2720 = vpack.c.b16 %v2714, %v2713
    %v2721 = vpack.c.b16 %v2716, %v2715
    %v2722 = vpack.c.b16 %v2718, %v2717
    %v2735 = vunpack.c.l.b16 %v2633
    %v2736 = vunpack.c.l.b16 %v2634
    %v2737 = vunpack.c.l.b16 %v2635
    %v2738 = vunpack.c.l.b16 %v2636
    %v2739 = vunpack.c.l.b16 %v2637
    %v2740 = vunpack.c.l.b16 %v2638
    %v2741 = vunpack.c.l.b16 %v2639
    %v2742 = vunpack.c.l.b16 %v2640
    %v2743 = vunpack.c.l.b16 %v2641
    %v2744 = vunpack.c.l.b16 %v2642
    %v2745 = vunpack.c.l.b16 %v2643
    %v2746 = vunpack.c.l.b16 %v2644
    %v2747 = vpack.c.b16 %v2736, %v2735
    %v2748 = vpack.c.b16 %v2738, %v2737
    %v2749 = vpack.c.b16 %v2740, %v2739
    %v2750 = vpack.c.b16 %v2742, %v2741
    %v2751 = vpack.c.b16 %v2744, %v2743
    %v2752 = vpack.c.b16 %v2746, %v2745
    %vm2759 = vcmask 785408
    %v2761 = vsel %vm2759, %v2719, 0
    %v2764 = vsel %vm2759, %v2720, 0
    %v2767 = vsel %vm2759, %v2721, 0
    %v2770 = vsel %vm2759, %v2722, 0
    %2772 = vmatpush.bf16.msra.mxu0 0
    %2773 = vmatpush.bf16.msra.mxu0 0
    %2774 = vmatpush.bf16.msra.mxu0 %v2752
    %2775 = vmatpush.bf16.msra.mxu0 %v2751
    %2776 = vmatpush.bf16.msra.mxu0 %v2750
    %2777 = vmatpush.bf16.msra.mxu0 %v2749
    %2778 = vmatpush.bf16.msra.mxu0 %v2748
    %2779 = vmatpush.bf16.msra.mxu0 %v2747
    %2780 = vmatmul.bf16.gmra.mxu0 %v2761
    %v2781 = vpop.f32.mrf.mxu0
    %v2782 = vadd.f32 %v2684, %v2781
    %v2783 = vpop.f32.mrf.mxu0
    %v2784 = vadd.f32 %v2686, %v2783
    %2785 = vmatmul.bf16.gmra.mxu0 %v2764
    %v2786 = vpop.f32.mrf.mxu0
    %v2787 = vadd.f32 %v2689, %v2786
    %v2788 = vpop.f32.mrf.mxu0
    %v2789 = vadd.f32 %v2691, %v2788
    %2790 = vmatmul.bf16.gmra.mxu0 %v2767
    %v2791 = vpop.f32.mrf.mxu0
    %v2792 = vadd.f32 %v2694, %v2791
    %v2793 = vpop.f32.mrf.mxu0
    %v2794 = vadd.f32 %v2696, %v2793
    %2795 = vmatmul.bf16.gmra.mxu0 %v2770
    %v2796 = vpop.f32.mrf.mxu0
    %v2797 = vadd.f32 %v2699, %v2796
    %v2798 = vpop.f32.mrf.mxu0
    %v2799 = vadd.f32 %v2701, %v2798
    %2800 = vdwg.mxu0
    %v2801 = vld [vmem:[%s6] sm:$0xf]
    %v2802 = vld [vmem:[%s6 + $0x4] sm:$0xf]
    %v2803 = vld [vmem:[%s6 + $0x8] sm:$0xf]
    %v2804 = vld [vmem:[%s6 + $0xc] sm:$0xf]
    %v2809 = vunpack.c.l.b16 %v2801
    %v2810 = vunpack.c.l.b16 %v2802
    %v2811 = vunpack.c.l.b16 %v2803
    %v2812 = vunpack.c.l.b16 %v2804
    %v2813 = vpack.c.b16 %v2810, %v2809
    %v2814 = vpack.c.b16 %v2812, %v2811
    %v2818 = vsel %vm2661, %v2621, 0
    %v2821 = vsel %vm2661, %v2622, 0
    %v2824 = vsel %vm2661, %v2623, 0
    %v2827 = vsel %vm2661, %v2624, 0
    %2829 = vmatpush.bf16.msra.mxu0 0
    %2830 = vmatpush.bf16.msra.mxu0 0
    %2831 = vmatpush.bf16.msra.mxu0 0
    %2832 = vmatpush.bf16.msra.mxu0 0
    %2833 = vmatpush.bf16.msra.mxu0 0
    %2834 = vmatpush.bf16.msra.mxu0 0
    %2835 = vmatpush.bf16.msra.mxu0 %v2814
    %2836 = vmatpush.bf16.msra.mxu0 %v2813
    %2837 = vmatmul.bf16.gmra.mxu0 %v2818
    %v2838 = vpop.f32.mrf.mxu0
    %v2839 = vadd.f32 0.0, %v2838
    %v2840 = vpop.f32.mrf.mxu0
    %v2841 = vadd.f32 0.0, %v2840
    %2842 = vmatmul.bf16.gmra.mxu0 %v2821
    %v2843 = vpop.f32.mrf.mxu0
    %v2844 = vadd.f32 0.0, %v2843
    %v2845 = vpop.f32.mrf.mxu0
    %v2846 = vadd.f32 0.0, %v2845
    %2847 = vmatmul.bf16.gmra.mxu0 %v2824
    %v2848 = vpop.f32.mrf.mxu0
    %v2849 = vadd.f32 0.0, %v2848
    %v2850 = vpop.f32.mrf.mxu0
    %v2851 = vadd.f32 0.0, %v2850
    %2852 = vmatmul.bf16.gmra.mxu0 %v2827
    %v2853 = vpop.f32.mrf.mxu0
    %v2854 = vadd.f32 0.0, %v2853
    %v2855 = vpop.f32.mrf.mxu0
    %v2856 = vadd.f32 0.0, %v2855
    %2857 = vdwg.mxu0
    %v2858 = vadd.f32 %v2782, %v2839
    %v2859 = vadd.f32 %v2784, %v2841
    %v2860 = vadd.f32 %v2787, %v2844
    %v2861 = vadd.f32 %v2789, %v2846
    %v2862 = vadd.f32 %v2792, %v2849
    %v2863 = vadd.f32 %v2794, %v2851
    %v2864 = vadd.f32 %v2797, %v2854
    %v2865 = vadd.f32 %v2799, %v2856
    %v2866 = vld [vmem:[%s7] sm:$0x1]
    %v2868 = vperm.slane %v2866, 0
    %v2870 = vadd.f32 %v2858, %v2868
    %v2871 = vadd.f32 %v2859, %v2868
    %v2872 = vadd.f32 %v2860, %v2868
    %v2873 = vadd.f32 %v2861, %v2868
    %v2874 = vadd.f32 %v2862, %v2868
    %v2875 = vadd.f32 %v2863, %v2868
    %v2876 = vadd.f32 %v2864, %v2868
    %v2877 = vadd.f32 %v2865, %v2868
    %2878 = vadd.xlane.f32.xlu0 %v2870
    %v2879 = vpop.xlane.xlu0 %2878
    %2880 = vadd.xlane.f32.xlu0 %v2871
    %v2881 = vpop.xlane.xlu0 %2880
    %2882 = vadd.xlane.f32.xlu0 %v2872
    %v2883 = vpop.xlane.xlu0 %2882
    %2884 = vadd.xlane.f32.xlu0 %v2873
    %v2885 = vpop.xlane.xlu0 %2884
    %2886 = vadd.xlane.f32.xlu0 %v2874
    %v2887 = vpop.xlane.xlu0 %2886
    %2888 = vadd.xlane.f32.xlu0 %v2875
    %v2889 = vpop.xlane.xlu0 %2888
    %2890 = vadd.xlane.f32.xlu0 %v2876
    %v2891 = vpop.xlane.xlu0 %2890
    %2892 = vadd.xlane.f32.xlu0 %v2877
    %v2893 = vpop.xlane.xlu0 %2892
    %v2894 = vmul.f32 %v2879, 0.010416667
    %v2895 = vmul.f32 %v2881, 0.010416667
    %v2896 = vmul.f32 %v2883, 0.010416667
    %v2897 = vmul.f32 %v2885, 0.010416667
    %v2898 = vmul.f32 %v2887, 0.010416667
    %v2899 = vmul.f32 %v2889, 0.010416667
    %v2900 = vmul.f32 %v2891, 0.010416667
    %v2901 = vmul.f32 %v2893, 0.010416667
    %v2902 = vmul.f32 %v2870, %v2870
    %v2903 = vmul.f32 %v2871, %v2871
    %v2904 = vmul.f32 %v2872, %v2872
    %v2905 = vmul.f32 %v2873, %v2873
    %v2906 = vmul.f32 %v2874, %v2874
    %v2907 = vmul.f32 %v2875, %v2875
    %v2908 = vmul.f32 %v2876, %v2876
    %v2909 = vmul.f32 %v2877, %v2877
    %2910 = vadd.xlane.f32.xlu0 %v2902
    %v2911 = vpop.xlane.xlu0 %2910
    %2912 = vadd.xlane.f32.xlu0 %v2903
    %v2913 = vpop.xlane.xlu0 %2912
    %2914 = vadd.xlane.f32.xlu0 %v2904
    %v2915 = vpop.xlane.xlu0 %2914
    %2916 = vadd.xlane.f32.xlu0 %v2905
    %v2917 = vpop.xlane.xlu0 %2916
    %2918 = vadd.xlane.f32.xlu0 %v2906
    %v2919 = vpop.xlane.xlu0 %2918
    %2920 = vadd.xlane.f32.xlu0 %v2907
    %v2921 = vpop.xlane.xlu0 %2920
    %2922 = vadd.xlane.f32.xlu0 %v2908
    %v2923 = vpop.xlane.xlu0 %2922
    %2924 = vadd.xlane.f32.xlu0 %v2909
    %v2925 = vpop.xlane.xlu0 %2924
    %v2926 = vmul.f32 %v2911, 0.010416667
    %v2927 = vmul.f32 %v2913, 0.010416667
    %v2928 = vmul.f32 %v2915, 0.010416667
    %v2929 = vmul.f32 %v2917, 0.010416667
    %v2930 = vmul.f32 %v2919, 0.010416667
    %v2931 = vmul.f32 %v2921, 0.010416667
    %v2932 = vmul.f32 %v2923, 0.010416667
    %v2933 = vmul.f32 %v2925, 0.010416667
    %v2934 = vmul.f32 %v2894, %v2894
    %v2935 = vmul.f32 %v2895, %v2895
    %v2936 = vmul.f32 %v2896, %v2896
    %v2937 = vmul.f32 %v2897, %v2897
    %v2938 = vmul.f32 %v2898, %v2898
    %v2939 = vmul.f32 %v2899, %v2899
    %v2940 = vmul.f32 %v2900, %v2900
    %v2941 = vmul.f32 %v2901, %v2901
    %v2942 = vsub.f32 %v2926, %v2934
    %v2943 = vsub.f32 %v2927, %v2935
    %v2944 = vsub.f32 %v2928, %v2936
    %v2945 = vsub.f32 %v2929, %v2937
    %v2946 = vsub.f32 %v2930, %v2938
    %v2947 = vsub.f32 %v2931, %v2939
    %v2948 = vsub.f32 %v2932, %v2940
    %v2949 = vsub.f32 %v2933, %v2941
    %v2950 = vmax.f32 %v2942, 0.0
    %v2951 = vmax.f32 %v2943, 0.0
    %v2952 = vmax.f32 %v2944, 0.0
    %v2953 = vmax.f32 %v2945, 0.0
    %v2954 = vmax.f32 %v2946, 0.0
    %v2955 = vmax.f32 %v2947, 0.0
    %v2956 = vmax.f32 %v2948, 0.0
    %v2957 = vmax.f32 %v2949, 0.0
    %v2958 = vsub.f32 %v2870, %v2894
    %v2959 = vsub.f32 %v2871, %v2895
    %v2960 = vsub.f32 %v2872, %v2896
    %v2961 = vsub.f32 %v2873, %v2897
    %v2962 = vsub.f32 %v2874, %v2898
    %v2963 = vsub.f32 %v2875, %v2899
    %v2964 = vsub.f32 %v2876, %v2900
    %v2965 = vsub.f32 %v2877, %v2901
    %v2966 = vadd.f32 %v2950, 1e-05
    %v2967 = vadd.f32 %v2951, 1e-05
    %v2968 = vadd.f32 %v2952, 1e-05
    %v2969 = vadd.f32 %v2953, 1e-05
    %v2970 = vadd.f32 %v2954, 1e-05
    %v2971 = vadd.f32 %v2955, 1e-05
    %v2972 = vadd.f32 %v2956, 1e-05
    %v2973 = vadd.f32 %v2957, 1e-05
    %v2974 = vrsqrt.pop %v2966
    %v2975 = vmul.f32 %v2974, %v2966
    %v2976 = vmul.f32 %v2975, %v2974
    %v2977 = vmul.f32 0.5, %v2976
    %v2978 = vsub.f32 1.5, %v2977
    %v2979 = vmul.f32 %v2974, %v2978
    %vm2980 = vweird.f32 %v2966
    %vm2981 = vweird.f32 %v2974
    %vm2982 = vmor %vm2980, %vm2981
    %v2983 = vsel %vm2982, %v2974, %v2979
    %v2984 = vrsqrt.pop %v2967
    %v2985 = vmul.f32 %v2984, %v2967
    %v2986 = vmul.f32 %v2985, %v2984
    %v2987 = vmul.f32 0.5, %v2986
    %v2988 = vsub.f32 1.5, %v2987
    %v2989 = vmul.f32 %v2984, %v2988
    %vm2990 = vweird.f32 %v2967
    %vm2991 = vweird.f32 %v2984
    %vm2992 = vmor %vm2990, %vm2991
    %v2993 = vsel %vm2992, %v2984, %v2989
    %v2994 = vrsqrt.pop %v2968
    %v2995 = vmul.f32 %v2994, %v2968
    %v2996 = vmul.f32 %v2995, %v2994
    %v2997 = vmul.f32 0.5, %v2996
    %v2998 = vsub.f32 1.5, %v2997
    %v2999 = vmul.f32 %v2994, %v2998
    %vm3000 = vweird.f32 %v2968
    %vm3001 = vweird.f32 %v2994
    %vm3002 = vmor %vm3000, %vm3001
    %v3003 = vsel %vm3002, %v2994, %v2999
    %v3004 = vrsqrt.pop %v2969
    %v3005 = vmul.f32 %v3004, %v2969
    %v3006 = vmul.f32 %v3005, %v3004
    %v3007 = vmul.f32 0.5, %v3006
    %v3008 = vsub.f32 1.5, %v3007
    %v3009 = vmul.f32 %v3004, %v3008
    %vm3010 = vweird.f32 %v2969
    %vm3011 = vweird.f32 %v3004
    %vm3012 = vmor %vm3010, %vm3011
    %v3013 = vsel %vm3012, %v3004, %v3009
    %v3014 = vrsqrt.pop %v2970
    %v3015 = vmul.f32 %v3014, %v2970
    %v3016 = vmul.f32 %v3015, %v3014
    %v3017 = vmul.f32 0.5, %v3016
    %v3018 = vsub.f32 1.5, %v3017
    %v3019 = vmul.f32 %v3014, %v3018
    %vm3020 = vweird.f32 %v2970
    %vm3021 = vweird.f32 %v3014
    %vm3022 = vmor %vm3020, %vm3021
    %v3023 = vsel %vm3022, %v3014, %v3019
    %v3024 = vrsqrt.pop %v2971
    %v3025 = vmul.f32 %v3024, %v2971
    %v3026 = vmul.f32 %v3025, %v3024
    %v3027 = vmul.f32 0.5, %v3026
    %v3028 = vsub.f32 1.5, %v3027
    %v3029 = vmul.f32 %v3024, %v3028
    %vm3030 = vweird.f32 %v2971
    %vm3031 = vweird.f32 %v3024
    %vm3032 = vmor %vm3030, %vm3031
    %v3033 = vsel %vm3032, %v3024, %v3029
    %v3034 = vrsqrt.pop %v2972
    %v3035 = vmul.f32 %v3034, %v2972
    %v3036 = vmul.f32 %v3035, %v3034
    %v3037 = vmul.f32 0.5, %v3036
    %v3038 = vsub.f32 1.5, %v3037
    %v3039 = vmul.f32 %v3034, %v3038
    %vm3040 = vweird.f32 %v2972
    %vm3041 = vweird.f32 %v3034
    %vm3042 = vmor %vm3040, %vm3041
    %v3043 = vsel %vm3042, %v3034, %v3039
    %v3044 = vrsqrt.pop %v2973
    %v3045 = vmul.f32 %v3044, %v2973
    %v3046 = vmul.f32 %v3045, %v3044
    %v3047 = vmul.f32 0.5, %v3046
    %v3048 = vsub.f32 1.5, %v3047
    %v3049 = vmul.f32 %v3044, %v3048
    %vm3050 = vweird.f32 %v2973
    %vm3051 = vweird.f32 %v3044
    %vm3052 = vmor %vm3050, %vm3051
    %v3053 = vsel %vm3052, %v3044, %v3049
    %v3054 = vmul.f32 %v2958, %v2983
    %v3055 = vmul.f32 %v2959, %v2993
    %v3056 = vmul.f32 %v2960, %v3003
    %v3057 = vmul.f32 %v2961, %v3013
    %v3058 = vmul.f32 %v2962, %v3023
    %v3059 = vmul.f32 %v2963, %v3033
    %v3060 = vmul.f32 %v2964, %v3043
    %v3061 = vmul.f32 %v2965, %v3053
    %v3062 = vld [vmem:[%s8] sm:$0x1]
    %v3064 = vperm.slane %v3062, 0
    %v3066 = vmul.f32 %v3054, %v3064
    %v3067 = vmul.f32 %v3055, %v3064
    %v3068 = vmul.f32 %v3056, %v3064
    %v3069 = vmul.f32 %v3057, %v3064
    %v3070 = vmul.f32 %v3058, %v3064
    %v3071 = vmul.f32 %v3059, %v3064
    %v3072 = vmul.f32 %v3060, %v3064
    %v3073 = vmul.f32 %v3061, %v3064
    %v3074 = vld [vmem:[%s9] sm:$0x1]
    %v3076 = vperm.slane %v3074, 0
    %v3078 = vadd.f32 %v3066, %v3076
    %v3079 = vadd.f32 %v3067, %v3076
    %v3080 = vadd.f32 %v3068, %v3076
    %v3081 = vadd.f32 %v3069, %v3076
    %v3082 = vadd.f32 %v3070, %v3076
    %v3083 = vadd.f32 %v3071, %v3076
    %v3084 = vadd.f32 %v3072, %v3076
    %v3085 = vadd.f32 %v3073, %v3076
    %v3086 = vpack.c.bf16 %v3078, %v3078
    %v3087 = vpack.c.bf16 %v3079, %v3079
    %v3088 = vpack.c.bf16 %v3080, %v3080
    %v3089 = vpack.c.bf16 %v3081, %v3081
    %v3090 = vpack.c.bf16 %v3082, %v3082
    %v3091 = vpack.c.bf16 %v3083, %v3083
    %v3092 = vpack.c.bf16 %v3084, %v3084
    %v3093 = vpack.c.bf16 %v3085, %v3085
    %3094 = vst [vmem:[#allocation2] sm:$0xf] %v3086
    %3095 = vst [vmem:[#allocation2 + $0x4] sm:$0xf] %v3087
    %3096 = vst [vmem:[#allocation2 + $0x8] sm:$0xf] %v3088
    %3097 = vst [vmem:[#allocation2 + $0xc] sm:$0xf] %v3089
    %3098 = vst [vmem:[#allocation2 + $0x10] sm:$0xf] %v3090
    %3099 = vst [vmem:[#allocation2 + $0x14] sm:$0xf] %v3091
    %3100 = vst [vmem:[#allocation2 + $0x18] sm:$0xf] %v3092
    %3101 = vst [vmem:[#allocation2 + $0x1c] sm:$0xf] %v3093
    // Predicated region
    $region42: #{tpu_custom_call.1} parent=1 // pred_check
      _
    $region43: #{tpu_custom_call.1} parent=1 // pred_check_branch
      %3103 = sbr.rel (0) target = $region45
    $region44: #{tpu_custom_call.1} parent=1 // pred_region
      %3105 = vsyncadd [#allocation3], 0
      %s3106 = sshll.u32 [#allocation2], 4
      %s3107 = int_to_ptr.vmem [resolvable:$true] %s3106
      %s3108 = sshll.u32 %s10, 4
      %s3109 = int_to_ptr.hbm [resolvable:$true] %s3108
      %3114 = dma.vmem_to_hbm [thread:$0]  %s3107, 512, %s3109, [#allocation3], 64, 64, 4
    $region45: #{tpu_custom_call.1} parent=1 // pred_fallthru
      _
    // Predicated region
    $region46: #{tpu_custom_call.1} parent=1 // pred_check
      _
    $region47: #{tpu_custom_call.1} parent=1 // pred_check_branch
      %3116 = sbr.rel (0) target = $region49
    $region48: #{tpu_custom_call.1} parent=1 // pred_region
      %3118 = dma.done [#allocation3], 512
    $region49: #{tpu_custom_call.1} parent=1 // pred_fallthru
      _
    %3119 = vsyncpa [#allocation3], 1

</llo_original>
